<compile_context>
chip_gen: v6e
topology: v6e:2x2x1
jax: 0.10.0
libtpu: 0.0.40
codegen_flags: <defaults>
</compile_context>

<pallas_src>
import functools

import jax
import jax.numpy as jnp
from jax.experimental import pallas as pl
from jax.experimental.pallas import tpu as pltpu

N_HIDDENS = 32
N_LAYERS = 2


# ----------------------------------------------------------------------------
# In-kernel GRU cell (PyTorch gate order r, z, n; packed gates along lanes)
# ----------------------------------------------------------------------------
def _gru_cell(gi, h, whh_bf, bhh_n, H):
    """gi: (B, 3H) f32 with b_ih (+ b_hh for r,z) folded in; whh_bf: (H, 3H) bf16."""
    gh = jnp.dot(h.astype(jnp.bfloat16), whh_bf, preferred_element_type=jnp.float32)
    rz = jax.nn.sigmoid(gi[:, : 2 * H] + gh[:, : 2 * H])
    r = rz[:, :H]
    z = rz[:, H:]
    n = jnp.tanh(gi[:, 2 * H:] + r * (gh[:, 2 * H:] + bhh_n))
    return (1.0 - z) * n + z * h


def _gru_cell_h0(gi, bhh_n, H):
    """First step of a chain (h == 0): no recurrent matmul needed."""
    rz = jax.nn.sigmoid(gi[:, : 2 * H])
    r = rz[:, :H]
    z = rz[:, H:]
    n = jnp.tanh(gi[:, 2 * H:] + r * bhh_n)
    return (1.0 - z) * n


# ----------------------------------------------------------------------------
# Fully fused forward kernel (grid-less: everything VMEM/vreg-resident)
# ----------------------------------------------------------------------------
def _stacked_gru_kernel(T, Bp, H,
                        x_ref,
                        wih0f, bi0f, whh0f_r, bn0f_r,
                        wih0b, bi0b, whh0b_r, bn0b_r,
                        wih1f, bi1f, whh1f_r, bn1f_r,
                        wih1b, bi1b, bn1b_r,
                        fcw_ref, fcb_ref,
                        out_ref,
                        gi_ref, seq_ref):
    f32 = jnp.float32

    x = x_ref[...]                                   # (T*Bp, F) f32, time-major
    x_bf = x.astype(jnp.bfloat16)

    # ---- hoisted layer-0 input projections: one (T*Bp, F)@(F, 3H) per direction ----
    gi_ref[0, :, :] = jnp.dot(x_bf, wih0f[...], preferred_element_type=f32) + bi0f[...]
    gi_ref[1, :, :] = jnp.dot(x_bf, wih0b[...], preferred_element_type=f32) + bi0b[...]

    whh0f = whh0f_r[...]
    whh0b = whh0b_r[...]
    bn0f = bn0f_r[...]
    bn0b = bn0b_r[...]

    # ---- layer 0: interleave the two independent recurrences (fwd t, bwd T-1-t) ----
    h_f = None
    h_b = None
    for step in range(T):
        tf = step
        tb = T - 1 - step
        gi_f = gi_ref[0, pl.ds(tf * Bp, Bp), :]
        gi_b = gi_ref[1, pl.ds(tb * Bp, Bp), :]
        if step == 0:
            h_f = _gru_cell_h0(gi_f, bn0f, H)
            h_b = _gru_cell_h0(gi_b, bn0b, H)
        else:
            h_f = _gru_cell(gi_f, h_f, whh0f, bn0f, H)
            h_b = _gru_cell(gi_b, h_b, whh0b, bn0b, H)
        seq_ref[0, pl.ds(tf * Bp, Bp), :] = h_f
        seq_ref[1, pl.ds(tb * Bp, Bp), :] = h_b

    # ---- layer-1 hoisted input projection (forward direction; reuses gi scratch) ----
    seq_f = seq_ref[0, :, :].astype(jnp.bfloat16)    # (T*Bp, H)
    seq_b = seq_ref[1, :, :].astype(jnp.bfloat16)
    w1f = wih1f[...]                                 # (2, H, 3H) bf16
    gi_ref[0, :, :] = (jnp.dot(seq_f, w1f[0], preferred_element_type=f32)
                       + jnp.dot(seq_b, w1f[1], preferred_element_type=f32)
                       + bi1f[...])

    # ---- layer-1 backward: only its t = T-1 state (one step from h = 0) feeds the FC ----
    w1b = wih1b[...]
    sf_last = seq_f[(T - 1) * Bp:, :]
    sb_last = seq_b[(T - 1) * Bp:, :]
    gi_b_last = (jnp.dot(sf_last, w1b[0], preferred_element_type=f32)
                 + jnp.dot(sb_last, w1b[1], preferred_element_type=f32)
                 + bi1b[...])
    h1b = _gru_cell_h0(gi_b_last, bn1b_r[...], H)

    # ---- layer-1 forward recurrence (only the final hidden state is needed) ----
    whh1f = whh1f_r[...]
    bn1f = bn1f_r[...]
    h1f = None
    for t in range(T):
        gi_t = gi_ref[0, pl.ds(t * Bp, Bp), :]
        if t == 0:
            h1f = _gru_cell_h0(gi_t, bn1f, H)
        else:
            h1f = _gru_cell(gi_t, h1f, whh1f, bn1f, H)

    # ---- fused ReLU + FC + residual epilogue ----
    hf = jnp.maximum(h1f, 0.0).astype(jnp.bfloat16)
    hb = jnp.maximum(h1b, 0.0).astype(jnp.bfloat16)
    fcw = fcw_ref[...]                               # (2, H, F) bf16
    out_ref[...] = (x[:Bp, :]                        # x (time-major) at t = 0
                    + jnp.dot(hf, fcw[0], preferred_element_type=f32)
                    + jnp.dot(hb, fcw[1], preferred_element_type=f32)
                    + fcb_ref[...])


# ----------------------------------------------------------------------------
# One-time parameter relayout into kernel layout (call OUTSIDE the hot path)
# ----------------------------------------------------------------------------
def prepare_params(params):
    H = N_HIDDENS
    f32, bf16 = jnp.float32, jnp.bfloat16
    args = []
    for layer in range(N_LAYERS):
        p = params["gru"][layer]
        for d in ("f", "b"):
            w_ih = p[f"w_ih_{d}"].astype(f32)        # (3H, I)
            w_hh = p[f"w_hh_{d}"].astype(f32)        # (3H, H)
            b_ih = p[f"b_ih_{d}"].astype(f32)        # (3H,)
            b_hh = p[f"b_hh_{d}"].astype(f32)        # (3H,)
            wih = w_ih.T.astype(bf16)                # (I, 3H), lanes in gate order r|z|n
            if layer == 1:
                wih = wih.reshape(2, H, 3 * H)       # [0]: fwd-half input, [1]: bwd-half
            # fold b_hh_r, b_hh_z into the hoisted projection bias; keep b_hh_n separate
            bias = jnp.concatenate(
                [b_ih[: 2 * H] + b_hh[: 2 * H], b_ih[2 * H:]]).reshape(1, 3 * H)
            bn = b_hh[2 * H:].reshape(1, H)
            args.append(wih)
            args.append(bias)
            if not (layer == N_LAYERS - 1 and d == "b"):
                args.append(w_hh.T.astype(bf16))     # (H, 3H) packed recurrent weights
            args.append(bn)
    args.append(params["fc_w"].T.reshape(2, H, -1).astype(bf16))   # (2, H, F)
    args.append(params["fc_b"].reshape(1, -1).astype(f32))         # (1, F)
    return tuple(args)


# ----------------------------------------------------------------------------
# Wrapper
# ----------------------------------------------------------------------------
def stacked_gru_forward(x, kparams):
    """x: (B, T, F) batch-first float32 (same as the PyTorch module's input)."""
    B, T, F = x.shape
    H = N_HIDDENS
    Bp = ((B + 7) // 8) * 8                          # pad batch to full sublane tiles

    # Only per-call prep: transpose + pad + reshape (fused by XLA into a single copy).
    x_tm = jnp.transpose(x, (1, 0, 2))               # (T, B, F) time-major
    if Bp != B:
        x_tm = jnp.pad(x_tm, ((0, 0), (0, Bp - B), (0, 0)))
    x2d = x_tm.reshape(T * Bp, F)

    args = (x2d,) + tuple(kparams)
    vmem = pl.BlockSpec(memory_space=pltpu.MemorySpace.VMEM)

    out = pl.pallas_call(
        functools.partial(_stacked_gru_kernel, T, Bp, H),
        out_shape=jax.ShapeDtypeStruct((Bp, F), jnp.float32),
        in_specs=[vmem] * len(args),
        out_specs=vmem,
        scratch_shapes=[
            pltpu.VMEM((2, T * Bp, 3 * H), jnp.float32),   # streamed gi projections
            pltpu.VMEM((2, T * Bp, H), jnp.float32),       # layer-0 fwd/bwd sequences
        ],
    )(*args)
    return out[:B]


# ----------------------------------------------------------------------------
# Deterministic parameter init (PyTorch-style uniform(-1/sqrt(H), 1/sqrt(H)))
# ----------------------------------------------------------------------------
def init_params(key, n_tags):
    H = N_HIDDENS
    bound = 1.0 / jnp.sqrt(jnp.float32(H))
    params = {"gru": []}
    for layer in range(N_LAYERS):
        in_size = n_tags if layer == 0 else 2 * H
        layer_p = {}
        for d in ("f", "b"):
            key, k1, k2, k3, k4 = jax.random.split(key, 5)
            layer_p[f"w_ih_{d}"] = jax.random.uniform(
                k1, (3 * H, in_size), jnp.float32, -bound, bound)
            layer_p[f"w_hh_{d}"] = jax.random.uniform(
                k2, (3 * H, H), jnp.float32, -bound, bound)
            layer_p[f"b_ih_{d}"] = jax.random.uniform(
                k3, (3 * H,), jnp.float32, -bound, bound)
            layer_p[f"b_hh_{d}"] = jax.random.uniform(
                k4, (3 * H,), jnp.float32, -bound, bound)
        params["gru"].append(layer_p)
    key, k1, k2 = jax.random.split(key, 3)
    fc_bound = 1.0 / jnp.sqrt(jnp.float32(2 * H))
    params["fc_w"] = jax.random.uniform(
        k1, (n_tags, 2 * H), jnp.float32, -fc_bound, fc_bound)
    params["fc_b"] = jax.random.uniform(
        k2, (n_tags,), jnp.float32, -fc_bound, fc_bound)
    return params


# ----------------------------------------------------------------------------
# Pure-JAX reference (correctness check, f32 end-to-end)
# ----------------------------------------------------------------------------
def _gru_dir_ref(x_seq, w_ih, w_hh, b_ih, b_hh):
    H = w_hh.shape[1]

    def step(h, x):
        gi = x @ w_ih.T + b_ih
        gh = h @ w_hh.T + b_hh
        r = jax.nn.sigmoid(gi[:, :H] + gh[:, :H])
        z = jax.nn.sigmoid(gi[:, H:2 * H] + gh[:, H:2 * H])
        n = jnp.tanh(gi[:, 2 * H:] + r * gh[:, 2 * H:])
        h_new = (1.0 - z) * n + z * h
        return h_new, h_new

    B = x_seq.shape[1]
    h0 = jnp.zeros((B, H), jnp.float32)
    _, outs = jax.lax.scan(step, h0, x_seq)
    return outs


def stacked_gru_reference(x, params):
    x_tm = jnp.transpose(x, (1, 0, 2))
    layer_in = x_tm
    for layer in range(N_LAYERS):
        p = params["gru"][layer]
        f = _gru_dir_ref(layer_in, p["w_ih_f"], p["w_hh_f"], p["b_ih_f"], p["b_hh_f"])
        b = _gru_dir_ref(layer_in[::-1], p["w_ih_b"], p["w_hh_b"],
                         p["b_ih_b"], p["b_hh_b"])[::-1]
        layer_in = jnp.concatenate([f, b], axis=-1)
    h = jnp.maximum(layer_in[-1], 0.0)
    return x_tm[0] + h @ params["fc_w"].T + params["fc_b"]


# ----------------------------------------------------------------------------
if __name__ == "__main__":
    key = jax.random.PRNGKey(0)
    B, T, F = 4, 8, 8          # batch, seq length, n_tags

    key, kx, kp = jax.random.split(key, 3)
    x = jax.random.normal(kx, (B, T, F), jnp.float32)
    params = init_params(kp, F)

    kparams = prepare_params(params)       # one-time relayout, off the per-call path
    fwd = jax.jit(stacked_gru_forward)

    out = jax.block_until_ready(fwd(x, kparams))

    ref = stacked_gru_reference(x, params)
    assert out.shape == (B, F)
    max_err = jnp.max(jnp.abs(out - ref))
    # bf16 matmul operands (f32 accumulation) -> loosened tolerance per review.
    assert jnp.allclose(out, ref, rtol=3e-2, atol=3e-2), f"max abs err {max_err}"

    print("KERNEL_OK")
</pallas_src>

<mosaic_0001>
module attributes {stable_mosaic.version = 11 : i64} {
  func.func @_stacked_gru_kernel(%arg0: memref<64x8xf32, #tpu.memory_space<vmem>>, %arg1: memref<8x96xbf16, #tpu.memory_space<vmem>>, %arg2: memref<1x96xf32, #tpu.memory_space<vmem>>, %arg3: memref<32x96xbf16, #tpu.memory_space<vmem>>, %arg4: memref<1x32xf32, #tpu.memory_space<vmem>>, %arg5: memref<8x96xbf16, #tpu.memory_space<vmem>>, %arg6: memref<1x96xf32, #tpu.memory_space<vmem>>, %arg7: memref<32x96xbf16, #tpu.memory_space<vmem>>, %arg8: memref<1x32xf32, #tpu.memory_space<vmem>>, %arg9: memref<2x32x96xbf16, #tpu.memory_space<vmem>>, %arg10: memref<1x96xf32, #tpu.memory_space<vmem>>, %arg11: memref<32x96xbf16, #tpu.memory_space<vmem>>, %arg12: memref<1x32xf32, #tpu.memory_space<vmem>>, %arg13: memref<2x32x96xbf16, #tpu.memory_space<vmem>>, %arg14: memref<1x96xf32, #tpu.memory_space<vmem>>, %arg15: memref<1x32xf32, #tpu.memory_space<vmem>>, %arg16: memref<2x32x8xbf16, #tpu.memory_space<vmem>>, %arg17: memref<1x8xf32, #tpu.memory_space<vmem>>, %arg18: memref<8x8xf32, #tpu.memory_space<vmem>>, %arg19: memref<2x64x96xf32, #tpu.memory_space<vmem>>, %arg20: memref<2x64x32xf32, #tpu.memory_space<vmem>>) attributes {dimension_semantics = [], scalar_prefetch = 0 : i64, scratch_operands = 2 : i64, tpu.core_type = #tpu.core_type<tc>} {
    %c0 = arith.constant 0 : index
    %c0_0 = arith.constant 0 : index
    %0 = vector.load %arg0[%c0, %c0_0] : memref<64x8xf32, #tpu.memory_space<vmem>>, vector<64x8xf32>
    %1 = arith.truncf %0 : vector<64x8xf32> to vector<64x8xbf16>
    %c0_1 = arith.constant 0 : index
    %c0_2 = arith.constant 0 : index
    %2 = vector.load %arg1[%c0_1, %c0_2] : memref<8x96xbf16, #tpu.memory_space<vmem>>, vector<8x96xbf16>
    %cst = arith.constant dense<0.000000e+00> : vector<64x96xf32>
    %3 = tpu.matmul %1, %2, %cst {dimension_numbers = #tpu.dot_dimension_numbers<[1], [0], [0], [1], [0, 0, 1, 1], [], []>} : vector<64x8xbf16>, vector<8x96xbf16>, vector<64x96xf32> -> vector<64x96xf32>
    %c0_3 = arith.constant 0 : index
    %c0_4 = arith.constant 0 : index
    %4 = vector.load %arg2[%c0_3, %c0_4] : memref<1x96xf32, #tpu.memory_space<vmem>>, vector<1x96xf32>
    %5 = vector.broadcast %4 : vector<1x96xf32> to vector<64x96xf32>
    %6 = arith.addf %3, %5 : vector<64x96xf32>
    %c0_5 = arith.constant 0 : index
    %c0_6 = arith.constant 0 : index
    %c0_7 = arith.constant 0 : index
    %7 = vector.load %arg19[%c0_5, %c0_6, %c0_7] : memref<2x64x96xf32, #tpu.memory_space<vmem>>, vector<1x64x96xf32>
    %8 = vector.shape_cast %7 : vector<1x64x96xf32> to vector<64x96xf32>
    %9 = vector.shape_cast %6 : vector<64x96xf32> to vector<1x64x96xf32>
    tpu.vector_store %arg19[%c0_5, %c0_6, %c0_7], %9 {strides = array<i32>} : memref<2x64x96xf32, #tpu.memory_space<vmem>>, vector<1x64x96xf32>,
    %c0_8 = arith.constant 0 : index
    %c0_9 = arith.constant 0 : index
    %10 = vector.load %arg5[%c0_8, %c0_9] : memref<8x96xbf16, #tpu.memory_space<vmem>>, vector<8x96xbf16>
    %cst_10 = arith.constant dense<0.000000e+00> : vector<64x96xf32>
    %11 = tpu.matmul %1, %10, %cst_10 {dimension_numbers = #tpu.dot_dimension_numbers<[1], [0], [0], [1], [0, 0, 1, 1], [], []>} : vector<64x8xbf16>, vector<8x96xbf16>, vector<64x96xf32> -> vector<64x96xf32>
    %c0_11 = arith.constant 0 : index
    %c0_12 = arith.constant 0 : index
    %12 = vector.load %arg6[%c0_11, %c0_12] : memref<1x96xf32, #tpu.memory_space<vmem>>, vector<1x96xf32>
    %13 = vector.broadcast %12 : vector<1x96xf32> to vector<64x96xf32>
    %14 = arith.addf %11, %13 : vector<64x96xf32>
    %c1 = arith.constant 1 : index
    %c0_13 = arith.constant 0 : index
    %c0_14 = arith.constant 0 : index
    %15 = vector.load %arg19[%c1, %c0_13, %c0_14] : memref<2x64x96xf32, #tpu.memory_space<vmem>>, vector<1x64x96xf32>
    %16 = vector.shape_cast %15 : vector<1x64x96xf32> to vector<64x96xf32>
    %17 = vector.shape_cast %14 : vector<64x96xf32> to vector<1x64x96xf32>
    tpu.vector_store %arg19[%c1, %c0_13, %c0_14], %17 {strides = array<i32>} : memref<2x64x96xf32, #tpu.memory_space<vmem>>, vector<1x64x96xf32>,
    %c0_15 = arith.constant 0 : index
    %c0_16 = arith.constant 0 : index
    %18 = vector.load %arg3[%c0_15, %c0_16] : memref<32x96xbf16, #tpu.memory_space<vmem>>, vector<32x96xbf16>
    %c0_17 = arith.constant 0 : index
    %c0_18 = arith.constant 0 : index
    %19 = vector.load %arg7[%c0_17, %c0_18] : memref<32x96xbf16, #tpu.memory_space<vmem>>, vector<32x96xbf16>
    %c0_19 = arith.constant 0 : index
    %c0_20 = arith.constant 0 : index
    %20 = vector.load %arg4[%c0_19, %c0_20] : memref<1x32xf32, #tpu.memory_space<vmem>>, vector<1x32xf32>
    %c0_21 = arith.constant 0 : index
    %c0_22 = arith.constant 0 : index
    %21 = vector.load %arg8[%c0_21, %c0_22] : memref<1x32xf32, #tpu.memory_space<vmem>>, vector<1x32xf32>
    %c0_23 = arith.constant 0 : index
    %c0_24 = arith.constant 0 : index
    %c0_25 = arith.constant 0 : index
    %22 = vector.load %arg19[%c0_23, %c0_24, %c0_25] : memref<2x64x96xf32, #tpu.memory_space<vmem>>, vector<1x8x96xf32>
    %23 = vector.shape_cast %22 : vector<1x8x96xf32> to vector<8x96xf32>
    %c1_26 = arith.constant 1 : index
    %c56 = arith.constant 56 : index
    %c0_27 = arith.constant 0 : index
    %24 = vector.load %arg19[%c1_26, %c56, %c0_27] : memref<2x64x96xf32, #tpu.memory_space<vmem>>, vector<1x8x96xf32>
    %25 = vector.shape_cast %24 : vector<1x8x96xf32> to vector<8x96xf32>
    %26 = vector.extract_strided_slice %23 {offsets = [0, 0], sizes = [8, 64], strides = [1, 1]} : vector<8x96xf32> to vector<8x64xf32>
    %27 = arith.negf %26 : vector<8x64xf32>
    %28 = math.exp %27 : vector<8x64xf32>
    %cst_28 = arith.constant 1.000000e+00 : f32
    %29 = vector.broadcast %cst_28 : f32 to vector<8x64xf32>
    %30 = arith.addf %29, %28 : vector<8x64xf32>
    %31 = arith.divf %29, %30 : vector<8x64xf32>
    %32 = vector.extract_strided_slice %31 {offsets = [0, 0], sizes = [8, 32], strides = [1, 1]} : vector<8x64xf32> to vector<8x32xf32>
    %33 = vector.extract_strided_slice %31 {offsets = [0, 32], sizes = [8, 32], strides = [1, 1]} : vector<8x64xf32> to vector<8x32xf32>
    %34 = vector.extract_strided_slice %23 {offsets = [0, 64], sizes = [8, 32], strides = [1, 1]} : vector<8x96xf32> to vector<8x32xf32>
    %35 = vector.broadcast %20 : vector<1x32xf32> to vector<8x32xf32>
    %36 = arith.mulf %32, %35 : vector<8x32xf32>
    %37 = arith.addf %34, %36 : vector<8x32xf32>
    %38 = math.tanh %37 : vector<8x32xf32>
    %cst_29 = arith.constant 1.000000e+00 : f32
    %39 = vector.broadcast %cst_29 : f32 to vector<8x32xf32>
    %40 = arith.subf %39, %33 : vector<8x32xf32>
    %41 = arith.mulf %40, %38 : vector<8x32xf32>
    %42 = vector.extract_strided_slice %25 {offsets = [0, 0], sizes = [8, 64], strides = [1, 1]} : vector<8x96xf32> to vector<8x64xf32>
    %43 = arith.negf %42 : vector<8x64xf32>
    %44 = math.exp %43 : vector<8x64xf32>
    %cst_30 = arith.constant 1.000000e+00 : f32
    %45 = vector.broadcast %cst_30 : f32 to vector<8x64xf32>
    %46 = arith.addf %45, %44 : vector<8x64xf32>
    %47 = arith.divf %45, %46 : vector<8x64xf32>
    %48 = vector.extract_strided_slice %47 {offsets = [0, 0], sizes = [8, 32], strides = [1, 1]} : vector<8x64xf32> to vector<8x32xf32>
    %49 = vector.extract_strided_slice %47 {offsets = [0, 32], sizes = [8, 32], strides = [1, 1]} : vector<8x64xf32> to vector<8x32xf32>
    %50 = vector.extract_strided_slice %25 {offsets = [0, 64], sizes = [8, 32], strides = [1, 1]} : vector<8x96xf32> to vector<8x32xf32>
    %51 = vector.broadcast %21 : vector<1x32xf32> to vector<8x32xf32>
    %52 = arith.mulf %48, %51 : vector<8x32xf32>
    %53 = arith.addf %50, %52 : vector<8x32xf32>
    %54 = math.tanh %53 : vector<8x32xf32>
    %cst_31 = arith.constant 1.000000e+00 : f32
    %55 = vector.broadcast %cst_31 : f32 to vector<8x32xf32>
    %56 = arith.subf %55, %49 : vector<8x32xf32>
    %57 = arith.mulf %56, %54 : vector<8x32xf32>
    %c0_32 = arith.constant 0 : index
    %c0_33 = arith.constant 0 : index
    %c0_34 = arith.constant 0 : index
    %58 = vector.load %arg20[%c0_32, %c0_33, %c0_34] : memref<2x64x32xf32, #tpu.memory_space<vmem>>, vector<1x8x32xf32>
    %59 = vector.shape_cast %58 : vector<1x8x32xf32> to vector<8x32xf32>
    %60 = vector.shape_cast %41 : vector<8x32xf32> to vector<1x8x32xf32>
    tpu.vector_store %arg20[%c0_32, %c0_33, %c0_34], %60 {strides = array<i32>} : memref<2x64x32xf32, #tpu.memory_space<vmem>>, vector<1x8x32xf32>,
    %c1_35 = arith.constant 1 : index
    %c56_36 = arith.constant 56 : index
    %c0_37 = arith.constant 0 : index
    %61 = vector.load %arg20[%c1_35, %c56_36, %c0_37] : memref<2x64x32xf32, #tpu.memory_space<vmem>>, vector<1x8x32xf32>
    %62 = vector.shape_cast %61 : vector<1x8x32xf32> to vector<8x32xf32>
    %63 = vector.shape_cast %57 : vector<8x32xf32> to vector<1x8x32xf32>
    tpu.vector_store %arg20[%c1_35, %c56_36, %c0_37], %63 {strides = array<i32>} : memref<2x64x32xf32, #tpu.memory_space<vmem>>, vector<1x8x32xf32>,
    %c0_38 = arith.constant 0 : index
    %c8 = arith.constant 8 : index
    %c0_39 = arith.constant 0 : index
    %64 = vector.load %arg19[%c0_38, %c8, %c0_39] : memref<2x64x96xf32, #tpu.memory_space<vmem>>, vector<1x8x96xf32>
    %65 = vector.shape_cast %64 : vector<1x8x96xf32> to vector<8x96xf32>
    %c1_40 = arith.constant 1 : index
    %c48 = arith.constant 48 : index
    %c0_41 = arith.constant 0 : index
    %66 = vector.load %arg19[%c1_40, %c48, %c0_41] : memref<2x64x96xf32, #tpu.memory_space<vmem>>, vector<1x8x96xf32>
    %67 = vector.shape_cast %66 : vector<1x8x96xf32> to vector<8x96xf32>
    %68 = arith.truncf %41 : vector<8x32xf32> to vector<8x32xbf16>
    %cst_42 = arith.constant dense<0.000000e+00> : vector<8x96xf32>
    %69 = tpu.matmul %68, %18, %cst_42 {dimension_numbers = #tpu.dot_dimension_numbers<[1], [0], [0], [1], [0, 0, 1, 1], [], []>} : vector<8x32xbf16>, vector<32x96xbf16>, vector<8x96xf32> -> vector<8x96xf32>
    %70 = vector.extract_strided_slice %65 {offsets = [0, 0], sizes = [8, 64], strides = [1, 1]} : vector<8x96xf32> to vector<8x64xf32>
    %71 = vector.extract_strided_slice %69 {offsets = [0, 0], sizes = [8, 64], strides = [1, 1]} : vector<8x96xf32> to vector<8x64xf32>
    %72 = arith.addf %70, %71 : vector<8x64xf32>
    %73 = arith.negf %72 : vector<8x64xf32>
    %74 = math.exp %73 : vector<8x64xf32>
    %cst_43 = arith.constant 1.000000e+00 : f32
    %75 = vector.broadcast %cst_43 : f32 to vector<8x64xf32>
    %76 = arith.addf %75, %74 : vector<8x64xf32>
    %77 = arith.divf %75, %76 : vector<8x64xf32>
    %78 = vector.extract_strided_slice %77 {offsets = [0, 0], sizes = [8, 32], strides = [1, 1]} : vector<8x64xf32> to vector<8x32xf32>
    %79 = vector.extract_strided_slice %77 {offsets = [0, 32], sizes = [8, 32], strides = [1, 1]} : vector<8x64xf32> to vector<8x32xf32>
    %80 = vector.extract_strided_slice %65 {offsets = [0, 64], sizes = [8, 32], strides = [1, 1]} : vector<8x96xf32> to vector<8x32xf32>
    %81 = vector.extract_strided_slice %69 {offsets = [0, 64], sizes = [8, 32], strides = [1, 1]} : vector<8x96xf32> to vector<8x32xf32>
    %82 = vector.broadcast %20 : vector<1x32xf32> to vector<8x32xf32>
    %83 = arith.addf %81, %82 : vector<8x32xf32>
    %84 = arith.mulf %78, %83 : vector<8x32xf32>
    %85 = arith.addf %80, %84 : vector<8x32xf32>
    %86 = math.tanh %85 : vector<8x32xf32>
    %cst_44 = arith.constant 1.000000e+00 : f32
    %87 = vector.broadcast %cst_44 : f32 to vector<8x32xf32>
    %88 = arith.subf %87, %79 : vector<8x32xf32>
    %89 = arith.mulf %88, %86 : vector<8x32xf32>
    %90 = arith.mulf %79, %41 : vector<8x32xf32>
    %91 = arith.addf %89, %90 : vector<8x32xf32>
    %92 = arith.truncf %57 : vector<8x32xf32> to vector<8x32xbf16>
    %cst_45 = arith.constant dense<0.000000e+00> : vector<8x96xf32>
    %93 = tpu.matmul %92, %19, %cst_45 {dimension_numbers = #tpu.dot_dimension_numbers<[1], [0], [0], [1], [0, 0, 1, 1], [], []>} : vector<8x32xbf16>, vector<32x96xbf16>, vector<8x96xf32> -> vector<8x96xf32>
    %94 = vector.extract_strided_slice %67 {offsets = [0, 0], sizes = [8, 64], strides = [1, 1]} : vector<8x96xf32> to vector<8x64xf32>
    %95 = vector.extract_strided_slice %93 {offsets = [0, 0], sizes = [8, 64], strides = [1, 1]} : vector<8x96xf32> to vector<8x64xf32>
    %96 = arith.addf %94, %95 : vector<8x64xf32>
    %97 = arith.negf %96 : vector<8x64xf32>
    %98 = math.exp %97 : vector<8x64xf32>
    %cst_46 = arith.constant 1.000000e+00 : f32
    %99 = vector.broadcast %cst_46 : f32 to vector<8x64xf32>
    %100 = arith.addf %99, %98 : vector<8x64xf32>
    %101 = arith.divf %99, %100 : vector<8x64xf32>
    %102 = vector.extract_strided_slice %101 {offsets = [0, 0], sizes = [8, 32], strides = [1, 1]} : vector<8x64xf32> to vector<8x32xf32>
    %103 = vector.extract_strided_slice %101 {offsets = [0, 32], sizes = [8, 32], strides = [1, 1]} : vector<8x64xf32> to vector<8x32xf32>
    %104 = vector.extract_strided_slice %67 {offsets = [0, 64], sizes = [8, 32], strides = [1, 1]} : vector<8x96xf32> to vector<8x32xf32>
    %105 = vector.extract_strided_slice %93 {offsets = [0, 64], sizes = [8, 32], strides = [1, 1]} : vector<8x96xf32> to vector<8x32xf32>
    %106 = vector.broadcast %21 : vector<1x32xf32> to vector<8x32xf32>
    %107 = arith.addf %105, %106 : vector<8x32xf32>
    %108 = arith.mulf %102, %107 : vector<8x32xf32>
    %109 = arith.addf %104, %108 : vector<8x32xf32>
    %110 = math.tanh %109 : vector<8x32xf32>
    %cst_47 = arith.constant 1.000000e+00 : f32
    %111 = vector.broadcast %cst_47 : f32 to vector<8x32xf32>
    %112 = arith.subf %111, %103 : vector<8x32xf32>
    %113 = arith.mulf %112, %110 : vector<8x32xf32>
    %114 = arith.mulf %103, %57 : vector<8x32xf32>
    %115 = arith.addf %113, %114 : vector<8x32xf32>
    %c0_48 = arith.constant 0 : index
    %c8_49 = arith.constant 8 : index
    %c0_50 = arith.constant 0 : index
    %116 = vector.load %arg20[%c0_48, %c8_49, %c0_50] : memref<2x64x32xf32, #tpu.memory_space<vmem>>, vector<1x8x32xf32>
    %117 = vector.shape_cast %116 : vector<1x8x32xf32> to vector<8x32xf32>
    %118 = vector.shape_cast %91 : vector<8x32xf32> to vector<1x8x32xf32>
    tpu.vector_store %arg20[%c0_48, %c8_49, %c0_50], %118 {strides = array<i32>} : memref<2x64x32xf32, #tpu.memory_space<vmem>>, vector<1x8x32xf32>,
    %c1_51 = arith.constant 1 : index
    %c48_52 = arith.constant 48 : index
    %c0_53 = arith.constant 0 : index
    %119 = vector.load %arg20[%c1_51, %c48_52, %c0_53] : memref<2x64x32xf32, #tpu.memory_space<vmem>>, vector<1x8x32xf32>
    %120 = vector.shape_cast %119 : vector<1x8x32xf32> to vector<8x32xf32>
    %121 = vector.shape_cast %115 : vector<8x32xf32> to vector<1x8x32xf32>
    tpu.vector_store %arg20[%c1_51, %c48_52, %c0_53], %121 {strides = array<i32>} : memref<2x64x32xf32, #tpu.memory_space<vmem>>, vector<1x8x32xf32>,
    %c0_54 = arith.constant 0 : index
    %c16 = arith.constant 16 : index
    %c0_55 = arith.constant 0 : index
    %122 = vector.load %arg19[%c0_54, %c16, %c0_55] : memref<2x64x96xf32, #tpu.memory_space<vmem>>, vector<1x8x96xf32>
    %123 = vector.shape_cast %122 : vector<1x8x96xf32> to vector<8x96xf32>
    %c1_56 = arith.constant 1 : index
    %c40 = arith.constant 40 : index
    %c0_57 = arith.constant 0 : index
    %124 = vector.load %arg19[%c1_56, %c40, %c0_57] : memref<2x64x96xf32, #tpu.memory_space<vmem>>, vector<1x8x96xf32>
    %125 = vector.shape_cast %124 : vector<1x8x96xf32> to vector<8x96xf32>
    %126 = arith.truncf %91 : vector<8x32xf32> to vector<8x32xbf16>
    %cst_58 = arith.constant dense<0.000000e+00> : vector<8x96xf32>
    %127 = tpu.matmul %126, %18, %cst_58 {dimension_numbers = #tpu.dot_dimension_numbers<[1], [0], [0], [1], [0, 0, 1, 1], [], []>} : vector<8x32xbf16>, vector<32x96xbf16>, vector<8x96xf32> -> vector<8x96xf32>
    %128 = vector.extract_strided_slice %123 {offsets = [0, 0], sizes = [8, 64], strides = [1, 1]} : vector<8x96xf32> to vector<8x64xf32>
    %129 = vector.extract_strided_slice %127 {offsets = [0, 0], sizes = [8, 64], strides = [1, 1]} : vector<8x96xf32> to vector<8x64xf32>
    %130 = arith.addf %128, %129 : vector<8x64xf32>
    %131 = arith.negf %130 : vector<8x64xf32>
    %132 = math.exp %131 : vector<8x64xf32>
    %cst_59 = arith.constant 1.000000e+00 : f32
    %133 = vector.broadcast %cst_59 : f32 to vector<8x64xf32>
    %134 = arith.addf %133, %132 : vector<8x64xf32>
    %135 = arith.divf %133, %134 : vector<8x64xf32>
    %136 = vector.extract_strided_slice %135 {offsets = [0, 0], sizes = [8, 32], strides = [1, 1]} : vector<8x64xf32> to vector<8x32xf32>
    %137 = vector.extract_strided_slice %135 {offsets = [0, 32], sizes = [8, 32], strides = [1, 1]} : vector<8x64xf32> to vector<8x32xf32>
    %138 = vector.extract_strided_slice %123 {offsets = [0, 64], sizes = [8, 32], strides = [1, 1]} : vector<8x96xf32> to vector<8x32xf32>
    %139 = vector.extract_strided_slice %127 {offsets = [0, 64], sizes = [8, 32], strides = [1, 1]} : vector<8x96xf32> to vector<8x32xf32>
    %140 = vector.broadcast %20 : vector<1x32xf32> to vector<8x32xf32>
    %141 = arith.addf %139, %140 : vector<8x32xf32>
    %142 = arith.mulf %136, %141 : vector<8x32xf32>
    %143 = arith.addf %138, %142 : vector<8x32xf32>
    %144 = math.tanh %143 : vector<8x32xf32>
    %cst_60 = arith.constant 1.000000e+00 : f32
    %145 = vector.broadcast %cst_60 : f32 to vector<8x32xf32>
    %146 = arith.subf %145, %137 : vector<8x32xf32>
    %147 = arith.mulf %146, %144 : vector<8x32xf32>
    %148 = arith.mulf %137, %91 : vector<8x32xf32>
    %149 = arith.addf %147, %148 : vector<8x32xf32>
    %150 = arith.truncf %115 : vector<8x32xf32> to vector<8x32xbf16>
    %cst_61 = arith.constant dense<0.000000e+00> : vector<8x96xf32>
    %151 = tpu.matmul %150, %19, %cst_61 {dimension_numbers = #tpu.dot_dimension_numbers<[1], [0], [0], [1], [0, 0, 1, 1], [], []>} : vector<8x32xbf16>, vector<32x96xbf16>, vector<8x96xf32> -> vector<8x96xf32>
    %152 = vector.extract_strided_slice %125 {offsets = [0, 0], sizes = [8, 64], strides = [1, 1]} : vector<8x96xf32> to vector<8x64xf32>
    %153 = vector.extract_strided_slice %151 {offsets = [0, 0], sizes = [8, 64], strides = [1, 1]} : vector<8x96xf32> to vector<8x64xf32>
    %154 = arith.addf %152, %153 : vector<8x64xf32>
    %155 = arith.negf %154 : vector<8x64xf32>
    %156 = math.exp %155 : vector<8x64xf32>
    %cst_62 = arith.constant 1.000000e+00 : f32
    %157 = vector.broadcast %cst_62 : f32 to vector<8x64xf32>
    %158 = arith.addf %157, %156 : vector<8x64xf32>
    %159 = arith.divf %157, %158 : vector<8x64xf32>
    %160 = vector.extract_strided_slice %159 {offsets = [0, 0], sizes = [8, 32], strides = [1, 1]} : vector<8x64xf32> to vector<8x32xf32>
    %161 = vector.extract_strided_slice %159 {offsets = [0, 32], sizes = [8, 32], strides = [1, 1]} : vector<8x64xf32> to vector<8x32xf32>
    %162 = vector.extract_strided_slice %125 {offsets = [0, 64], sizes = [8, 32], strides = [1, 1]} : vector<8x96xf32> to vector<8x32xf32>
    %163 = vector.extract_strided_slice %151 {offsets = [0, 64], sizes = [8, 32], strides = [1, 1]} : vector<8x96xf32> to vector<8x32xf32>
    %164 = vector.broadcast %21 : vector<1x32xf32> to vector<8x32xf32>
    %165 = arith.addf %163, %164 : vector<8x32xf32>
    %166 = arith.mulf %160, %165 : vector<8x32xf32>
    %167 = arith.addf %162, %166 : vector<8x32xf32>
    %168 = math.tanh %167 : vector<8x32xf32>
    %cst_63 = arith.constant 1.000000e+00 : f32
    %169 = vector.broadcast %cst_63 : f32 to vector<8x32xf32>
    %170 = arith.subf %169, %161 : vector<8x32xf32>
    %171 = arith.mulf %170, %168 : vector<8x32xf32>
    %172 = arith.mulf %161, %115 : vector<8x32xf32>
    %173 = arith.addf %171, %172 : vector<8x32xf32>
    %c0_64 = arith.constant 0 : index
    %c16_65 = arith.constant 16 : index
    %c0_66 = arith.constant 0 : index
    %174 = vector.load %arg20[%c0_64, %c16_65, %c0_66] : memref<2x64x32xf32, #tpu.memory_space<vmem>>, vector<1x8x32xf32>
    %175 = vector.shape_cast %174 : vector<1x8x32xf32> to vector<8x32xf32>
    %176 = vector.shape_cast %149 : vector<8x32xf32> to vector<1x8x32xf32>
    tpu.vector_store %arg20[%c0_64, %c16_65, %c0_66], %176 {strides = array<i32>} : memref<2x64x32xf32, #tpu.memory_space<vmem>>, vector<1x8x32xf32>,
    %c1_67 = arith.constant 1 : index
    %c40_68 = arith.constant 40 : index
    %c0_69 = arith.constant 0 : index
    %177 = vector.load %arg20[%c1_67, %c40_68, %c0_69] : memref<2x64x32xf32, #tpu.memory_space<vmem>>, vector<1x8x32xf32>
    %178 = vector.shape_cast %177 : vector<1x8x32xf32> to vector<8x32xf32>
    %179 = vector.shape_cast %173 : vector<8x32xf32> to vector<1x8x32xf32>
    tpu.vector_store %arg20[%c1_67, %c40_68, %c0_69], %179 {strides = array<i32>} : memref<2x64x32xf32, #tpu.memory_space<vmem>>, vector<1x8x32xf32>,
    %c0_70 = arith.constant 0 : index
    %c24 = arith.constant 24 : index
    %c0_71 = arith.constant 0 : index
    %180 = vector.load %arg19[%c0_70, %c24, %c0_71] : memref<2x64x96xf32, #tpu.memory_space<vmem>>, vector<1x8x96xf32>
    %181 = vector.shape_cast %180 : vector<1x8x96xf32> to vector<8x96xf32>
    %c1_72 = arith.constant 1 : index
    %c32 = arith.constant 32 : index
    %c0_73 = arith.constant 0 : index
    %182 = vector.load %arg19[%c1_72, %c32, %c0_73] : memref<2x64x96xf32, #tpu.memory_space<vmem>>, vector<1x8x96xf32>
    %183 = vector.shape_cast %182 : vector<1x8x96xf32> to vector<8x96xf32>
    %184 = arith.truncf %149 : vector<8x32xf32> to vector<8x32xbf16>
    %cst_74 = arith.constant dense<0.000000e+00> : vector<8x96xf32>
    %185 = tpu.matmul %184, %18, %cst_74 {dimension_numbers = #tpu.dot_dimension_numbers<[1], [0], [0], [1], [0, 0, 1, 1], [], []>} : vector<8x32xbf16>, vector<32x96xbf16>, vector<8x96xf32> -> vector<8x96xf32>
    %186 = vector.extract_strided_slice %181 {offsets = [0, 0], sizes = [8, 64], strides = [1, 1]} : vector<8x96xf32> to vector<8x64xf32>
    %187 = vector.extract_strided_slice %185 {offsets = [0, 0], sizes = [8, 64], strides = [1, 1]} : vector<8x96xf32> to vector<8x64xf32>
    %188 = arith.addf %186, %187 : vector<8x64xf32>
    %189 = arith.negf %188 : vector<8x64xf32>
    %190 = math.exp %189 : vector<8x64xf32>
    %cst_75 = arith.constant 1.000000e+00 : f32
    %191 = vector.broadcast %cst_75 : f32 to vector<8x64xf32>
    %192 = arith.addf %191, %190 : vector<8x64xf32>
    %193 = arith.divf %191, %192 : vector<8x64xf32>
    %194 = vector.extract_strided_slice %193 {offsets = [0, 0], sizes = [8, 32], strides = [1, 1]} : vector<8x64xf32> to vector<8x32xf32>
    %195 = vector.extract_strided_slice %193 {offsets = [0, 32], sizes = [8, 32], strides = [1, 1]} : vector<8x64xf32> to vector<8x32xf32>
    %196 = vector.extract_strided_slice %181 {offsets = [0, 64], sizes = [8, 32], strides = [1, 1]} : vector<8x96xf32> to vector<8x32xf32>
    %197 = vector.extract_strided_slice %185 {offsets = [0, 64], sizes = [8, 32], strides = [1, 1]} : vector<8x96xf32> to vector<8x32xf32>
    %198 = vector.broadcast %20 : vector<1x32xf32> to vector<8x32xf32>
    %199 = arith.addf %197, %198 : vector<8x32xf32>
    %200 = arith.mulf %194, %199 : vector<8x32xf32>
    %201 = arith.addf %196, %200 : vector<8x32xf32>
    %202 = math.tanh %201 : vector<8x32xf32>
    %cst_76 = arith.constant 1.000000e+00 : f32
    %203 = vector.broadcast %cst_76 : f32 to vector<8x32xf32>
    %204 = arith.subf %203, %195 : vector<8x32xf32>
    %205 = arith.mulf %204, %202 : vector<8x32xf32>
    %206 = arith.mulf %195, %149 : vector<8x32xf32>
    %207 = arith.addf %205, %206 : vector<8x32xf32>
    %208 = arith.truncf %173 : vector<8x32xf32> to vector<8x32xbf16>
    %cst_77 = arith.constant dense<0.000000e+00> : vector<8x96xf32>
    %209 = tpu.matmul %208, %19, %cst_77 {dimension_numbers = #tpu.dot_dimension_numbers<[1], [0], [0], [1], [0, 0, 1, 1], [], []>} : vector<8x32xbf16>, vector<32x96xbf16>, vector<8x96xf32> -> vector<8x96xf32>
    %210 = vector.extract_strided_slice %183 {offsets = [0, 0], sizes = [8, 64], strides = [1, 1]} : vector<8x96xf32> to vector<8x64xf32>
    %211 = vector.extract_strided_slice %209 {offsets = [0, 0], sizes = [8, 64], strides = [1, 1]} : vector<8x96xf32> to vector<8x64xf32>
    %212 = arith.addf %210, %211 : vector<8x64xf32>
    %213 = arith.negf %212 : vector<8x64xf32>
    %214 = math.exp %213 : vector<8x64xf32>
    %cst_78 = arith.constant 1.000000e+00 : f32
    %215 = vector.broadcast %cst_78 : f32 to vector<8x64xf32>
    %216 = arith.addf %215, %214 : vector<8x64xf32>
    %217 = arith.divf %215, %216 : vector<8x64xf32>
    %218 = vector.extract_strided_slice %217 {offsets = [0, 0], sizes = [8, 32], strides = [1, 1]} : vector<8x64xf32> to vector<8x32xf32>
    %219 = vector.extract_strided_slice %217 {offsets = [0, 32], sizes = [8, 32], strides = [1, 1]} : vector<8x64xf32> to vector<8x32xf32>
    %220 = vector.extract_strided_slice %183 {offsets = [0, 64], sizes = [8, 32], strides = [1, 1]} : vector<8x96xf32> to vector<8x32xf32>
    %221 = vector.extract_strided_slice %209 {offsets = [0, 64], sizes = [8, 32], strides = [1, 1]} : vector<8x96xf32> to vector<8x32xf32>
    %222 = vector.broadcast %21 : vector<1x32xf32> to vector<8x32xf32>
    %223 = arith.addf %221, %222 : vector<8x32xf32>
    %224 = arith.mulf %218, %223 : vector<8x32xf32>
    %225 = arith.addf %220, %224 : vector<8x32xf32>
    %226 = math.tanh %225 : vector<8x32xf32>
    %cst_79 = arith.constant 1.000000e+00 : f32
    %227 = vector.broadcast %cst_79 : f32 to vector<8x32xf32>
    %228 = arith.subf %227, %219 : vector<8x32xf32>
    %229 = arith.mulf %228, %226 : vector<8x32xf32>
    %230 = arith.mulf %219, %173 : vector<8x32xf32>
    %231 = arith.addf %229, %230 : vector<8x32xf32>
    %c0_80 = arith.constant 0 : index
    %c24_81 = arith.constant 24 : index
    %c0_82 = arith.constant 0 : index
    %232 = vector.load %arg20[%c0_80, %c24_81, %c0_82] : memref<2x64x32xf32, #tpu.memory_space<vmem>>, vector<1x8x32xf32>
    %233 = vector.shape_cast %232 : vector<1x8x32xf32> to vector<8x32xf32>
    %234 = vector.shape_cast %207 : vector<8x32xf32> to vector<1x8x32xf32>
    tpu.vector_store %arg20[%c0_80, %c24_81, %c0_82], %234 {strides = array<i32>} : memref<2x64x32xf32, #tpu.memory_space<vmem>>, vector<1x8x32xf32>,
    %c1_83 = arith.constant 1 : index
    %c32_84 = arith.constant 32 : index
    %c0_85 = arith.constant 0 : index
    %235 = vector.load %arg20[%c1_83, %c32_84, %c0_85] : memref<2x64x32xf32, #tpu.memory_space<vmem>>, vector<1x8x32xf32>
    %236 = vector.shape_cast %235 : vector<1x8x32xf32> to vector<8x32xf32>
    %237 = vector.shape_cast %231 : vector<8x32xf32> to vector<1x8x32xf32>
    tpu.vector_store %arg20[%c1_83, %c32_84, %c0_85], %237 {strides = array<i32>} : memref<2x64x32xf32, #tpu.memory_space<vmem>>, vector<1x8x32xf32>,
    %c0_86 = arith.constant 0 : index
    %c32_87 = arith.constant 32 : index
    %c0_88 = arith.constant 0 : index
    %238 = vector.load %arg19[%c0_86, %c32_87, %c0_88] : memref<2x64x96xf32, #tpu.memory_space<vmem>>, vector<1x8x96xf32>
    %239 = vector.shape_cast %238 : vector<1x8x96xf32> to vector<8x96xf32>
    %c1_89 = arith.constant 1 : index
    %c24_90 = arith.constant 24 : index
    %c0_91 = arith.constant 0 : index
    %240 = vector.load %arg19[%c1_89, %c24_90, %c0_91] : memref<2x64x96xf32, #tpu.memory_space<vmem>>, vector<1x8x96xf32>
    %241 = vector.shape_cast %240 : vector<1x8x96xf32> to vector<8x96xf32>
    %242 = arith.truncf %207 : vector<8x32xf32> to vector<8x32xbf16>
    %cst_92 = arith.constant dense<0.000000e+00> : vector<8x96xf32>
    %243 = tpu.matmul %242, %18, %cst_92 {dimension_numbers = #tpu.dot_dimension_numbers<[1], [0], [0], [1], [0, 0, 1, 1], [], []>} : vector<8x32xbf16>, vector<32x96xbf16>, vector<8x96xf32> -> vector<8x96xf32>
    %244 = vector.extract_strided_slice %239 {offsets = [0, 0], sizes = [8, 64], strides = [1, 1]} : vector<8x96xf32> to vector<8x64xf32>
    %245 = vector.extract_strided_slice %243 {offsets = [0, 0], sizes = [8, 64], strides = [1, 1]} : vector<8x96xf32> to vector<8x64xf32>
    %246 = arith.addf %244, %245 : vector<8x64xf32>
    %247 = arith.negf %246 : vector<8x64xf32>
    %248 = math.exp %247 : vector<8x64xf32>
    %cst_93 = arith.constant 1.000000e+00 : f32
    %249 = vector.broadcast %cst_93 : f32 to vector<8x64xf32>
    %250 = arith.addf %249, %248 : vector<8x64xf32>
    %251 = arith.divf %249, %250 : vector<8x64xf32>
    %252 = vector.extract_strided_slice %251 {offsets = [0, 0], sizes = [8, 32], strides = [1, 1]} : vector<8x64xf32> to vector<8x32xf32>
    %253 = vector.extract_strided_slice %251 {offsets = [0, 32], sizes = [8, 32], strides = [1, 1]} : vector<8x64xf32> to vector<8x32xf32>
    %254 = vector.extract_strided_slice %239 {offsets = [0, 64], sizes = [8, 32], strides = [1, 1]} : vector<8x96xf32> to vector<8x32xf32>
    %255 = vector.extract_strided_slice %243 {offsets = [0, 64], sizes = [8, 32], strides = [1, 1]} : vector<8x96xf32> to vector<8x32xf32>
    %256 = vector.broadcast %20 : vector<1x32xf32> to vector<8x32xf32>
    %257 = arith.addf %255, %256 : vector<8x32xf32>
    %258 = arith.mulf %252, %257 : vector<8x32xf32>
    %259 = arith.addf %254, %258 : vector<8x32xf32>
    %260 = math.tanh %259 : vector<8x32xf32>
    %cst_94 = arith.constant 1.000000e+00 : f32
    %261 = vector.broadcast %cst_94 : f32 to vector<8x32xf32>
    %262 = arith.subf %261, %253 : vector<8x32xf32>
    %263 = arith.mulf %262, %260 : vector<8x32xf32>
    %264 = arith.mulf %253, %207 : vector<8x32xf32>
    %265 = arith.addf %263, %264 : vector<8x32xf32>
    %266 = arith.truncf %231 : vector<8x32xf32> to vector<8x32xbf16>
    %cst_95 = arith.constant dense<0.000000e+00> : vector<8x96xf32>
    %267 = tpu.matmul %266, %19, %cst_95 {dimension_numbers = #tpu.dot_dimension_numbers<[1], [0], [0], [1], [0, 0, 1, 1], [], []>} : vector<8x32xbf16>, vector<32x96xbf16>, vector<8x96xf32> -> vector<8x96xf32>
    %268 = vector.extract_strided_slice %241 {offsets = [0, 0], sizes = [8, 64], strides = [1, 1]} : vector<8x96xf32> to vector<8x64xf32>
    %269 = vector.extract_strided_slice %267 {offsets = [0, 0], sizes = [8, 64], strides = [1, 1]} : vector<8x96xf32> to vector<8x64xf32>
    %270 = arith.addf %268, %269 : vector<8x64xf32>
    %271 = arith.negf %270 : vector<8x64xf32>
    %272 = math.exp %271 : vector<8x64xf32>
    %cst_96 = arith.constant 1.000000e+00 : f32
    %273 = vector.broadcast %cst_96 : f32 to vector<8x64xf32>
    %274 = arith.addf %273, %272 : vector<8x64xf32>
    %275 = arith.divf %273, %274 : vector<8x64xf32>
    %276 = vector.extract_strided_slice %275 {offsets = [0, 0], sizes = [8, 32], strides = [1, 1]} : vector<8x64xf32> to vector<8x32xf32>
    %277 = vector.extract_strided_slice %275 {offsets = [0, 32], sizes = [8, 32], strides = [1, 1]} : vector<8x64xf32> to vector<8x32xf32>
    %278 = vector.extract_strided_slice %241 {offsets = [0, 64], sizes = [8, 32], strides = [1, 1]} : vector<8x96xf32> to vector<8x32xf32>
    %279 = vector.extract_strided_slice %267 {offsets = [0, 64], sizes = [8, 32], strides = [1, 1]} : vector<8x96xf32> to vector<8x32xf32>
    %280 = vector.broadcast %21 : vector<1x32xf32> to vector<8x32xf32>
    %281 = arith.addf %279, %280 : vector<8x32xf32>
    %282 = arith.mulf %276, %281 : vector<8x32xf32>
    %283 = arith.addf %278, %282 : vector<8x32xf32>
    %284 = math.tanh %283 : vector<8x32xf32>
    %cst_97 = arith.constant 1.000000e+00 : f32
    %285 = vector.broadcast %cst_97 : f32 to vector<8x32xf32>
    %286 = arith.subf %285, %277 : vector<8x32xf32>
    %287 = arith.mulf %286, %284 : vector<8x32xf32>
    %288 = arith.mulf %277, %231 : vector<8x32xf32>
    %289 = arith.addf %287, %288 : vector<8x32xf32>
    %c0_98 = arith.constant 0 : index
    %c32_99 = arith.constant 32 : index
    %c0_100 = arith.constant 0 : index
    %290 = vector.load %arg20[%c0_98, %c32_99, %c0_100] : memref<2x64x32xf32, #tpu.memory_space<vmem>>, vector<1x8x32xf32>
    %291 = vector.shape_cast %290 : vector<1x8x32xf32> to vector<8x32xf32>
    %292 = vector.shape_cast %265 : vector<8x32xf32> to vector<1x8x32xf32>
    tpu.vector_store %arg20[%c0_98, %c32_99, %c0_100], %292 {strides = array<i32>} : memref<2x64x32xf32, #tpu.memory_space<vmem>>, vector<1x8x32xf32>,
    %c1_101 = arith.constant 1 : index
    %c24_102 = arith.constant 24 : index
    %c0_103 = arith.constant 0 : index
    %293 = vector.load %arg20[%c1_101, %c24_102, %c0_103] : memref<2x64x32xf32, #tpu.memory_space<vmem>>, vector<1x8x32xf32>
    %294 = vector.shape_cast %293 : vector<1x8x32xf32> to vector<8x32xf32>
    %295 = vector.shape_cast %289 : vector<8x32xf32> to vector<1x8x32xf32>
    tpu.vector_store %arg20[%c1_101, %c24_102, %c0_103], %295 {strides = array<i32>} : memref<2x64x32xf32, #tpu.memory_space<vmem>>, vector<1x8x32xf32>,
    %c0_104 = arith.constant 0 : index
    %c40_105 = arith.constant 40 : index
    %c0_106 = arith.constant 0 : index
    %296 = vector.load %arg19[%c0_104, %c40_105, %c0_106] : memref<2x64x96xf32, #tpu.memory_space<vmem>>, vector<1x8x96xf32>
    %297 = vector.shape_cast %296 : vector<1x8x96xf32> to vector<8x96xf32>
    %c1_107 = arith.constant 1 : index
    %c16_108 = arith.constant 16 : index
    %c0_109 = arith.constant 0 : index
    %298 = vector.load %arg19[%c1_107, %c16_108, %c0_109] : memref<2x64x96xf32, #tpu.memory_space<vmem>>, vector<1x8x96xf32>
    %299 = vector.shape_cast %298 : vector<1x8x96xf32> to vector<8x96xf32>
    %300 = arith.truncf %265 : vector<8x32xf32> to vector<8x32xbf16>
    %cst_110 = arith.constant dense<0.000000e+00> : vector<8x96xf32>
    %301 = tpu.matmul %300, %18, %cst_110 {dimension_numbers = #tpu.dot_dimension_numbers<[1], [0], [0], [1], [0, 0, 1, 1], [], []>} : vector<8x32xbf16>, vector<32x96xbf16>, vector<8x96xf32> -> vector<8x96xf32>
    %302 = vector.extract_strided_slice %297 {offsets = [0, 0], sizes = [8, 64], strides = [1, 1]} : vector<8x96xf32> to vector<8x64xf32>
    %303 = vector.extract_strided_slice %301 {offsets = [0, 0], sizes = [8, 64], strides = [1, 1]} : vector<8x96xf32> to vector<8x64xf32>
    %304 = arith.addf %302, %303 : vector<8x64xf32>
    %305 = arith.negf %304 : vector<8x64xf32>
    %306 = math.exp %305 : vector<8x64xf32>
    %cst_111 = arith.constant 1.000000e+00 : f32
    %307 = vector.broadcast %cst_111 : f32 to vector<8x64xf32>
    %308 = arith.addf %307, %306 : vector<8x64xf32>
    %309 = arith.divf %307, %308 : vector<8x64xf32>
    %310 = vector.extract_strided_slice %309 {offsets = [0, 0], sizes = [8, 32], strides = [1, 1]} : vector<8x64xf32> to vector<8x32xf32>
    %311 = vector.extract_strided_slice %309 {offsets = [0, 32], sizes = [8, 32], strides = [1, 1]} : vector<8x64xf32> to vector<8x32xf32>
    %312 = vector.extract_strided_slice %297 {offsets = [0, 64], sizes = [8, 32], strides = [1, 1]} : vector<8x96xf32> to vector<8x32xf32>
    %313 = vector.extract_strided_slice %301 {offsets = [0, 64], sizes = [8, 32], strides = [1, 1]} : vector<8x96xf32> to vector<8x32xf32>
    %314 = vector.broadcast %20 : vector<1x32xf32> to vector<8x32xf32>
    %315 = arith.addf %313, %314 : vector<8x32xf32>
    %316 = arith.mulf %310, %315 : vector<8x32xf32>
    %317 = arith.addf %312, %316 : vector<8x32xf32>
    %318 = math.tanh %317 : vector<8x32xf32>
    %cst_112 = arith.constant 1.000000e+00 : f32
    %319 = vector.broadcast %cst_112 : f32 to vector<8x32xf32>
    %320 = arith.subf %319, %311 : vector<8x32xf32>
    %321 = arith.mulf %320, %318 : vector<8x32xf32>
    %322 = arith.mulf %311, %265 : vector<8x32xf32>
    %323 = arith.addf %321, %322 : vector<8x32xf32>
    %324 = arith.truncf %289 : vector<8x32xf32> to vector<8x32xbf16>
    %cst_113 = arith.constant dense<0.000000e+00> : vector<8x96xf32>
    %325 = tpu.matmul %324, %19, %cst_113 {dimension_numbers = #tpu.dot_dimension_numbers<[1], [0], [0], [1], [0, 0, 1, 1], [], []>} : vector<8x32xbf16>, vector<32x96xbf16>, vector<8x96xf32> -> vector<8x96xf32>
    %326 = vector.extract_strided_slice %299 {offsets = [0, 0], sizes = [8, 64], strides = [1, 1]} : vector<8x96xf32> to vector<8x64xf32>
    %327 = vector.extract_strided_slice %325 {offsets = [0, 0], sizes = [8, 64], strides = [1, 1]} : vector<8x96xf32> to vector<8x64xf32>
    %328 = arith.addf %326, %327 : vector<8x64xf32>
    %329 = arith.negf %328 : vector<8x64xf32>
    %330 = math.exp %329 : vector<8x64xf32>
    %cst_114 = arith.constant 1.000000e+00 : f32
    %331 = vector.broadcast %cst_114 : f32 to vector<8x64xf32>
    %332 = arith.addf %331, %330 : vector<8x64xf32>
    %333 = arith.divf %331, %332 : vector<8x64xf32>
    %334 = vector.extract_strided_slice %333 {offsets = [0, 0], sizes = [8, 32], strides = [1, 1]} : vector<8x64xf32> to vector<8x32xf32>
    %335 = vector.extract_strided_slice %333 {offsets = [0, 32], sizes = [8, 32], strides = [1, 1]} : vector<8x64xf32> to vector<8x32xf32>
    %336 = vector.extract_strided_slice %299 {offsets = [0, 64], sizes = [8, 32], strides = [1, 1]} : vector<8x96xf32> to vector<8x32xf32>
    %337 = vector.extract_strided_slice %325 {offsets = [0, 64], sizes = [8, 32], strides = [1, 1]} : vector<8x96xf32> to vector<8x32xf32>
    %338 = vector.broadcast %21 : vector<1x32xf32> to vector<8x32xf32>
    %339 = arith.addf %337, %338 : vector<8x32xf32>
    %340 = arith.mulf %334, %339 : vector<8x32xf32>
    %341 = arith.addf %336, %340 : vector<8x32xf32>
    %342 = math.tanh %341 : vector<8x32xf32>
    %cst_115 = arith.constant 1.000000e+00 : f32
    %343 = vector.broadcast %cst_115 : f32 to vector<8x32xf32>
    %344 = arith.subf %343, %335 : vector<8x32xf32>
    %345 = arith.mulf %344, %342 : vector<8x32xf32>
    %346 = arith.mulf %335, %289 : vector<8x32xf32>
    %347 = arith.addf %345, %346 : vector<8x32xf32>
    %c0_116 = arith.constant 0 : index
    %c40_117 = arith.constant 40 : index
    %c0_118 = arith.constant 0 : index
    %348 = vector.load %arg20[%c0_116, %c40_117, %c0_118] : memref<2x64x32xf32, #tpu.memory_space<vmem>>, vector<1x8x32xf32>
    %349 = vector.shape_cast %348 : vector<1x8x32xf32> to vector<8x32xf32>
    %350 = vector.shape_cast %323 : vector<8x32xf32> to vector<1x8x32xf32>
    tpu.vector_store %arg20[%c0_116, %c40_117, %c0_118], %350 {strides = array<i32>} : memref<2x64x32xf32, #tpu.memory_space<vmem>>, vector<1x8x32xf32>,
    %c1_119 = arith.constant 1 : index
    %c16_120 = arith.constant 16 : index
    %c0_121 = arith.constant 0 : index
    %351 = vector.load %arg20[%c1_119, %c16_120, %c0_121] : memref<2x64x32xf32, #tpu.memory_space<vmem>>, vector<1x8x32xf32>
    %352 = vector.shape_cast %351 : vector<1x8x32xf32> to vector<8x32xf32>
    %353 = vector.shape_cast %347 : vector<8x32xf32> to vector<1x8x32xf32>
    tpu.vector_store %arg20[%c1_119, %c16_120, %c0_121], %353 {strides = array<i32>} : memref<2x64x32xf32, #tpu.memory_space<vmem>>, vector<1x8x32xf32>,
    %c0_122 = arith.constant 0 : index
    %c48_123 = arith.constant 48 : index
    %c0_124 = arith.constant 0 : index
    %354 = vector.load %arg19[%c0_122, %c48_123, %c0_124] : memref<2x64x96xf32, #tpu.memory_space<vmem>>, vector<1x8x96xf32>
    %355 = vector.shape_cast %354 : vector<1x8x96xf32> to vector<8x96xf32>
    %c1_125 = arith.constant 1 : index
    %c8_126 = arith.constant 8 : index
    %c0_127 = arith.constant 0 : index
    %356 = vector.load %arg19[%c1_125, %c8_126, %c0_127] : memref<2x64x96xf32, #tpu.memory_space<vmem>>, vector<1x8x96xf32>
    %357 = vector.shape_cast %356 : vector<1x8x96xf32> to vector<8x96xf32>
    %358 = arith.truncf %323 : vector<8x32xf32> to vector<8x32xbf16>
    %cst_128 = arith.constant dense<0.000000e+00> : vector<8x96xf32>
    %359 = tpu.matmul %358, %18, %cst_128 {dimension_numbers = #tpu.dot_dimension_numbers<[1], [0], [0], [1], [0, 0, 1, 1], [], []>} : vector<8x32xbf16>, vector<32x96xbf16>, vector<8x96xf32> -> vector<8x96xf32>
    %360 = vector.extract_strided_slice %355 {offsets = [0, 0], sizes = [8, 64], strides = [1, 1]} : vector<8x96xf32> to vector<8x64xf32>
    %361 = vector.extract_strided_slice %359 {offsets = [0, 0], sizes = [8, 64], strides = [1, 1]} : vector<8x96xf32> to vector<8x64xf32>
    %362 = arith.addf %360, %361 : vector<8x64xf32>
    %363 = arith.negf %362 : vector<8x64xf32>
    %364 = math.exp %363 : vector<8x64xf32>
    %cst_129 = arith.constant 1.000000e+00 : f32
    %365 = vector.broadcast %cst_129 : f32 to vector<8x64xf32>
    %366 = arith.addf %365, %364 : vector<8x64xf32>
    %367 = arith.divf %365, %366 : vector<8x64xf32>
    %368 = vector.extract_strided_slice %367 {offsets = [0, 0], sizes = [8, 32], strides = [1, 1]} : vector<8x64xf32> to vector<8x32xf32>
    %369 = vector.extract_strided_slice %367 {offsets = [0, 32], sizes = [8, 32], strides = [1, 1]} : vector<8x64xf32> to vector<8x32xf32>
    %370 = vector.extract_strided_slice %355 {offsets = [0, 64], sizes = [8, 32], strides = [1, 1]} : vector<8x96xf32> to vector<8x32xf32>
    %371 = vector.extract_strided_slice %359 {offsets = [0, 64], sizes = [8, 32], strides = [1, 1]} : vector<8x96xf32> to vector<8x32xf32>
    %372 = vector.broadcast %20 : vector<1x32xf32> to vector<8x32xf32>
    %373 = arith.addf %371, %372 : vector<8x32xf32>
    %374 = arith.mulf %368, %373 : vector<8x32xf32>
    %375 = arith.addf %370, %374 : vector<8x32xf32>
    %376 = math.tanh %375 : vector<8x32xf32>
    %cst_130 = arith.constant 1.000000e+00 : f32
    %377 = vector.broadcast %cst_130 : f32 to vector<8x32xf32>
    %378 = arith.subf %377, %369 : vector<8x32xf32>
    %379 = arith.mulf %378, %376 : vector<8x32xf32>
    %380 = arith.mulf %369, %323 : vector<8x32xf32>
    %381 = arith.addf %379, %380 : vector<8x32xf32>
    %382 = arith.truncf %347 : vector<8x32xf32> to vector<8x32xbf16>
    %cst_131 = arith.constant dense<0.000000e+00> : vector<8x96xf32>
    %383 = tpu.matmul %382, %19, %cst_131 {dimension_numbers = #tpu.dot_dimension_numbers<[1], [0], [0], [1], [0, 0, 1, 1], [], []>} : vector<8x32xbf16>, vector<32x96xbf16>, vector<8x96xf32> -> vector<8x96xf32>
    %384 = vector.extract_strided_slice %357 {offsets = [0, 0], sizes = [8, 64], strides = [1, 1]} : vector<8x96xf32> to vector<8x64xf32>
    %385 = vector.extract_strided_slice %383 {offsets = [0, 0], sizes = [8, 64], strides = [1, 1]} : vector<8x96xf32> to vector<8x64xf32>
    %386 = arith.addf %384, %385 : vector<8x64xf32>
    %387 = arith.negf %386 : vector<8x64xf32>
    %388 = math.exp %387 : vector<8x64xf32>
    %cst_132 = arith.constant 1.000000e+00 : f32
    %389 = vector.broadcast %cst_132 : f32 to vector<8x64xf32>
    %390 = arith.addf %389, %388 : vector<8x64xf32>
    %391 = arith.divf %389, %390 : vector<8x64xf32>
    %392 = vector.extract_strided_slice %391 {offsets = [0, 0], sizes = [8, 32], strides = [1, 1]} : vector<8x64xf32> to vector<8x32xf32>
    %393 = vector.extract_strided_slice %391 {offsets = [0, 32], sizes = [8, 32], strides = [1, 1]} : vector<8x64xf32> to vector<8x32xf32>
    %394 = vector.extract_strided_slice %357 {offsets = [0, 64], sizes = [8, 32], strides = [1, 1]} : vector<8x96xf32> to vector<8x32xf32>
    %395 = vector.extract_strided_slice %383 {offsets = [0, 64], sizes = [8, 32], strides = [1, 1]} : vector<8x96xf32> to vector<8x32xf32>
    %396 = vector.broadcast %21 : vector<1x32xf32> to vector<8x32xf32>
    %397 = arith.addf %395, %396 : vector<8x32xf32>
    %398 = arith.mulf %392, %397 : vector<8x32xf32>
    %399 = arith.addf %394, %398 : vector<8x32xf32>
    %400 = math.tanh %399 : vector<8x32xf32>
    %cst_133 = arith.constant 1.000000e+00 : f32
    %401 = vector.broadcast %cst_133 : f32 to vector<8x32xf32>
    %402 = arith.subf %401, %393 : vector<8x32xf32>
    %403 = arith.mulf %402, %400 : vector<8x32xf32>
    %404 = arith.mulf %393, %347 : vector<8x32xf32>
    %405 = arith.addf %403, %404 : vector<8x32xf32>
    %c0_134 = arith.constant 0 : index
    %c48_135 = arith.constant 48 : index
    %c0_136 = arith.constant 0 : index
    %406 = vector.load %arg20[%c0_134, %c48_135, %c0_136] : memref<2x64x32xf32, #tpu.memory_space<vmem>>, vector<1x8x32xf32>
    %407 = vector.shape_cast %406 : vector<1x8x32xf32> to vector<8x32xf32>
    %408 = vector.shape_cast %381 : vector<8x32xf32> to vector<1x8x32xf32>
    tpu.vector_store %arg20[%c0_134, %c48_135, %c0_136], %408 {strides = array<i32>} : memref<2x64x32xf32, #tpu.memory_space<vmem>>, vector<1x8x32xf32>,
    %c1_137 = arith.constant 1 : index
    %c8_138 = arith.constant 8 : index
    %c0_139 = arith.constant 0 : index
    %409 = vector.load %arg20[%c1_137, %c8_138, %c0_139] : memref<2x64x32xf32, #tpu.memory_space<vmem>>, vector<1x8x32xf32>
    %410 = vector.shape_cast %409 : vector<1x8x32xf32> to vector<8x32xf32>
    %411 = vector.shape_cast %405 : vector<8x32xf32> to vector<1x8x32xf32>
    tpu.vector_store %arg20[%c1_137, %c8_138, %c0_139], %411 {strides = array<i32>} : memref<2x64x32xf32, #tpu.memory_space<vmem>>, vector<1x8x32xf32>,
    %c0_140 = arith.constant 0 : index
    %c56_141 = arith.constant 56 : index
    %c0_142 = arith.constant 0 : index
    %412 = vector.load %arg19[%c0_140, %c56_141, %c0_142] : memref<2x64x96xf32, #tpu.memory_space<vmem>>, vector<1x8x96xf32>
    %413 = vector.shape_cast %412 : vector<1x8x96xf32> to vector<8x96xf32>
    %c1_143 = arith.constant 1 : index
    %c0_144 = arith.constant 0 : index
    %c0_145 = arith.constant 0 : index
    %414 = vector.load %arg19[%c1_143, %c0_144, %c0_145] : memref<2x64x96xf32, #tpu.memory_space<vmem>>, vector<1x8x96xf32>
    %415 = vector.shape_cast %414 : vector<1x8x96xf32> to vector<8x96xf32>
    %416 = arith.truncf %381 : vector<8x32xf32> to vector<8x32xbf16>
    %cst_146 = arith.constant dense<0.000000e+00> : vector<8x96xf32>
    %417 = tpu.matmul %416, %18, %cst_146 {dimension_numbers = #tpu.dot_dimension_numbers<[1], [0], [0], [1], [0, 0, 1, 1], [], []>} : vector<8x32xbf16>, vector<32x96xbf16>, vector<8x96xf32> -> vector<8x96xf32>
    %418 = vector.extract_strided_slice %413 {offsets = [0, 0], sizes = [8, 64], strides = [1, 1]} : vector<8x96xf32> to vector<8x64xf32>
    %419 = vector.extract_strided_slice %417 {offsets = [0, 0], sizes = [8, 64], strides = [1, 1]} : vector<8x96xf32> to vector<8x64xf32>
    %420 = arith.addf %418, %419 : vector<8x64xf32>
    %421 = arith.negf %420 : vector<8x64xf32>
    %422 = math.exp %421 : vector<8x64xf32>
    %cst_147 = arith.constant 1.000000e+00 : f32
    %423 = vector.broadcast %cst_147 : f32 to vector<8x64xf32>
    %424 = arith.addf %423, %422 : vector<8x64xf32>
    %425 = arith.divf %423, %424 : vector<8x64xf32>
    %426 = vector.extract_strided_slice %425 {offsets = [0, 0], sizes = [8, 32], strides = [1, 1]} : vector<8x64xf32> to vector<8x32xf32>
    %427 = vector.extract_strided_slice %425 {offsets = [0, 32], sizes = [8, 32], strides = [1, 1]} : vector<8x64xf32> to vector<8x32xf32>
    %428 = vector.extract_strided_slice %413 {offsets = [0, 64], sizes = [8, 32], strides = [1, 1]} : vector<8x96xf32> to vector<8x32xf32>
    %429 = vector.extract_strided_slice %417 {offsets = [0, 64], sizes = [8, 32], strides = [1, 1]} : vector<8x96xf32> to vector<8x32xf32>
    %430 = vector.broadcast %20 : vector<1x32xf32> to vector<8x32xf32>
    %431 = arith.addf %429, %430 : vector<8x32xf32>
    %432 = arith.mulf %426, %431 : vector<8x32xf32>
    %433 = arith.addf %428, %432 : vector<8x32xf32>
    %434 = math.tanh %433 : vector<8x32xf32>
    %cst_148 = arith.constant 1.000000e+00 : f32
    %435 = vector.broadcast %cst_148 : f32 to vector<8x32xf32>
    %436 = arith.subf %435, %427 : vector<8x32xf32>
    %437 = arith.mulf %436, %434 : vector<8x32xf32>
    %438 = arith.mulf %427, %381 : vector<8x32xf32>
    %439 = arith.addf %437, %438 : vector<8x32xf32>
    %440 = arith.truncf %405 : vector<8x32xf32> to vector<8x32xbf16>
    %cst_149 = arith.constant dense<0.000000e+00> : vector<8x96xf32>
    %441 = tpu.matmul %440, %19, %cst_149 {dimension_numbers = #tpu.dot_dimension_numbers<[1], [0], [0], [1], [0, 0, 1, 1], [], []>} : vector<8x32xbf16>, vector<32x96xbf16>, vector<8x96xf32> -> vector<8x96xf32>
    %442 = vector.extract_strided_slice %415 {offsets = [0, 0], sizes = [8, 64], strides = [1, 1]} : vector<8x96xf32> to vector<8x64xf32>
    %443 = vector.extract_strided_slice %441 {offsets = [0, 0], sizes = [8, 64], strides = [1, 1]} : vector<8x96xf32> to vector<8x64xf32>
    %444 = arith.addf %442, %443 : vector<8x64xf32>
    %445 = arith.negf %444 : vector<8x64xf32>
    %446 = math.exp %445 : vector<8x64xf32>
    %cst_150 = arith.constant 1.000000e+00 : f32
    %447 = vector.broadcast %cst_150 : f32 to vector<8x64xf32>
    %448 = arith.addf %447, %446 : vector<8x64xf32>
    %449 = arith.divf %447, %448 : vector<8x64xf32>
    %450 = vector.extract_strided_slice %449 {offsets = [0, 0], sizes = [8, 32], strides = [1, 1]} : vector<8x64xf32> to vector<8x32xf32>
    %451 = vector.extract_strided_slice %449 {offsets = [0, 32], sizes = [8, 32], strides = [1, 1]} : vector<8x64xf32> to vector<8x32xf32>
    %452 = vector.extract_strided_slice %415 {offsets = [0, 64], sizes = [8, 32], strides = [1, 1]} : vector<8x96xf32> to vector<8x32xf32>
    %453 = vector.extract_strided_slice %441 {offsets = [0, 64], sizes = [8, 32], strides = [1, 1]} : vector<8x96xf32> to vector<8x32xf32>
    %454 = vector.broadcast %21 : vector<1x32xf32> to vector<8x32xf32>
    %455 = arith.addf %453, %454 : vector<8x32xf32>
    %456 = arith.mulf %450, %455 : vector<8x32xf32>
    %457 = arith.addf %452, %456 : vector<8x32xf32>
    %458 = math.tanh %457 : vector<8x32xf32>
    %cst_151 = arith.constant 1.000000e+00 : f32
    %459 = vector.broadcast %cst_151 : f32 to vector<8x32xf32>
    %460 = arith.subf %459, %451 : vector<8x32xf32>
    %461 = arith.mulf %460, %458 : vector<8x32xf32>
    %462 = arith.mulf %451, %405 : vector<8x32xf32>
    %463 = arith.addf %461, %462 : vector<8x32xf32>
    %c0_152 = arith.constant 0 : index
    %c56_153 = arith.constant 56 : index
    %c0_154 = arith.constant 0 : index
    %464 = vector.load %arg20[%c0_152, %c56_153, %c0_154] : memref<2x64x32xf32, #tpu.memory_space<vmem>>, vector<1x8x32xf32>
    %465 = vector.shape_cast %464 : vector<1x8x32xf32> to vector<8x32xf32>
    %466 = vector.shape_cast %439 : vector<8x32xf32> to vector<1x8x32xf32>
    tpu.vector_store %arg20[%c0_152, %c56_153, %c0_154], %466 {strides = array<i32>} : memref<2x64x32xf32, #tpu.memory_space<vmem>>, vector<1x8x32xf32>,
    %c1_155 = arith.constant 1 : index
    %c0_156 = arith.constant 0 : index
    %c0_157 = arith.constant 0 : index
    %467 = vector.load %arg20[%c1_155, %c0_156, %c0_157] : memref<2x64x32xf32, #tpu.memory_space<vmem>>, vector<1x8x32xf32>
    %468 = vector.shape_cast %467 : vector<1x8x32xf32> to vector<8x32xf32>
    %469 = vector.shape_cast %463 : vector<8x32xf32> to vector<1x8x32xf32>
    tpu.vector_store %arg20[%c1_155, %c0_156, %c0_157], %469 {strides = array<i32>} : memref<2x64x32xf32, #tpu.memory_space<vmem>>, vector<1x8x32xf32>,
    %c0_158 = arith.constant 0 : index
    %c0_159 = arith.constant 0 : index
    %c0_160 = arith.constant 0 : index
    %470 = vector.load %arg20[%c0_158, %c0_159, %c0_160] : memref<2x64x32xf32, #tpu.memory_space<vmem>>, vector<1x64x32xf32>
    %471 = vector.shape_cast %470 : vector<1x64x32xf32> to vector<64x32xf32>
    %472 = arith.truncf %471 : vector<64x32xf32> to vector<64x32xbf16>
    %c1_161 = arith.constant 1 : index
    %c0_162 = arith.constant 0 : index
    %c0_163 = arith.constant 0 : index
    %473 = vector.load %arg20[%c1_161, %c0_162, %c0_163] : memref<2x64x32xf32, #tpu.memory_space<vmem>>, vector<1x64x32xf32>
    %474 = vector.shape_cast %473 : vector<1x64x32xf32> to vector<64x32xf32>
    %475 = arith.truncf %474 : vector<64x32xf32> to vector<64x32xbf16>
    %c0_164 = arith.constant 0 : index
    %c0_165 = arith.constant 0 : index
    %c0_166 = arith.constant 0 : index
    %476 = vector.load %arg9[%c0_164, %c0_165, %c0_166] : memref<2x32x96xbf16, #tpu.memory_space<vmem>>, vector<2x32x96xbf16>
    %477 = vector.extract_strided_slice %476 {offsets = [0, 0, 0], sizes = [1, 32, 96], strides = [1, 1, 1]} : vector<2x32x96xbf16> to vector<1x32x96xbf16>
    %478 = vector.shape_cast %477 : vector<1x32x96xbf16> to vector<32x96xbf16>
    %cst_167 = arith.constant dense<0.000000e+00> : vector<64x96xf32>
    %479 = tpu.matmul %472, %478, %cst_167 {dimension_numbers = #tpu.dot_dimension_numbers<[1], [0], [0], [1], [0, 0, 1, 1], [], []>} : vector<64x32xbf16>, vector<32x96xbf16>, vector<64x96xf32> -> vector<64x96xf32>
    %480 = vector.extract_strided_slice %476 {offsets = [1, 0, 0], sizes = [1, 32, 96], strides = [1, 1, 1]} : vector<2x32x96xbf16> to vector<1x32x96xbf16>
    %481 = vector.shape_cast %480 : vector<1x32x96xbf16> to vector<32x96xbf16>
    %cst_168 = arith.constant dense<0.000000e+00> : vector<64x96xf32>
    %482 = tpu.matmul %475, %481, %cst_168 {dimension_numbers = #tpu.dot_dimension_numbers<[1], [0], [0], [1], [0, 0, 1, 1], [], []>} : vector<64x32xbf16>, vector<32x96xbf16>, vector<64x96xf32> -> vector<64x96xf32>
    %483 = arith.addf %479, %482 : vector<64x96xf32>
    %c0_169 = arith.constant 0 : index
    %c0_170 = arith.constant 0 : index
    %484 = vector.load %arg10[%c0_169, %c0_170] : memref<1x96xf32, #tpu.memory_space<vmem>>, vector<1x96xf32>
    %485 = vector.broadcast %484 : vector<1x96xf32> to vector<64x96xf32>
    %486 = arith.addf %483, %485 : vector<64x96xf32>
    %c0_171 = arith.constant 0 : index
    %c0_172 = arith.constant 0 : index
    %c0_173 = arith.constant 0 : index
    %487 = vector.load %arg19[%c0_171, %c0_172, %c0_173] : memref<2x64x96xf32, #tpu.memory_space<vmem>>, vector<1x64x96xf32>
    %488 = vector.shape_cast %487 : vector<1x64x96xf32> to vector<64x96xf32>
    %489 = vector.shape_cast %486 : vector<64x96xf32> to vector<1x64x96xf32>
    tpu.vector_store %arg19[%c0_171, %c0_172, %c0_173], %489 {strides = array<i32>} : memref<2x64x96xf32, #tpu.memory_space<vmem>>, vector<1x64x96xf32>,
    %c0_174 = arith.constant 0 : index
    %c0_175 = arith.constant 0 : index
    %c0_176 = arith.constant 0 : index
    %490 = vector.load %arg13[%c0_174, %c0_175, %c0_176] : memref<2x32x96xbf16, #tpu.memory_space<vmem>>, vector<2x32x96xbf16>
    %491 = vector.extract_strided_slice %472 {offsets = [56, 0], sizes = [8, 32], strides = [1, 1]} : vector<64x32xbf16> to vector<8x32xbf16>
    %492 = vector.extract_strided_slice %475 {offsets = [56, 0], sizes = [8, 32], strides = [1, 1]} : vector<64x32xbf16> to vector<8x32xbf16>
    %493 = vector.extract_strided_slice %490 {offsets = [0, 0, 0], sizes = [1, 32, 96], strides = [1, 1, 1]} : vector<2x32x96xbf16> to vector<1x32x96xbf16>
    %494 = vector.shape_cast %493 : vector<1x32x96xbf16> to vector<32x96xbf16>
    %cst_177 = arith.constant dense<0.000000e+00> : vector<8x96xf32>
    %495 = tpu.matmul %491, %494, %cst_177 {dimension_numbers = #tpu.dot_dimension_numbers<[1], [0], [0], [1], [0, 0, 1, 1], [], []>} : vector<8x32xbf16>, vector<32x96xbf16>, vector<8x96xf32> -> vector<8x96xf32>
    %496 = vector.extract_strided_slice %490 {offsets = [1, 0, 0], sizes = [1, 32, 96], strides = [1, 1, 1]} : vector<2x32x96xbf16> to vector<1x32x96xbf16>
    %497 = vector.shape_cast %496 : vector<1x32x96xbf16> to vector<32x96xbf16>
    %cst_178 = arith.constant dense<0.000000e+00> : vector<8x96xf32>
    %498 = tpu.matmul %492, %497, %cst_178 {dimension_numbers = #tpu.dot_dimension_numbers<[1], [0], [0], [1], [0, 0, 1, 1], [], []>} : vector<8x32xbf16>, vector<32x96xbf16>, vector<8x96xf32> -> vector<8x96xf32>
    %499 = arith.addf %495, %498 : vector<8x96xf32>
    %c0_179 = arith.constant 0 : index
    %c0_180 = arith.constant 0 : index
    %500 = vector.load %arg14[%c0_179, %c0_180] : memref<1x96xf32, #tpu.memory_space<vmem>>, vector<1x96xf32>
    %501 = vector.broadcast %500 : vector<1x96xf32> to vector<8x96xf32>
    %502 = arith.addf %499, %501 : vector<8x96xf32>
    %c0_181 = arith.constant 0 : index
    %c0_182 = arith.constant 0 : index
    %503 = vector.load %arg15[%c0_181, %c0_182] : memref<1x32xf32, #tpu.memory_space<vmem>>, vector<1x32xf32>
    %504 = vector.extract_strided_slice %502 {offsets = [0, 0], sizes = [8, 64], strides = [1, 1]} : vector<8x96xf32> to vector<8x64xf32>
    %505 = arith.negf %504 : vector<8x64xf32>
    %506 = math.exp %505 : vector<8x64xf32>
    %cst_183 = arith.constant 1.000000e+00 : f32
    %507 = vector.broadcast %cst_183 : f32 to vector<8x64xf32>
    %508 = arith.addf %507, %506 : vector<8x64xf32>
    %509 = arith.divf %507, %508 : vector<8x64xf32>
    %510 = vector.extract_strided_slice %509 {offsets = [0, 0], sizes = [8, 32], strides = [1, 1]} : vector<8x64xf32> to vector<8x32xf32>
    %511 = vector.extract_strided_slice %509 {offsets = [0, 32], sizes = [8, 32], strides = [1, 1]} : vector<8x64xf32> to vector<8x32xf32>
    %512 = vector.extract_strided_slice %502 {offsets = [0, 64], sizes = [8, 32], strides = [1, 1]} : vector<8x96xf32> to vector<8x32xf32>
    %513 = vector.broadcast %503 : vector<1x32xf32> to vector<8x32xf32>
    %514 = arith.mulf %510, %513 : vector<8x32xf32>
    %515 = arith.addf %512, %514 : vector<8x32xf32>
    %516 = math.tanh %515 : vector<8x32xf32>
    %cst_184 = arith.constant 1.000000e+00 : f32
    %517 = vector.broadcast %cst_184 : f32 to vector<8x32xf32>
    %518 = arith.subf %517, %511 : vector<8x32xf32>
    %519 = arith.mulf %518, %516 : vector<8x32xf32>
    %c0_185 = arith.constant 0 : index
    %c0_186 = arith.constant 0 : index
    %520 = vector.load %arg11[%c0_185, %c0_186] : memref<32x96xbf16, #tpu.memory_space<vmem>>, vector<32x96xbf16>
    %c0_187 = arith.constant 0 : index
    %c0_188 = arith.constant 0 : index
    %521 = vector.load %arg12[%c0_187, %c0_188] : memref<1x32xf32, #tpu.memory_space<vmem>>, vector<1x32xf32>
    %c0_189 = arith.constant 0 : index
    %c0_190 = arith.constant 0 : index
    %c0_191 = arith.constant 0 : index
    %522 = vector.load %arg19[%c0_189, %c0_190, %c0_191] : memref<2x64x96xf32, #tpu.memory_space<vmem>>, vector<1x8x96xf32>
    %523 = vector.shape_cast %522 : vector<1x8x96xf32> to vector<8x96xf32>
    %524 = vector.extract_strided_slice %523 {offsets = [0, 0], sizes = [8, 64], strides = [1, 1]} : vector<8x96xf32> to vector<8x64xf32>
    %525 = arith.negf %524 : vector<8x64xf32>
    %526 = math.exp %525 : vector<8x64xf32>
    %cst_192 = arith.constant 1.000000e+00 : f32
    %527 = vector.broadcast %cst_192 : f32 to vector<8x64xf32>
    %528 = arith.addf %527, %526 : vector<8x64xf32>
    %529 = arith.divf %527, %528 : vector<8x64xf32>
    %530 = vector.extract_strided_slice %529 {offsets = [0, 0], sizes = [8, 32], strides = [1, 1]} : vector<8x64xf32> to vector<8x32xf32>
    %531 = vector.extract_strided_slice %529 {offsets = [0, 32], sizes = [8, 32], strides = [1, 1]} : vector<8x64xf32> to vector<8x32xf32>
    %532 = vector.extract_strided_slice %523 {offsets = [0, 64], sizes = [8, 32], strides = [1, 1]} : vector<8x96xf32> to vector<8x32xf32>
    %533 = vector.broadcast %521 : vector<1x32xf32> to vector<8x32xf32>
    %534 = arith.mulf %530, %533 : vector<8x32xf32>
    %535 = arith.addf %532, %534 : vector<8x32xf32>
    %536 = math.tanh %535 : vector<8x32xf32>
    %cst_193 = arith.constant 1.000000e+00 : f32
    %537 = vector.broadcast %cst_193 : f32 to vector<8x32xf32>
    %538 = arith.subf %537, %531 : vector<8x32xf32>
    %539 = arith.mulf %538, %536 : vector<8x32xf32>
    %c0_194 = arith.constant 0 : index
    %c8_195 = arith.constant 8 : index
    %c0_196 = arith.constant 0 : index
    %540 = vector.load %arg19[%c0_194, %c8_195, %c0_196] : memref<2x64x96xf32, #tpu.memory_space<vmem>>, vector<1x8x96xf32>
    %541 = vector.shape_cast %540 : vector<1x8x96xf32> to vector<8x96xf32>
    %542 = arith.truncf %539 : vector<8x32xf32> to vector<8x32xbf16>
    %cst_197 = arith.constant dense<0.000000e+00> : vector<8x96xf32>
    %543 = tpu.matmul %542, %520, %cst_197 {dimension_numbers = #tpu.dot_dimension_numbers<[1], [0], [0], [1], [0, 0, 1, 1], [], []>} : vector<8x32xbf16>, vector<32x96xbf16>, vector<8x96xf32> -> vector<8x96xf32>
    %544 = vector.extract_strided_slice %541 {offsets = [0, 0], sizes = [8, 64], strides = [1, 1]} : vector<8x96xf32> to vector<8x64xf32>
    %545 = vector.extract_strided_slice %543 {offsets = [0, 0], sizes = [8, 64], strides = [1, 1]} : vector<8x96xf32> to vector<8x64xf32>
    %546 = arith.addf %544, %545 : vector<8x64xf32>
    %547 = arith.negf %546 : vector<8x64xf32>
    %548 = math.exp %547 : vector<8x64xf32>
    %cst_198 = arith.constant 1.000000e+00 : f32
    %549 = vector.broadcast %cst_198 : f32 to vector<8x64xf32>
    %550 = arith.addf %549, %548 : vector<8x64xf32>
    %551 = arith.divf %549, %550 : vector<8x64xf32>
    %552 = vector.extract_strided_slice %551 {offsets = [0, 0], sizes = [8, 32], strides = [1, 1]} : vector<8x64xf32> to vector<8x32xf32>
    %553 = vector.extract_strided_slice %551 {offsets = [0, 32], sizes = [8, 32], strides = [1, 1]} : vector<8x64xf32> to vector<8x32xf32>
    %554 = vector.extract_strided_slice %541 {offsets = [0, 64], sizes = [8, 32], strides = [1, 1]} : vector<8x96xf32> to vector<8x32xf32>
    %555 = vector.extract_strided_slice %543 {offsets = [0, 64], sizes = [8, 32], strides = [1, 1]} : vector<8x96xf32> to vector<8x32xf32>
    %556 = vector.broadcast %521 : vector<1x32xf32> to vector<8x32xf32>
    %557 = arith.addf %555, %556 : vector<8x32xf32>
    %558 = arith.mulf %552, %557 : vector<8x32xf32>
    %559 = arith.addf %554, %558 : vector<8x32xf32>
    %560 = math.tanh %559 : vector<8x32xf32>
    %cst_199 = arith.constant 1.000000e+00 : f32
    %561 = vector.broadcast %cst_199 : f32 to vector<8x32xf32>
    %562 = arith.subf %561, %553 : vector<8x32xf32>
    %563 = arith.mulf %562, %560 : vector<8x32xf32>
    %564 = arith.mulf %553, %539 : vector<8x32xf32>
    %565 = arith.addf %563, %564 : vector<8x32xf32>
    %c0_200 = arith.constant 0 : index
    %c16_201 = arith.constant 16 : index
    %c0_202 = arith.constant 0 : index
    %566 = vector.load %arg19[%c0_200, %c16_201, %c0_202] : memref<2x64x96xf32, #tpu.memory_space<vmem>>, vector<1x8x96xf32>
    %567 = vector.shape_cast %566 : vector<1x8x96xf32> to vector<8x96xf32>
    %568 = arith.truncf %565 : vector<8x32xf32> to vector<8x32xbf16>
    %cst_203 = arith.constant dense<0.000000e+00> : vector<8x96xf32>
    %569 = tpu.matmul %568, %520, %cst_203 {dimension_numbers = #tpu.dot_dimension_numbers<[1], [0], [0], [1], [0, 0, 1, 1], [], []>} : vector<8x32xbf16>, vector<32x96xbf16>, vector<8x96xf32> -> vector<8x96xf32>
    %570 = vector.extract_strided_slice %567 {offsets = [0, 0], sizes = [8, 64], strides = [1, 1]} : vector<8x96xf32> to vector<8x64xf32>
    %571 = vector.extract_strided_slice %569 {offsets = [0, 0], sizes = [8, 64], strides = [1, 1]} : vector<8x96xf32> to vector<8x64xf32>
    %572 = arith.addf %570, %571 : vector<8x64xf32>
    %573 = arith.negf %572 : vector<8x64xf32>
    %574 = math.exp %573 : vector<8x64xf32>
    %cst_204 = arith.constant 1.000000e+00 : f32
    %575 = vector.broadcast %cst_204 : f32 to vector<8x64xf32>
    %576 = arith.addf %575, %574 : vector<8x64xf32>
    %577 = arith.divf %575, %576 : vector<8x64xf32>
    %578 = vector.extract_strided_slice %577 {offsets = [0, 0], sizes = [8, 32], strides = [1, 1]} : vector<8x64xf32> to vector<8x32xf32>
    %579 = vector.extract_strided_slice %577 {offsets = [0, 32], sizes = [8, 32], strides = [1, 1]} : vector<8x64xf32> to vector<8x32xf32>
    %580 = vector.extract_strided_slice %567 {offsets = [0, 64], sizes = [8, 32], strides = [1, 1]} : vector<8x96xf32> to vector<8x32xf32>
    %581 = vector.extract_strided_slice %569 {offsets = [0, 64], sizes = [8, 32], strides = [1, 1]} : vector<8x96xf32> to vector<8x32xf32>
    %582 = vector.broadcast %521 : vector<1x32xf32> to vector<8x32xf32>
    %583 = arith.addf %581, %582 : vector<8x32xf32>
    %584 = arith.mulf %578, %583 : vector<8x32xf32>
    %585 = arith.addf %580, %584 : vector<8x32xf32>
    %586 = math.tanh %585 : vector<8x32xf32>
    %cst_205 = arith.constant 1.000000e+00 : f32
    %587 = vector.broadcast %cst_205 : f32 to vector<8x32xf32>
    %588 = arith.subf %587, %579 : vector<8x32xf32>
    %589 = arith.mulf %588, %586 : vector<8x32xf32>
    %590 = arith.mulf %579, %565 : vector<8x32xf32>
    %591 = arith.addf %589, %590 : vector<8x32xf32>
    %c0_206 = arith.constant 0 : index
    %c24_207 = arith.constant 24 : index
    %c0_208 = arith.constant 0 : index
    %592 = vector.load %arg19[%c0_206, %c24_207, %c0_208] : memref<2x64x96xf32, #tpu.memory_space<vmem>>, vector<1x8x96xf32>
    %593 = vector.shape_cast %592 : vector<1x8x96xf32> to vector<8x96xf32>
    %594 = arith.truncf %591 : vector<8x32xf32> to vector<8x32xbf16>
    %cst_209 = arith.constant dense<0.000000e+00> : vector<8x96xf32>
    %595 = tpu.matmul %594, %520, %cst_209 {dimension_numbers = #tpu.dot_dimension_numbers<[1], [0], [0], [1], [0, 0, 1, 1], [], []>} : vector<8x32xbf16>, vector<32x96xbf16>, vector<8x96xf32> -> vector<8x96xf32>
    %596 = vector.extract_strided_slice %593 {offsets = [0, 0], sizes = [8, 64], strides = [1, 1]} : vector<8x96xf32> to vector<8x64xf32>
    %597 = vector.extract_strided_slice %595 {offsets = [0, 0], sizes = [8, 64], strides = [1, 1]} : vector<8x96xf32> to vector<8x64xf32>
    %598 = arith.addf %596, %597 : vector<8x64xf32>
    %599 = arith.negf %598 : vector<8x64xf32>
    %600 = math.exp %599 : vector<8x64xf32>
    %cst_210 = arith.constant 1.000000e+00 : f32
    %601 = vector.broadcast %cst_210 : f32 to vector<8x64xf32>
    %602 = arith.addf %601, %600 : vector<8x64xf32>
    %603 = arith.divf %601, %602 : vector<8x64xf32>
    %604 = vector.extract_strided_slice %603 {offsets = [0, 0], sizes = [8, 32], strides = [1, 1]} : vector<8x64xf32> to vector<8x32xf32>
    %605 = vector.extract_strided_slice %603 {offsets = [0, 32], sizes = [8, 32], strides = [1, 1]} : vector<8x64xf32> to vector<8x32xf32>
    %606 = vector.extract_strided_slice %593 {offsets = [0, 64], sizes = [8, 32], strides = [1, 1]} : vector<8x96xf32> to vector<8x32xf32>
    %607 = vector.extract_strided_slice %595 {offsets = [0, 64], sizes = [8, 32], strides = [1, 1]} : vector<8x96xf32> to vector<8x32xf32>
    %608 = vector.broadcast %521 : vector<1x32xf32> to vector<8x32xf32>
    %609 = arith.addf %607, %608 : vector<8x32xf32>
    %610 = arith.mulf %604, %609 : vector<8x32xf32>
    %611 = arith.addf %606, %610 : vector<8x32xf32>
    %612 = math.tanh %611 : vector<8x32xf32>
    %cst_211 = arith.constant 1.000000e+00 : f32
    %613 = vector.broadcast %cst_211 : f32 to vector<8x32xf32>
    %614 = arith.subf %613, %605 : vector<8x32xf32>
    %615 = arith.mulf %614, %612 : vector<8x32xf32>
    %616 = arith.mulf %605, %591 : vector<8x32xf32>
    %617 = arith.addf %615, %616 : vector<8x32xf32>
    %c0_212 = arith.constant 0 : index
    %c32_213 = arith.constant 32 : index
    %c0_214 = arith.constant 0 : index
    %618 = vector.load %arg19[%c0_212, %c32_213, %c0_214] : memref<2x64x96xf32, #tpu.memory_space<vmem>>, vector<1x8x96xf32>
    %619 = vector.shape_cast %618 : vector<1x8x96xf32> to vector<8x96xf32>
    %620 = arith.truncf %617 : vector<8x32xf32> to vector<8x32xbf16>
    %cst_215 = arith.constant dense<0.000000e+00> : vector<8x96xf32>
    %621 = tpu.matmul %620, %520, %cst_215 {dimension_numbers = #tpu.dot_dimension_numbers<[1], [0], [0], [1], [0, 0, 1, 1], [], []>} : vector<8x32xbf16>, vector<32x96xbf16>, vector<8x96xf32> -> vector<8x96xf32>
    %622 = vector.extract_strided_slice %619 {offsets = [0, 0], sizes = [8, 64], strides = [1, 1]} : vector<8x96xf32> to vector<8x64xf32>
    %623 = vector.extract_strided_slice %621 {offsets = [0, 0], sizes = [8, 64], strides = [1, 1]} : vector<8x96xf32> to vector<8x64xf32>
    %624 = arith.addf %622, %623 : vector<8x64xf32>
    %625 = arith.negf %624 : vector<8x64xf32>
    %626 = math.exp %625 : vector<8x64xf32>
    %cst_216 = arith.constant 1.000000e+00 : f32
    %627 = vector.broadcast %cst_216 : f32 to vector<8x64xf32>
    %628 = arith.addf %627, %626 : vector<8x64xf32>
    %629 = arith.divf %627, %628 : vector<8x64xf32>
    %630 = vector.extract_strided_slice %629 {offsets = [0, 0], sizes = [8, 32], strides = [1, 1]} : vector<8x64xf32> to vector<8x32xf32>
    %631 = vector.extract_strided_slice %629 {offsets = [0, 32], sizes = [8, 32], strides = [1, 1]} : vector<8x64xf32> to vector<8x32xf32>
    %632 = vector.extract_strided_slice %619 {offsets = [0, 64], sizes = [8, 32], strides = [1, 1]} : vector<8x96xf32> to vector<8x32xf32>
    %633 = vector.extract_strided_slice %621 {offsets = [0, 64], sizes = [8, 32], strides = [1, 1]} : vector<8x96xf32> to vector<8x32xf32>
    %634 = vector.broadcast %521 : vector<1x32xf32> to vector<8x32xf32>
    %635 = arith.addf %633, %634 : vector<8x32xf32>
    %636 = arith.mulf %630, %635 : vector<8x32xf32>
    %637 = arith.addf %632, %636 : vector<8x32xf32>
    %638 = math.tanh %637 : vector<8x32xf32>
    %cst_217 = arith.constant 1.000000e+00 : f32
    %639 = vector.broadcast %cst_217 : f32 to vector<8x32xf32>
    %640 = arith.subf %639, %631 : vector<8x32xf32>
    %641 = arith.mulf %640, %638 : vector<8x32xf32>
    %642 = arith.mulf %631, %617 : vector<8x32xf32>
    %643 = arith.addf %641, %642 : vector<8x32xf32>
    %c0_218 = arith.constant 0 : index
    %c40_219 = arith.constant 40 : index
    %c0_220 = arith.constant 0 : index
    %644 = vector.load %arg19[%c0_218, %c40_219, %c0_220] : memref<2x64x96xf32, #tpu.memory_space<vmem>>, vector<1x8x96xf32>
    %645 = vector.shape_cast %644 : vector<1x8x96xf32> to vector<8x96xf32>
    %646 = arith.truncf %643 : vector<8x32xf32> to vector<8x32xbf16>
    %cst_221 = arith.constant dense<0.000000e+00> : vector<8x96xf32>
    %647 = tpu.matmul %646, %520, %cst_221 {dimension_numbers = #tpu.dot_dimension_numbers<[1], [0], [0], [1], [0, 0, 1, 1], [], []>} : vector<8x32xbf16>, vector<32x96xbf16>, vector<8x96xf32> -> vector<8x96xf32>
    %648 = vector.extract_strided_slice %645 {offsets = [0, 0], sizes = [8, 64], strides = [1, 1]} : vector<8x96xf32> to vector<8x64xf32>
    %649 = vector.extract_strided_slice %647 {offsets = [0, 0], sizes = [8, 64], strides = [1, 1]} : vector<8x96xf32> to vector<8x64xf32>
    %650 = arith.addf %648, %649 : vector<8x64xf32>
    %651 = arith.negf %650 : vector<8x64xf32>
    %652 = math.exp %651 : vector<8x64xf32>
    %cst_222 = arith.constant 1.000000e+00 : f32
    %653 = vector.broadcast %cst_222 : f32 to vector<8x64xf32>
    %654 = arith.addf %653, %652 : vector<8x64xf32>
    %655 = arith.divf %653, %654 : vector<8x64xf32>
    %656 = vector.extract_strided_slice %655 {offsets = [0, 0], sizes = [8, 32], strides = [1, 1]} : vector<8x64xf32> to vector<8x32xf32>
    %657 = vector.extract_strided_slice %655 {offsets = [0, 32], sizes = [8, 32], strides = [1, 1]} : vector<8x64xf32> to vector<8x32xf32>
    %658 = vector.extract_strided_slice %645 {offsets = [0, 64], sizes = [8, 32], strides = [1, 1]} : vector<8x96xf32> to vector<8x32xf32>
    %659 = vector.extract_strided_slice %647 {offsets = [0, 64], sizes = [8, 32], strides = [1, 1]} : vector<8x96xf32> to vector<8x32xf32>
    %660 = vector.broadcast %521 : vector<1x32xf32> to vector<8x32xf32>
    %661 = arith.addf %659, %660 : vector<8x32xf32>
    %662 = arith.mulf %656, %661 : vector<8x32xf32>
    %663 = arith.addf %658, %662 : vector<8x32xf32>
    %664 = math.tanh %663 : vector<8x32xf32>
    %cst_223 = arith.constant 1.000000e+00 : f32
    %665 = vector.broadcast %cst_223 : f32 to vector<8x32xf32>
    %666 = arith.subf %665, %657 : vector<8x32xf32>
    %667 = arith.mulf %666, %664 : vector<8x32xf32>
    %668 = arith.mulf %657, %643 : vector<8x32xf32>
    %669 = arith.addf %667, %668 : vector<8x32xf32>
    %c0_224 = arith.constant 0 : index
    %c48_225 = arith.constant 48 : index
    %c0_226 = arith.constant 0 : index
    %670 = vector.load %arg19[%c0_224, %c48_225, %c0_226] : memref<2x64x96xf32, #tpu.memory_space<vmem>>, vector<1x8x96xf32>
    %671 = vector.shape_cast %670 : vector<1x8x96xf32> to vector<8x96xf32>
    %672 = arith.truncf %669 : vector<8x32xf32> to vector<8x32xbf16>
    %cst_227 = arith.constant dense<0.000000e+00> : vector<8x96xf32>
    %673 = tpu.matmul %672, %520, %cst_227 {dimension_numbers = #tpu.dot_dimension_numbers<[1], [0], [0], [1], [0, 0, 1, 1], [], []>} : vector<8x32xbf16>, vector<32x96xbf16>, vector<8x96xf32> -> vector<8x96xf32>
    %674 = vector.extract_strided_slice %671 {offsets = [0, 0], sizes = [8, 64], strides = [1, 1]} : vector<8x96xf32> to vector<8x64xf32>
    %675 = vector.extract_strided_slice %673 {offsets = [0, 0], sizes = [8, 64], strides = [1, 1]} : vector<8x96xf32> to vector<8x64xf32>
    %676 = arith.addf %674, %675 : vector<8x64xf32>
    %677 = arith.negf %676 : vector<8x64xf32>
    %678 = math.exp %677 : vector<8x64xf32>
    %cst_228 = arith.constant 1.000000e+00 : f32
    %679 = vector.broadcast %cst_228 : f32 to vector<8x64xf32>
    %680 = arith.addf %679, %678 : vector<8x64xf32>
    %681 = arith.divf %679, %680 : vector<8x64xf32>
    %682 = vector.extract_strided_slice %681 {offsets = [0, 0], sizes = [8, 32], strides = [1, 1]} : vector<8x64xf32> to vector<8x32xf32>
    %683 = vector.extract_strided_slice %681 {offsets = [0, 32], sizes = [8, 32], strides = [1, 1]} : vector<8x64xf32> to vector<8x32xf32>
    %684 = vector.extract_strided_slice %671 {offsets = [0, 64], sizes = [8, 32], strides = [1, 1]} : vector<8x96xf32> to vector<8x32xf32>
    %685 = vector.extract_strided_slice %673 {offsets = [0, 64], sizes = [8, 32], strides = [1, 1]} : vector<8x96xf32> to vector<8x32xf32>
    %686 = vector.broadcast %521 : vector<1x32xf32> to vector<8x32xf32>
    %687 = arith.addf %685, %686 : vector<8x32xf32>
    %688 = arith.mulf %682, %687 : vector<8x32xf32>
    %689 = arith.addf %684, %688 : vector<8x32xf32>
    %690 = math.tanh %689 : vector<8x32xf32>
    %cst_229 = arith.constant 1.000000e+00 : f32
    %691 = vector.broadcast %cst_229 : f32 to vector<8x32xf32>
    %692 = arith.subf %691, %683 : vector<8x32xf32>
    %693 = arith.mulf %692, %690 : vector<8x32xf32>
    %694 = arith.mulf %683, %669 : vector<8x32xf32>
    %695 = arith.addf %693, %694 : vector<8x32xf32>
    %c0_230 = arith.constant 0 : index
    %c56_231 = arith.constant 56 : index
    %c0_232 = arith.constant 0 : index
    %696 = vector.load %arg19[%c0_230, %c56_231, %c0_232] : memref<2x64x96xf32, #tpu.memory_space<vmem>>, vector<1x8x96xf32>
    %697 = vector.shape_cast %696 : vector<1x8x96xf32> to vector<8x96xf32>
    %698 = arith.truncf %695 : vector<8x32xf32> to vector<8x32xbf16>
    %cst_233 = arith.constant dense<0.000000e+00> : vector<8x96xf32>
    %699 = tpu.matmul %698, %520, %cst_233 {dimension_numbers = #tpu.dot_dimension_numbers<[1], [0], [0], [1], [0, 0, 1, 1], [], []>} : vector<8x32xbf16>, vector<32x96xbf16>, vector<8x96xf32> -> vector<8x96xf32>
    %700 = vector.extract_strided_slice %697 {offsets = [0, 0], sizes = [8, 64], strides = [1, 1]} : vector<8x96xf32> to vector<8x64xf32>
    %701 = vector.extract_strided_slice %699 {offsets = [0, 0], sizes = [8, 64], strides = [1, 1]} : vector<8x96xf32> to vector<8x64xf32>
    %702 = arith.addf %700, %701 : vector<8x64xf32>
    %703 = arith.negf %702 : vector<8x64xf32>
    %704 = math.exp %703 : vector<8x64xf32>
    %cst_234 = arith.constant 1.000000e+00 : f32
    %705 = vector.broadcast %cst_234 : f32 to vector<8x64xf32>
    %706 = arith.addf %705, %704 : vector<8x64xf32>
    %707 = arith.divf %705, %706 : vector<8x64xf32>
    %708 = vector.extract_strided_slice %707 {offsets = [0, 0], sizes = [8, 32], strides = [1, 1]} : vector<8x64xf32> to vector<8x32xf32>
    %709 = vector.extract_strided_slice %707 {offsets = [0, 32], sizes = [8, 32], strides = [1, 1]} : vector<8x64xf32> to vector<8x32xf32>
    %710 = vector.extract_strided_slice %697 {offsets = [0, 64], sizes = [8, 32], strides = [1, 1]} : vector<8x96xf32> to vector<8x32xf32>
    %711 = vector.extract_strided_slice %699 {offsets = [0, 64], sizes = [8, 32], strides = [1, 1]} : vector<8x96xf32> to vector<8x32xf32>
    %712 = vector.broadcast %521 : vector<1x32xf32> to vector<8x32xf32>
    %713 = arith.addf %711, %712 : vector<8x32xf32>
    %714 = arith.mulf %708, %713 : vector<8x32xf32>
    %715 = arith.addf %710, %714 : vector<8x32xf32>
    %716 = math.tanh %715 : vector<8x32xf32>
    %cst_235 = arith.constant 1.000000e+00 : f32
    %717 = vector.broadcast %cst_235 : f32 to vector<8x32xf32>
    %718 = arith.subf %717, %709 : vector<8x32xf32>
    %719 = arith.mulf %718, %716 : vector<8x32xf32>
    %720 = arith.mulf %709, %695 : vector<8x32xf32>
    %721 = arith.addf %719, %720 : vector<8x32xf32>
    %cst_236 = arith.constant 0.000000e+00 : f32
    %722 = vector.broadcast %cst_236 : f32 to vector<8x32xf32>
    %723 = arith.maximumf %721, %722 : vector<8x32xf32>
    %724 = arith.truncf %723 : vector<8x32xf32> to vector<8x32xbf16>
    %cst_237 = arith.constant 0.000000e+00 : f32
    %725 = vector.broadcast %cst_237 : f32 to vector<8x32xf32>
    %726 = arith.maximumf %519, %725 : vector<8x32xf32>
    %727 = arith.truncf %726 : vector<8x32xf32> to vector<8x32xbf16>
    %c0_238 = arith.constant 0 : index
    %c0_239 = arith.constant 0 : index
    %c0_240 = arith.constant 0 : index
    %728 = vector.load %arg16[%c0_238, %c0_239, %c0_240] : memref<2x32x8xbf16, #tpu.memory_space<vmem>>, vector<2x32x8xbf16>
    %729 = vector.extract_strided_slice %0 {offsets = [0, 0], sizes = [8, 8], strides = [1, 1]} : vector<64x8xf32> to vector<8x8xf32>
    %730 = vector.extract_strided_slice %728 {offsets = [0, 0, 0], sizes = [1, 32, 8], strides = [1, 1, 1]} : vector<2x32x8xbf16> to vector<1x32x8xbf16>
    %731 = vector.shape_cast %730 : vector<1x32x8xbf16> to vector<32x8xbf16>
    %cst_241 = arith.constant dense<0.000000e+00> : vector<8x8xf32>
    %732 = tpu.matmul %724, %731, %cst_241 {dimension_numbers = #tpu.dot_dimension_numbers<[1], [0], [0], [1], [0, 0, 1, 1], [], []>} : vector<8x32xbf16>, vector<32x8xbf16>, vector<8x8xf32> -> vector<8x8xf32>
    %733 = arith.addf %729, %732 : vector<8x8xf32>
    %734 = vector.extract_strided_slice %728 {offsets = [1, 0, 0], sizes = [1, 32, 8], strides = [1, 1, 1]} : vector<2x32x8xbf16> to vector<1x32x8xbf16>
    %735 = vector.shape_cast %734 : vector<1x32x8xbf16> to vector<32x8xbf16>
    %cst_242 = arith.constant dense<0.000000e+00> : vector<8x8xf32>
    %736 = tpu.matmul %727, %735, %cst_242 {dimension_numbers = #tpu.dot_dimension_numbers<[1], [0], [0], [1], [0, 0, 1, 1], [], []>} : vector<8x32xbf16>, vector<32x8xbf16>, vector<8x8xf32> -> vector<8x8xf32>
    %737 = arith.addf %733, %736 : vector<8x8xf32>
    %c0_243 = arith.constant 0 : index
    %c0_244 = arith.constant 0 : index
    %738 = vector.load %arg17[%c0_243, %c0_244] : memref<1x8xf32, #tpu.memory_space<vmem>>, vector<1x8xf32>
    %739 = vector.broadcast %738 : vector<1x8xf32> to vector<8x8xf32>
    %740 = arith.addf %737, %739 : vector<8x8xf32>
    %c0_245 = arith.constant 0 : index
    %c0_246 = arith.constant 0 : index
    %741 = vector.load %arg18[%c0_245, %c0_246] : memref<8x8xf32, #tpu.memory_space<vmem>>, vector<8x8xf32>
    tpu.vector_store %arg18[%c0_245, %c0_246], %740 {strides = array<i32>} : memref<8x8xf32, #tpu.memory_space<vmem>>, vector<8x8xf32>,
    return
  }
}

</mosaic_0001>

<llo_original>
// kernel: stacked_gru_forward.1
$region0: #{stacked_gru_forward.1}
  #allocation0 [shape = 'u32[]', space=smem, size = 0x4, offset = 0x4, fixed_abs, tag = 'smem constant byte address 0x4 - core index']
  #allocation1 [shape = 'u32[144,128]{1,0:T(1,128)}', space=vmem, size = 0x12000, scoped, tag = 'internal scratch']
  #allocation2 [shape = 'f32[2,64,96]{2,1,0:T(8,128)}', space=vmem, size = 0x10000, scoped, tag = 'scratch operand']
  #allocation3 [shape = 'f32[2,64,32]{2,1,0:T(8,128)}', space=vmem, size = 0x10000, scoped, tag = 'scratch operand']
  %s0 = inlined_call_operand.vmem [shape: f32[64,8], index: 0, kind: input, shape index: {}]
  %s1 = inlined_call_operand.vmem [shape: bf16[8,96], index: 1, kind: input, shape index: {}]
  %s2 = inlined_call_operand.vmem [shape: f32[1,96], index: 2, kind: input, shape index: {}]
  %s3 = inlined_call_operand.vmem [shape: bf16[32,96], index: 3, kind: input, shape index: {}]
  %s4 = inlined_call_operand.vmem [shape: f32[1,32], index: 4, kind: input, shape index: {}]
  %s5 = inlined_call_operand.vmem [shape: bf16[8,96], index: 5, kind: input, shape index: {}]
  %s6 = inlined_call_operand.vmem [shape: f32[1,96], index: 6, kind: input, shape index: {}]
  %s7 = inlined_call_operand.vmem [shape: bf16[32,96], index: 7, kind: input, shape index: {}]
  %s8 = inlined_call_operand.vmem [shape: f32[1,32], index: 8, kind: input, shape index: {}]
  %s9 = inlined_call_operand.vmem [shape: bf16[2,32,96], index: 9, kind: input, shape index: {}]
  %s10 = inlined_call_operand.vmem [shape: f32[1,96], index: 10, kind: input, shape index: {}]
  %s11 = inlined_call_operand.vmem [shape: bf16[32,96], index: 11, kind: input, shape index: {}]
  %s12 = inlined_call_operand.vmem [shape: f32[1,32], index: 12, kind: input, shape index: {}]
  %s13 = inlined_call_operand.vmem [shape: bf16[2,32,96], index: 13, kind: input, shape index: {}]
  %s14 = inlined_call_operand.vmem [shape: f32[1,96], index: 14, kind: input, shape index: {}]
  %s15 = inlined_call_operand.vmem [shape: f32[1,32], index: 15, kind: input, shape index: {}]
  %s16 = inlined_call_operand.vmem [shape: bf16[2,32,8], index: 16, kind: input, shape index: {}]
  %s17 = inlined_call_operand.vmem [shape: f32[1,8], index: 17, kind: input, shape index: {}]
  %s18 = inlined_call_operand.vmem [shape: f32[8,8], index: 18, kind: output, shape index: {}]
  %s19 = sld [smem:[#allocation0]]
  $region82: #{stacked_gru_forward.1} parent=0
    _
  %s21 = ssub.s32 1, %s19
  %s22 = scalar_select 0, %s21, %s19
  // Predicated region
  $region2: #{stacked_gru_forward.1} parent=0 // pred_check
    _
  $region3: #{stacked_gru_forward.1} parent=0 // pred_check_branch
    %24 = sbr.rel (0) target = $region5
  $region4: #{stacked_gru_forward.1} parent=0 // pred_region
    _
  $region5: #{stacked_gru_forward.1} parent=0 // pred_fallthru
    _
  // Predicated region
  $region6: #{stacked_gru_forward.1} parent=0 // pred_check
    _
  $region7: #{stacked_gru_forward.1} parent=0 // pred_check_branch
    %26 = sbr.rel (0) target = $region9
  $region8: #{stacked_gru_forward.1} parent=0 // pred_region
    _
  $region9: #{stacked_gru_forward.1} parent=0 // pred_fallthru
    _
  // Predicated region
  $region10: #{stacked_gru_forward.1} parent=0 // pred_check
    _
  $region11: #{stacked_gru_forward.1} parent=0 // pred_check_branch
    %28 = sbr.rel (0) target = $region13
  $region12: #{stacked_gru_forward.1} parent=0 // pred_region
    _
  $region13: #{stacked_gru_forward.1} parent=0 // pred_fallthru
    _
  // Predicated region
  $region14: #{stacked_gru_forward.1} parent=0 // pred_check
    _
  $region15: #{stacked_gru_forward.1} parent=0 // pred_check_branch
    %30 = sbr.rel (0) target = $region17
  $region16: #{stacked_gru_forward.1} parent=0 // pred_region
    _
  $region17: #{stacked_gru_forward.1} parent=0 // pred_fallthru
    _
  // Predicated region
  $region18: #{stacked_gru_forward.1} parent=0 // pred_check
    _
  $region19: #{stacked_gru_forward.1} parent=0 // pred_check_branch
    %32 = sbr.rel (0) target = $region21
  $region20: #{stacked_gru_forward.1} parent=0 // pred_region
    _
  $region21: #{stacked_gru_forward.1} parent=0 // pred_fallthru
    _
  // Predicated region
  $region22: #{stacked_gru_forward.1} parent=0 // pred_check
    _
  $region23: #{stacked_gru_forward.1} parent=0 // pred_check_branch
    %34 = sbr.rel (0) target = $region25
  $region24: #{stacked_gru_forward.1} parent=0 // pred_region
    _
  $region25: #{stacked_gru_forward.1} parent=0 // pred_fallthru
    _
  // Predicated region
  $region26: #{stacked_gru_forward.1} parent=0 // pred_check
    _
  $region27: #{stacked_gru_forward.1} parent=0 // pred_check_branch
    %36 = sbr.rel (0) target = $region29
  $region28: #{stacked_gru_forward.1} parent=0 // pred_region
    _
  $region29: #{stacked_gru_forward.1} parent=0 // pred_fallthru
    _
  // Predicated region
  $region30: #{stacked_gru_forward.1} parent=0 // pred_check
    _
  $region31: #{stacked_gru_forward.1} parent=0 // pred_check_branch
    %38 = sbr.rel (0) target = $region33
  $region32: #{stacked_gru_forward.1} parent=0 // pred_region
    _
  $region33: #{stacked_gru_forward.1} parent=0 // pred_fallthru
    _
  // Predicated region
  $region34: #{stacked_gru_forward.1} parent=0 // pred_check
    _
  $region35: #{stacked_gru_forward.1} parent=0 // pred_check_branch
    %40 = sbr.rel (0) target = $region37
  $region36: #{stacked_gru_forward.1} parent=0 // pred_region
    _
  $region37: #{stacked_gru_forward.1} parent=0 // pred_fallthru
    _
  // Predicated region
  $region38: #{stacked_gru_forward.1} parent=0 // pred_check
    _
  $region39: #{stacked_gru_forward.1} parent=0 // pred_check_branch
    %42 = sbr.rel (0) target = $region41
  $region40: #{stacked_gru_forward.1} parent=0 // pred_region
    _
  $region41: #{stacked_gru_forward.1} parent=0 // pred_fallthru
    _
  // Predicated region
  $region42: #{stacked_gru_forward.1} parent=0 // pred_check
    _
  $region43: #{stacked_gru_forward.1} parent=0 // pred_check_branch
    %44 = sbr.rel (0) target = $region45
  $region44: #{stacked_gru_forward.1} parent=0 // pred_region
    _
  $region45: #{stacked_gru_forward.1} parent=0 // pred_fallthru
    _
  // Predicated region
  $region46: #{stacked_gru_forward.1} parent=0 // pred_check
    _
  $region47: #{stacked_gru_forward.1} parent=0 // pred_check_branch
    %46 = sbr.rel (0) target = $region49
  $region48: #{stacked_gru_forward.1} parent=0 // pred_region
    _
  $region49: #{stacked_gru_forward.1} parent=0 // pred_fallthru
    _
  // Predicated region
  $region50: #{stacked_gru_forward.1} parent=0 // pred_check
    _
  $region51: #{stacked_gru_forward.1} parent=0 // pred_check_branch
    %48 = sbr.rel (0) target = $region53
  $region52: #{stacked_gru_forward.1} parent=0 // pred_region
    _
  $region53: #{stacked_gru_forward.1} parent=0 // pred_fallthru
    _
  // Predicated region
  $region54: #{stacked_gru_forward.1} parent=0 // pred_check
    _
  $region55: #{stacked_gru_forward.1} parent=0 // pred_check_branch
    %50 = sbr.rel (0) target = $region57
  $region56: #{stacked_gru_forward.1} parent=0 // pred_region
    _
  $region57: #{stacked_gru_forward.1} parent=0 // pred_fallthru
    _
  // Predicated region
  $region58: #{stacked_gru_forward.1} parent=0 // pred_check
    _
  $region59: #{stacked_gru_forward.1} parent=0 // pred_check_branch
    %52 = sbr.rel (0) target = $region61
  $region60: #{stacked_gru_forward.1} parent=0 // pred_region
    _
  $region61: #{stacked_gru_forward.1} parent=0 // pred_fallthru
    _
  // Predicated region
  $region62: #{stacked_gru_forward.1} parent=0 // pred_check
    _
  $region63: #{stacked_gru_forward.1} parent=0 // pred_check_branch
    %54 = sbr.rel (0) target = $region65
  $region64: #{stacked_gru_forward.1} parent=0 // pred_region
    _
  $region65: #{stacked_gru_forward.1} parent=0 // pred_fallthru
    _
  // Predicated region
  $region66: #{stacked_gru_forward.1} parent=0 // pred_check
    _
  $region67: #{stacked_gru_forward.1} parent=0 // pred_check_branch
    %56 = sbr.rel (0) target = $region69
  $region68: #{stacked_gru_forward.1} parent=0 // pred_region
    _
  $region69: #{stacked_gru_forward.1} parent=0 // pred_fallthru
    _
  // Predicated region
  $region70: #{stacked_gru_forward.1} parent=0 // pred_check
    _
  $region71: #{stacked_gru_forward.1} parent=0 // pred_check_branch
    %58 = sbr.rel (0) target = $region73
  $region72: #{stacked_gru_forward.1} parent=0 // pred_region
    _
  $region73: #{stacked_gru_forward.1} parent=0 // pred_fallthru
    _
  %v60 = vld [vmem:[%s0] sm:$0xff]
  %v61 = vld [vmem:[%s0 + $0x8] sm:$0xff]
  %v62 = vld [vmem:[%s0 + $0x10] sm:$0xff]
  %v63 = vld [vmem:[%s0 + $0x18] sm:$0xff]
  %v64 = vld [vmem:[%s0 + $0x20] sm:$0xff]
  %v65 = vld [vmem:[%s0 + $0x28] sm:$0xff]
  %v66 = vld [vmem:[%s0 + $0x30] sm:$0xff]
  %v67 = vld [vmem:[%s0 + $0x38] sm:$0xff]
  %v68 = vpack.c.bf16 %v61, %v60
  %v69 = vpack.c.bf16 %v63, %v62
  %v70 = vpack.c.bf16 %v65, %v64
  %v71 = vpack.c.bf16 %v67, %v66
  %v72 = vld [vmem:[%s1] sm:$0xf]
  %v73 = vld [vmem:[%s2] sm:$0x1]
  %v75 = vlaneseq
  %v76 = vshrl.u32 %v75, 7
  %v77 = vsub.s32 0, %v76
  %v78 = vrot.slane %v73, %v77
  %vm80 = vcmask 64512
  %v82 = vsel %vm80, %v68, 0
  %v85 = vsel %vm80, %v69, 0
  %v88 = vsel %vm80, %v70, 0
  %v91 = vsel %vm80, %v71, 0
  %vm93 = vcmask 1043456
  %v95 = vsel %vm93, %v72, 0
  %97 = vmatprep.subr.bf16.mxu0 0
  %98 = vmatpush1.bf16.msra.mxu0 0
  %99 = vmatprep.subr.bf16.mxu0 0
  %100 = vmatpush1.bf16.msra.mxu0 0
  %101 = vmatprep.subr.bf16.mxu0 0
  %102 = vmatpush1.bf16.msra.mxu0 0
  %103 = vmatprep.subr.bf16.mxu0 0
  %104 = vmatpush1.bf16.msra.mxu0 0
  %105 = vmatprep.subr.bf16.mxu0 0
  %106 = vmatpush1.bf16.msra.mxu0 0
  %107 = vmatprep.subr.bf16.mxu0 0
  %108 = vmatpush1.bf16.msra.mxu0 0
  %109 = vmatprep.subr.bf16.mxu0 0
  %110 = vmatpush1.bf16.msra.mxu0 0
  %111 = vmatprep.subr.bf16.mxu0 0
  %112 = vmatpush1.bf16.msra.mxu0 %v95
  %113 = vmatprep.subr.bf16.mxu0 0
  %114 = vmatpush2.bf16.msra.mxu0 0
  %115 = vmatprep.subr.bf16.mxu0 0
  %116 = vmatpush2.bf16.msra.mxu0 0
  %117 = vmatprep.subr.bf16.mxu0 0
  %118 = vmatpush2.bf16.msra.mxu0 0
  %119 = vmatprep.subr.bf16.mxu0 0
  %120 = vmatpush2.bf16.msra.mxu0 0
  %121 = vmatprep.subr.bf16.mxu0 0
  %122 = vmatpush2.bf16.msra.mxu0 0
  %123 = vmatprep.subr.bf16.mxu0 0
  %124 = vmatpush2.bf16.msra.mxu0 0
  %125 = vmatprep.subr.bf16.mxu0 0
  %126 = vmatpush2.bf16.msra.mxu0 0
  %127 = vmatprep.subr.bf16.mxu0 0
  %128 = vmatpush2.bf16.msra.mxu0 0
  %129 = vmatprep.mubr.bf16.mxu0 0
  %130 = vmatmul.mubr.bf16.gmra.mxu0 %v82
  %v131 = vpop.f32.mrf.mxu0
  %v132 = vadd.f32 %v78, %v131
  %v133 = vpop.f32.mrf.mxu0
  %v134 = vpop.f32.mrf.mxu0
  %v135 = vadd.f32 %v78, %v134
  %v136 = vpop.f32.mrf.mxu0
  %137 = vmatprep.mubr.bf16.mxu0 0
  %138 = vmatmul.mubr.bf16.gmra.mxu0 %v85
  %v139 = vpop.f32.mrf.mxu0
  %v140 = vadd.f32 %v78, %v139
  %v141 = vpop.f32.mrf.mxu0
  %v142 = vpop.f32.mrf.mxu0
  %v143 = vadd.f32 %v78, %v142
  %v144 = vpop.f32.mrf.mxu0
  %145 = vmatprep.mubr.bf16.mxu0 0
  %146 = vmatmul.mubr.bf16.gmra.mxu0 %v88
  %v147 = vpop.f32.mrf.mxu0
  %v148 = vadd.f32 %v78, %v147
  %v149 = vpop.f32.mrf.mxu0
  %v150 = vpop.f32.mrf.mxu0
  %v151 = vadd.f32 %v78, %v150
  %v152 = vpop.f32.mrf.mxu0
  %153 = vmatprep.mubr.bf16.mxu0 0
  %154 = vmatmul.mubr.bf16.gmra.mxu0 %v91
  %v155 = vpop.f32.mrf.mxu0
  %v156 = vadd.f32 %v78, %v155
  %v157 = vpop.f32.mrf.mxu0
  %v158 = vpop.f32.mrf.mxu0
  %v159 = vadd.f32 %v78, %v158
  %v160 = vpop.f32.mrf.mxu0
  %161 = vdwg.mxu0
  %vm162 = vcmask 785408
  %163 = vst.msk [vmem:[#allocation2] sm:$0xff] %vm162, %v132
  %164 = vst.msk [vmem:[#allocation2 + $0x8] sm:$0xff] %vm162, %v135
  %165 = vst.msk [vmem:[#allocation2 + $0x10] sm:$0xff] %vm162, %v140
  %166 = vst.msk [vmem:[#allocation2 + $0x18] sm:$0xff] %vm162, %v143
  %167 = vst.msk [vmem:[#allocation2 + $0x20] sm:$0xff] %vm162, %v148
  %168 = vst.msk [vmem:[#allocation2 + $0x28] sm:$0xff] %vm162, %v151
  %169 = vst.msk [vmem:[#allocation2 + $0x30] sm:$0xff] %vm162, %v156
  %170 = vst.msk [vmem:[#allocation2 + $0x38] sm:$0xff] %vm162, %v159
  %v171 = vld [vmem:[%s5] sm:$0xf]
  %v172 = vld [vmem:[%s6] sm:$0x1]
  %v174 = vlaneseq
  %v175 = vshrl.u32 %v174, 7
  %v176 = vsub.s32 0, %v175
  %v177 = vrot.slane %v172, %v176
  %v180 = vsel %vm93, %v171, 0
  %182 = vmatprep.subr.bf16.mxu0 0
  %183 = vmatpush1.bf16.msra.mxu0 0
  %184 = vmatprep.subr.bf16.mxu0 0
  %185 = vmatpush1.bf16.msra.mxu0 0
  %186 = vmatprep.subr.bf16.mxu0 0
  %187 = vmatpush1.bf16.msra.mxu0 0
  %188 = vmatprep.subr.bf16.mxu0 0
  %189 = vmatpush1.bf16.msra.mxu0 0
  %190 = vmatprep.subr.bf16.mxu0 0
  %191 = vmatpush1.bf16.msra.mxu0 0
  %192 = vmatprep.subr.bf16.mxu0 0
  %193 = vmatpush1.bf16.msra.mxu0 0
  %194 = vmatprep.subr.bf16.mxu0 0
  %195 = vmatpush1.bf16.msra.mxu0 0
  %196 = vmatprep.subr.bf16.mxu0 0
  %197 = vmatpush1.bf16.msra.mxu0 %v180
  %198 = vmatprep.subr.bf16.mxu0 0
  %199 = vmatpush2.bf16.msra.mxu0 0
  %200 = vmatprep.subr.bf16.mxu0 0
  %201 = vmatpush2.bf16.msra.mxu0 0
  %202 = vmatprep.subr.bf16.mxu0 0
  %203 = vmatpush2.bf16.msra.mxu0 0
  %204 = vmatprep.subr.bf16.mxu0 0
  %205 = vmatpush2.bf16.msra.mxu0 0
  %206 = vmatprep.subr.bf16.mxu0 0
  %207 = vmatpush2.bf16.msra.mxu0 0
  %208 = vmatprep.subr.bf16.mxu0 0
  %209 = vmatpush2.bf16.msra.mxu0 0
  %210 = vmatprep.subr.bf16.mxu0 0
  %211 = vmatpush2.bf16.msra.mxu0 0
  %212 = vmatprep.subr.bf16.mxu0 0
  %213 = vmatpush2.bf16.msra.mxu0 0
  %214 = vmatprep.mubr.bf16.mxu0 0
  %215 = vmatmul.mubr.bf16.gmra.mxu0 %v82
  %v216 = vpop.f32.mrf.mxu0
  %v217 = vadd.f32 %v177, %v216
  %v218 = vpop.f32.mrf.mxu0
  %v219 = vpop.f32.mrf.mxu0
  %v220 = vadd.f32 %v177, %v219
  %v221 = vpop.f32.mrf.mxu0
  %222 = vmatprep.mubr.bf16.mxu0 0
  %223 = vmatmul.mubr.bf16.gmra.mxu0 %v85
  %v224 = vpop.f32.mrf.mxu0
  %v225 = vadd.f32 %v177, %v224
  %v226 = vpop.f32.mrf.mxu0
  %v227 = vpop.f32.mrf.mxu0
  %v228 = vadd.f32 %v177, %v227
  %v229 = vpop.f32.mrf.mxu0
  %230 = vmatprep.mubr.bf16.mxu0 0
  %231 = vmatmul.mubr.bf16.gmra.mxu0 %v88
  %v232 = vpop.f32.mrf.mxu0
  %v233 = vadd.f32 %v177, %v232
  %v234 = vpop.f32.mrf.mxu0
  %v235 = vpop.f32.mrf.mxu0
  %v236 = vadd.f32 %v177, %v235
  %v237 = vpop.f32.mrf.mxu0
  %238 = vmatprep.mubr.bf16.mxu0 0
  %239 = vmatmul.mubr.bf16.gmra.mxu0 %v91
  %v240 = vpop.f32.mrf.mxu0
  %v241 = vadd.f32 %v177, %v240
  %v242 = vpop.f32.mrf.mxu0
  %v243 = vpop.f32.mrf.mxu0
  %v244 = vadd.f32 %v177, %v243
  %v245 = vpop.f32.mrf.mxu0
  %246 = vdwg.mxu0
  %s247 = scalar_lea.vmem [#allocation2], 64
  %248 = vst.msk [vmem:[%s247] sm:$0xff] %vm162, %v217
  %249 = vst.msk [vmem:[%s247 + $0x8] sm:$0xff] %vm162, %v220
  %250 = vst.msk [vmem:[%s247 + $0x10] sm:$0xff] %vm162, %v225
  %251 = vst.msk [vmem:[%s247 + $0x18] sm:$0xff] %vm162, %v228
  %252 = vst.msk [vmem:[%s247 + $0x20] sm:$0xff] %vm162, %v233
  %253 = vst.msk [vmem:[%s247 + $0x28] sm:$0xff] %vm162, %v236
  %254 = vst.msk [vmem:[%s247 + $0x30] sm:$0xff] %vm162, %v241
  %255 = vst.msk [vmem:[%s247 + $0x38] sm:$0xff] %vm162, %v244
  %v256 = vld [vmem:[%s3] sm:$0xf]
  %v257 = vld [vmem:[%s3 + $0x4] sm:$0xf]
  %v258 = vld [vmem:[%s3 + $0x8] sm:$0xf]
  %v259 = vld [vmem:[%s3 + $0xc] sm:$0xf]
  %v260 = vld [vmem:[%s7] sm:$0xf]
  %v261 = vld [vmem:[%s7 + $0x4] sm:$0xf]
  %v262 = vld [vmem:[%s7 + $0x8] sm:$0xf]
  %v263 = vld [vmem:[%s7 + $0xc] sm:$0xf]
  %v264 = vld [vmem:[%s4] sm:$0x1]
  %v265 = vld [vmem:[%s8] sm:$0x1]
  %v266 = vld [vmem:[#allocation2] sm:$0xff]
  %v267 = vld [vmem:[%s247 + $0x38] sm:$0xff]
  %v268 = vxor.u32 %v266, 2147483648
  %v269 = vmul.f32 %v268, 1.442695
  %v270 = vpow.pop %v269
  %v271 = vadd.f32 %v270, 1.0
  %v272 = vrcp.pop %v271
  %v273 = vmul.f32 1.0, %v272
  %v275 = vlaneseq
  %v276 = vshrl.u32 %v275, 7
  %v277 = vsub.s32 0, %v276
  %v278 = vrot.slane %v264, %v277
  %v280 = vmul.f32 %v273, %v278
  %282 = vrot.lane.b32.xlu0 %v280, 64
  %v283 = vpop.permute.xlu0 %282
  %v285 = vadd.f32 %v266, %v283
  %v286 = vtanh.pop %v285
  %v287 = vsub.f32 1.0, %v273
  %289 = vrot.lane.b32.xlu0 %v286, 96
  %v290 = vpop.permute.xlu0 %289
  %v292 = vmul.f32 %v287, %v290
  %v293 = vxor.u32 %v267, 2147483648
  %v294 = vmul.f32 %v293, 1.442695
  %v295 = vpow.pop %v294
  %v296 = vadd.f32 %v295, 1.0
  %v297 = vrcp.pop %v296
  %v298 = vmul.f32 1.0, %v297
  %v300 = vlaneseq
  %v301 = vshrl.u32 %v300, 7
  %v302 = vsub.s32 0, %v301
  %v303 = vrot.slane %v265, %v302
  %v305 = vmul.f32 %v298, %v303
  %307 = vrot.lane.b32.xlu0 %v305, 64
  %v308 = vpop.permute.xlu0 %307
  %v310 = vadd.f32 %v267, %v308
  %v311 = vtanh.pop %v310
  %v312 = vsub.f32 1.0, %v298
  %314 = vrot.lane.b32.xlu0 %v311, 96
  %v315 = vpop.permute.xlu0 %314
  %v317 = vmul.f32 %v312, %v315
  %319 = vrot.lane.b32.xlu0 %v292, 96
  %v320 = vpop.permute.xlu0 %319
  %vm322 = vcmask 261120
  %323 = vst.msk [vmem:[#allocation3] sm:$0xff] %vm322, %v320
  %325 = vrot.lane.b32.xlu0 %v317, 96
  %v326 = vpop.permute.xlu0 %325
  %s328 = scalar_lea.vmem [#allocation3], 64
  %329 = vst.msk [vmem:[%s328 + $0x38] sm:$0xff] %vm322, %v326
  %v330 = vld [vmem:[#allocation2 + $0x8] sm:$0xff]
  %v331 = vld [vmem:[%s247 + $0x30] sm:$0xff]
  %v332 = vpack.c.bf16 %v292, %v292
  %334 = vrot.lane.b32.xlu0 %v332, 96
  %v335 = vpop.permute.xlu0 %334
  %v340 = vunpack.c.l.b16 %v256
  %v341 = vunpack.c.l.b16 %v257
  %v342 = vunpack.c.l.b16 %v258
  %v343 = vunpack.c.l.b16 %v259
  %v344 = vpack.c.b16 %v341, %v340
  %v345 = vpack.c.b16 %v343, %v342
  %v349 = vsel %vm322, %v335, 0
  %351 = vmatprep.subr.bf16.mxu0 0
  %352 = vmatpush1.bf16.msra.mxu0 0
  %353 = vmatprep.subr.bf16.mxu0 0
  %354 = vmatpush1.bf16.msra.mxu0 0
  %355 = vmatprep.subr.bf16.mxu0 0
  %356 = vmatpush1.bf16.msra.mxu0 0
  %357 = vmatprep.subr.bf16.mxu0 0
  %358 = vmatpush1.bf16.msra.mxu0 0
  %359 = vmatprep.subr.bf16.mxu0 0
  %360 = vmatpush1.bf16.msra.mxu0 0
  %361 = vmatprep.subr.bf16.mxu0 0
  %362 = vmatpush1.bf16.msra.mxu0 0
  %363 = vmatprep.subr.bf16.mxu0 0
  %364 = vmatpush1.bf16.msra.mxu0 %v345
  %365 = vmatprep.subr.bf16.mxu0 0
  %366 = vmatpush1.bf16.msra.mxu0 %v344
  %367 = vmatprep.subr.bf16.mxu0 0
  %368 = vmatpush2.bf16.msra.mxu0 0
  %369 = vmatprep.subr.bf16.mxu0 0
  %370 = vmatpush2.bf16.msra.mxu0 0
  %371 = vmatprep.subr.bf16.mxu0 0
  %372 = vmatpush2.bf16.msra.mxu0 0
  %373 = vmatprep.subr.bf16.mxu0 0
  %374 = vmatpush2.bf16.msra.mxu0 0
  %375 = vmatprep.subr.bf16.mxu0 0
  %376 = vmatpush2.bf16.msra.mxu0 0
  %377 = vmatprep.subr.bf16.mxu0 0
  %378 = vmatpush2.bf16.msra.mxu0 0
  %379 = vmatprep.subr.bf16.mxu0 0
  %380 = vmatpush2.bf16.msra.mxu0 0
  %381 = vmatprep.subr.bf16.mxu0 0
  %382 = vmatpush2.bf16.msra.mxu0 0
  %383 = vmatprep.mubr.bf16.mxu0 0
  %384 = vmatmul.mubr.bf16.gmra.mxu0 %v349
  %v385 = vpop.f32.mrf.mxu0
  %v386 = vadd.f32 0.0, %v385
  %v387 = vpop.f32.mrf.mxu0
  %v388 = vpop.f32.mrf.mxu0
  %v389 = vpop.f32.mrf.mxu0
  %390 = vdwg.mxu0
  %v391 = vadd.f32 %v330, %v386
  %v392 = vxor.u32 %v391, 2147483648
  %v393 = vmul.f32 %v392, 1.442695
  %v394 = vpow.pop %v393
  %v395 = vadd.f32 %v394, 1.0
  %v396 = vrcp.pop %v395
  %v397 = vmul.f32 1.0, %v396
  %398 = vrot.lane.b32.xlu0 %v278, 64
  %v399 = vpop.permute.xlu0 %398
  %v401 = vadd.f32 %v386, %v399
  %403 = vrot.lane.b32.xlu0 %v401, 64
  %v404 = vpop.permute.xlu0 %403
  %v406 = vmul.f32 %v397, %v404
  %408 = vrot.lane.b32.xlu0 %v406, 64
  %v409 = vpop.permute.xlu0 %408
  %v411 = vadd.f32 %v330, %v409
  %v412 = vtanh.pop %v411
  %v413 = vsub.f32 1.0, %v397
  %415 = vrot.lane.b32.xlu0 %v412, 96
  %v416 = vpop.permute.xlu0 %415
  %v418 = vmul.f32 %v413, %v416
  %v419 = vmul.f32 %v397, %v292
  %v420 = vadd.f32 %v418, %v419
  %v421 = vpack.c.bf16 %v317, %v317
  %423 = vrot.lane.b32.xlu0 %v421, 96
  %v424 = vpop.permute.xlu0 %423
  %v429 = vunpack.c.l.b16 %v260
  %v430 = vunpack.c.l.b16 %v261
  %v431 = vunpack.c.l.b16 %v262
  %v432 = vunpack.c.l.b16 %v263
  %v433 = vpack.c.b16 %v430, %v429
  %v434 = vpack.c.b16 %v432, %v431
  %v438 = vsel %vm322, %v424, 0
  %440 = vmatprep.subr.bf16.mxu0 0
  %441 = vmatpush1.bf16.msra.mxu0 0
  %442 = vmatprep.subr.bf16.mxu0 0
  %443 = vmatpush1.bf16.msra.mxu0 0
  %444 = vmatprep.subr.bf16.mxu0 0
  %445 = vmatpush1.bf16.msra.mxu0 0
  %446 = vmatprep.subr.bf16.mxu0 0
  %447 = vmatpush1.bf16.msra.mxu0 0
  %448 = vmatprep.subr.bf16.mxu0 0
  %449 = vmatpush1.bf16.msra.mxu0 0
  %450 = vmatprep.subr.bf16.mxu0 0
  %451 = vmatpush1.bf16.msra.mxu0 0
  %452 = vmatprep.subr.bf16.mxu0 0
  %453 = vmatpush1.bf16.msra.mxu0 %v434
  %454 = vmatprep.subr.bf16.mxu0 0
  %455 = vmatpush1.bf16.msra.mxu0 %v433
  %456 = vmatprep.subr.bf16.mxu0 0
  %457 = vmatpush2.bf16.msra.mxu0 0
  %458 = vmatprep.subr.bf16.mxu0 0
  %459 = vmatpush2.bf16.msra.mxu0 0
  %460 = vmatprep.subr.bf16.mxu0 0
  %461 = vmatpush2.bf16.msra.mxu0 0
  %462 = vmatprep.subr.bf16.mxu0 0
  %463 = vmatpush2.bf16.msra.mxu0 0
  %464 = vmatprep.subr.bf16.mxu0 0
  %465 = vmatpush2.bf16.msra.mxu0 0
  %466 = vmatprep.subr.bf16.mxu0 0
  %467 = vmatpush2.bf16.msra.mxu0 0
  %468 = vmatprep.subr.bf16.mxu0 0
  %469 = vmatpush2.bf16.msra.mxu0 0
  %470 = vmatprep.subr.bf16.mxu0 0
  %471 = vmatpush2.bf16.msra.mxu0 0
  %472 = vmatprep.mubr.bf16.mxu0 0
  %473 = vmatmul.mubr.bf16.gmra.mxu0 %v438
  %v474 = vpop.f32.mrf.mxu0
  %v475 = vadd.f32 0.0, %v474
  %v476 = vpop.f32.mrf.mxu0
  %v477 = vpop.f32.mrf.mxu0
  %v478 = vpop.f32.mrf.mxu0
  %479 = vdwg.mxu0
  %v480 = vadd.f32 %v331, %v475
  %v481 = vxor.u32 %v480, 2147483648
  %v482 = vmul.f32 %v481, 1.442695
  %v483 = vpow.pop %v482
  %v484 = vadd.f32 %v483, 1.0
  %v485 = vrcp.pop %v484
  %v486 = vmul.f32 1.0, %v485
  %487 = vrot.lane.b32.xlu0 %v303, 64
  %v488 = vpop.permute.xlu0 %487
  %v490 = vadd.f32 %v475, %v488
  %492 = vrot.lane.b32.xlu0 %v490, 64
  %v493 = vpop.permute.xlu0 %492
  %v495 = vmul.f32 %v486, %v493
  %497 = vrot.lane.b32.xlu0 %v495, 64
  %v498 = vpop.permute.xlu0 %497
  %v500 = vadd.f32 %v331, %v498
  %v501 = vtanh.pop %v500
  %v502 = vsub.f32 1.0, %v486
  %504 = vrot.lane.b32.xlu0 %v501, 96
  %v505 = vpop.permute.xlu0 %504
  %v507 = vmul.f32 %v502, %v505
  %v508 = vmul.f32 %v486, %v317
  %v509 = vadd.f32 %v507, %v508
  %511 = vrot.lane.b32.xlu0 %v420, 96
  %v512 = vpop.permute.xlu0 %511
  %514 = vst.msk [vmem:[#allocation3 + $0x8] sm:$0xff] %vm322, %v512
  %516 = vrot.lane.b32.xlu0 %v509, 96
  %v517 = vpop.permute.xlu0 %516
  %519 = vst.msk [vmem:[%s328 + $0x30] sm:$0xff] %vm322, %v517
  %v520 = vld [vmem:[#allocation2 + $0x10] sm:$0xff]
  %v521 = vld [vmem:[%s247 + $0x28] sm:$0xff]
  %v522 = vpack.c.bf16 %v420, %v420
  %524 = vrot.lane.b32.xlu0 %v522, 96
  %v525 = vpop.permute.xlu0 %524
  %v527 = vsel %vm322, %v525, 0
  %529 = vmatprep.subr.bf16.mxu0 0
  %530 = vmatpush1.bf16.msra.mxu0 0
  %531 = vmatprep.subr.bf16.mxu0 0
  %532 = vmatpush1.bf16.msra.mxu0 0
  %533 = vmatprep.subr.bf16.mxu0 0
  %534 = vmatpush1.bf16.msra.mxu0 0
  %535 = vmatprep.subr.bf16.mxu0 0
  %536 = vmatpush1.bf16.msra.mxu0 0
  %537 = vmatprep.subr.bf16.mxu0 0
  %538 = vmatpush1.bf16.msra.mxu0 0
  %539 = vmatprep.subr.bf16.mxu0 0
  %540 = vmatpush1.bf16.msra.mxu0 0
  %541 = vmatprep.subr.bf16.mxu0 0
  %542 = vmatpush1.bf16.msra.mxu0 %v345
  %543 = vmatprep.subr.bf16.mxu0 0
  %544 = vmatpush1.bf16.msra.mxu0 %v344
  %545 = vmatprep.subr.bf16.mxu0 0
  %546 = vmatpush2.bf16.msra.mxu0 0
  %547 = vmatprep.subr.bf16.mxu0 0
  %548 = vmatpush2.bf16.msra.mxu0 0
  %549 = vmatprep.subr.bf16.mxu0 0
  %550 = vmatpush2.bf16.msra.mxu0 0
  %551 = vmatprep.subr.bf16.mxu0 0
  %552 = vmatpush2.bf16.msra.mxu0 0
  %553 = vmatprep.subr.bf16.mxu0 0
  %554 = vmatpush2.bf16.msra.mxu0 0
  %555 = vmatprep.subr.bf16.mxu0 0
  %556 = vmatpush2.bf16.msra.mxu0 0
  %557 = vmatprep.subr.bf16.mxu0 0
  %558 = vmatpush2.bf16.msra.mxu0 0
  %559 = vmatprep.subr.bf16.mxu0 0
  %560 = vmatpush2.bf16.msra.mxu0 0
  %561 = vmatprep.mubr.bf16.mxu0 0
  %562 = vmatmul.mubr.bf16.gmra.mxu0 %v527
  %v563 = vpop.f32.mrf.mxu0
  %v564 = vadd.f32 0.0, %v563
  %v565 = vpop.f32.mrf.mxu0
  %v566 = vpop.f32.mrf.mxu0
  %v567 = vpop.f32.mrf.mxu0
  %568 = vdwg.mxu0
  %v569 = vadd.f32 %v520, %v564
  %v570 = vxor.u32 %v569, 2147483648
  %v571 = vmul.f32 %v570, 1.442695
  %v572 = vpow.pop %v571
  %v573 = vadd.f32 %v572, 1.0
  %v574 = vrcp.pop %v573
  %v575 = vmul.f32 1.0, %v574
  %v576 = vadd.f32 %v564, %v399
  %578 = vrot.lane.b32.xlu0 %v576, 64
  %v579 = vpop.permute.xlu0 %578
  %v581 = vmul.f32 %v575, %v579
  %583 = vrot.lane.b32.xlu0 %v581, 64
  %v584 = vpop.permute.xlu0 %583
  %v586 = vadd.f32 %v520, %v584
  %v587 = vtanh.pop %v586
  %v588 = vsub.f32 1.0, %v575
  %590 = vrot.lane.b32.xlu0 %v587, 96
  %v591 = vpop.permute.xlu0 %590
  %v593 = vmul.f32 %v588, %v591
  %v594 = vmul.f32 %v575, %v420
  %v595 = vadd.f32 %v593, %v594
  %v596 = vpack.c.bf16 %v509, %v509
  %598 = vrot.lane.b32.xlu0 %v596, 96
  %v599 = vpop.permute.xlu0 %598
  %v601 = vsel %vm322, %v599, 0
  %603 = vmatprep.subr.bf16.mxu0 0
  %604 = vmatpush1.bf16.msra.mxu0 0
  %605 = vmatprep.subr.bf16.mxu0 0
  %606 = vmatpush1.bf16.msra.mxu0 0
  %607 = vmatprep.subr.bf16.mxu0 0
  %608 = vmatpush1.bf16.msra.mxu0 0
  %609 = vmatprep.subr.bf16.mxu0 0
  %610 = vmatpush1.bf16.msra.mxu0 0
  %611 = vmatprep.subr.bf16.mxu0 0
  %612 = vmatpush1.bf16.msra.mxu0 0
  %613 = vmatprep.subr.bf16.mxu0 0
  %614 = vmatpush1.bf16.msra.mxu0 0
  %615 = vmatprep.subr.bf16.mxu0 0
  %616 = vmatpush1.bf16.msra.mxu0 %v434
  %617 = vmatprep.subr.bf16.mxu0 0
  %618 = vmatpush1.bf16.msra.mxu0 %v433
  %619 = vmatprep.subr.bf16.mxu0 0
  %620 = vmatpush2.bf16.msra.mxu0 0
  %621 = vmatprep.subr.bf16.mxu0 0
  %622 = vmatpush2.bf16.msra.mxu0 0
  %623 = vmatprep.subr.bf16.mxu0 0
  %624 = vmatpush2.bf16.msra.mxu0 0
  %625 = vmatprep.subr.bf16.mxu0 0
  %626 = vmatpush2.bf16.msra.mxu0 0
  %627 = vmatprep.subr.bf16.mxu0 0
  %628 = vmatpush2.bf16.msra.mxu0 0
  %629 = vmatprep.subr.bf16.mxu0 0
  %630 = vmatpush2.bf16.msra.mxu0 0
  %631 = vmatprep.subr.bf16.mxu0 0
  %632 = vmatpush2.bf16.msra.mxu0 0
  %633 = vmatprep.subr.bf16.mxu0 0
  %634 = vmatpush2.bf16.msra.mxu0 0
  %635 = vmatprep.mubr.bf16.mxu0 0
  %636 = vmatmul.mubr.bf16.gmra.mxu0 %v601
  %v637 = vpop.f32.mrf.mxu0
  %v638 = vadd.f32 0.0, %v637
  %v639 = vpop.f32.mrf.mxu0
  %v640 = vpop.f32.mrf.mxu0
  %v641 = vpop.f32.mrf.mxu0
  %642 = vdwg.mxu0
  %v643 = vadd.f32 %v521, %v638
  %v644 = vxor.u32 %v643, 2147483648
  %v645 = vmul.f32 %v644, 1.442695
  %v646 = vpow.pop %v645
  %v647 = vadd.f32 %v646, 1.0
  %v648 = vrcp.pop %v647
  %v649 = vmul.f32 1.0, %v648
  %v650 = vadd.f32 %v638, %v488
  %652 = vrot.lane.b32.xlu0 %v650, 64
  %v653 = vpop.permute.xlu0 %652
  %v655 = vmul.f32 %v649, %v653
  %657 = vrot.lane.b32.xlu0 %v655, 64
  %v658 = vpop.permute.xlu0 %657
  %v660 = vadd.f32 %v521, %v658
  %v661 = vtanh.pop %v660
  %v662 = vsub.f32 1.0, %v649
  %664 = vrot.lane.b32.xlu0 %v661, 96
  %v665 = vpop.permute.xlu0 %664
  %v667 = vmul.f32 %v662, %v665
  %v668 = vmul.f32 %v649, %v509
  %v669 = vadd.f32 %v667, %v668
  %671 = vrot.lane.b32.xlu0 %v595, 96
  %v672 = vpop.permute.xlu0 %671
  %674 = vst.msk [vmem:[#allocation3 + $0x10] sm:$0xff] %vm322, %v672
  %676 = vrot.lane.b32.xlu0 %v669, 96
  %v677 = vpop.permute.xlu0 %676
  %679 = vst.msk [vmem:[%s328 + $0x28] sm:$0xff] %vm322, %v677
  %v680 = vld [vmem:[#allocation2 + $0x18] sm:$0xff]
  %v681 = vld [vmem:[%s247 + $0x20] sm:$0xff]
  %v682 = vpack.c.bf16 %v595, %v595
  %684 = vrot.lane.b32.xlu0 %v682, 96
  %v685 = vpop.permute.xlu0 %684
  %v687 = vsel %vm322, %v685, 0
  %689 = vmatprep.subr.bf16.mxu0 0
  %690 = vmatpush1.bf16.msra.mxu0 0
  %691 = vmatprep.subr.bf16.mxu0 0
  %692 = vmatpush1.bf16.msra.mxu0 0
  %693 = vmatprep.subr.bf16.mxu0 0
  %694 = vmatpush1.bf16.msra.mxu0 0
  %695 = vmatprep.subr.bf16.mxu0 0
  %696 = vmatpush1.bf16.msra.mxu0 0
  %697 = vmatprep.subr.bf16.mxu0 0
  %698 = vmatpush1.bf16.msra.mxu0 0
  %699 = vmatprep.subr.bf16.mxu0 0
  %700 = vmatpush1.bf16.msra.mxu0 0
  %701 = vmatprep.subr.bf16.mxu0 0
  %702 = vmatpush1.bf16.msra.mxu0 %v345
  %703 = vmatprep.subr.bf16.mxu0 0
  %704 = vmatpush1.bf16.msra.mxu0 %v344
  %705 = vmatprep.subr.bf16.mxu0 0
  %706 = vmatpush2.bf16.msra.mxu0 0
  %707 = vmatprep.subr.bf16.mxu0 0
  %708 = vmatpush2.bf16.msra.mxu0 0
  %709 = vmatprep.subr.bf16.mxu0 0
  %710 = vmatpush2.bf16.msra.mxu0 0
  %711 = vmatprep.subr.bf16.mxu0 0
  %712 = vmatpush2.bf16.msra.mxu0 0
  %713 = vmatprep.subr.bf16.mxu0 0
  %714 = vmatpush2.bf16.msra.mxu0 0
  %715 = vmatprep.subr.bf16.mxu0 0
  %716 = vmatpush2.bf16.msra.mxu0 0
  %717 = vmatprep.subr.bf16.mxu0 0
  %718 = vmatpush2.bf16.msra.mxu0 0
  %719 = vmatprep.subr.bf16.mxu0 0
  %720 = vmatpush2.bf16.msra.mxu0 0
  %721 = vmatprep.mubr.bf16.mxu0 0
  %722 = vmatmul.mubr.bf16.gmra.mxu0 %v687
  %v723 = vpop.f32.mrf.mxu0
  %v724 = vadd.f32 0.0, %v723
  %v725 = vpop.f32.mrf.mxu0
  %v726 = vpop.f32.mrf.mxu0
  %v727 = vpop.f32.mrf.mxu0
  %728 = vdwg.mxu0
  %v729 = vadd.f32 %v680, %v724
  %v730 = vxor.u32 %v729, 2147483648
  %v731 = vmul.f32 %v730, 1.442695
  %v732 = vpow.pop %v731
  %v733 = vadd.f32 %v732, 1.0
  %v734 = vrcp.pop %v733
  %v735 = vmul.f32 1.0, %v734
  %v736 = vadd.f32 %v724, %v399
  %738 = vrot.lane.b32.xlu0 %v736, 64
  %v739 = vpop.permute.xlu0 %738
  %v741 = vmul.f32 %v735, %v739
  %743 = vrot.lane.b32.xlu0 %v741, 64
  %v744 = vpop.permute.xlu0 %743
  %v746 = vadd.f32 %v680, %v744
  %v747 = vtanh.pop %v746
  %v748 = vsub.f32 1.0, %v735
  %750 = vrot.lane.b32.xlu0 %v747, 96
  %v751 = vpop.permute.xlu0 %750
  %v753 = vmul.f32 %v748, %v751
  %v754 = vmul.f32 %v735, %v595
  %v755 = vadd.f32 %v753, %v754
  %v756 = vpack.c.bf16 %v669, %v669
  %758 = vrot.lane.b32.xlu0 %v756, 96
  %v759 = vpop.permute.xlu0 %758
  %v761 = vsel %vm322, %v759, 0
  %763 = vmatprep.subr.bf16.mxu0 0
  %764 = vmatpush1.bf16.msra.mxu0 0
  %765 = vmatprep.subr.bf16.mxu0 0
  %766 = vmatpush1.bf16.msra.mxu0 0
  %767 = vmatprep.subr.bf16.mxu0 0
  %768 = vmatpush1.bf16.msra.mxu0 0
  %769 = vmatprep.subr.bf16.mxu0 0
  %770 = vmatpush1.bf16.msra.mxu0 0
  %771 = vmatprep.subr.bf16.mxu0 0
  %772 = vmatpush1.bf16.msra.mxu0 0
  %773 = vmatprep.subr.bf16.mxu0 0
  %774 = vmatpush1.bf16.msra.mxu0 0
  %775 = vmatprep.subr.bf16.mxu0 0
  %776 = vmatpush1.bf16.msra.mxu0 %v434
  %777 = vmatprep.subr.bf16.mxu0 0
  %778 = vmatpush1.bf16.msra.mxu0 %v433
  %779 = vmatprep.subr.bf16.mxu0 0
  %780 = vmatpush2.bf16.msra.mxu0 0
  %781 = vmatprep.subr.bf16.mxu0 0
  %782 = vmatpush2.bf16.msra.mxu0 0
  %783 = vmatprep.subr.bf16.mxu0 0
  %784 = vmatpush2.bf16.msra.mxu0 0
  %785 = vmatprep.subr.bf16.mxu0 0
  %786 = vmatpush2.bf16.msra.mxu0 0
  %787 = vmatprep.subr.bf16.mxu0 0
  %788 = vmatpush2.bf16.msra.mxu0 0
  %789 = vmatprep.subr.bf16.mxu0 0
  %790 = vmatpush2.bf16.msra.mxu0 0
  %791 = vmatprep.subr.bf16.mxu0 0
  %792 = vmatpush2.bf16.msra.mxu0 0
  %793 = vmatprep.subr.bf16.mxu0 0
  %794 = vmatpush2.bf16.msra.mxu0 0
  %795 = vmatprep.mubr.bf16.mxu0 0
  %796 = vmatmul.mubr.bf16.gmra.mxu0 %v761
  %v797 = vpop.f32.mrf.mxu0
  %v798 = vadd.f32 0.0, %v797
  %v799 = vpop.f32.mrf.mxu0
  %v800 = vpop.f32.mrf.mxu0
  %v801 = vpop.f32.mrf.mxu0
  %802 = vdwg.mxu0
  %v803 = vadd.f32 %v681, %v798
  %v804 = vxor.u32 %v803, 2147483648
  %v805 = vmul.f32 %v804, 1.442695
  %v806 = vpow.pop %v805
  %v807 = vadd.f32 %v806, 1.0
  %v808 = vrcp.pop %v807
  %v809 = vmul.f32 1.0, %v808
  %v810 = vadd.f32 %v798, %v488
  %812 = vrot.lane.b32.xlu0 %v810, 64
  %v813 = vpop.permute.xlu0 %812
  %v815 = vmul.f32 %v809, %v813
  %817 = vrot.lane.b32.xlu0 %v815, 64
  %v818 = vpop.permute.xlu0 %817
  %v820 = vadd.f32 %v681, %v818
  %v821 = vtanh.pop %v820
  %v822 = vsub.f32 1.0, %v809
  %824 = vrot.lane.b32.xlu0 %v821, 96
  %v825 = vpop.permute.xlu0 %824
  %v827 = vmul.f32 %v822, %v825
  %v828 = vmul.f32 %v809, %v669
  %v829 = vadd.f32 %v827, %v828
  %831 = vrot.lane.b32.xlu0 %v755, 96
  %v832 = vpop.permute.xlu0 %831
  %834 = vst.msk [vmem:[#allocation3 + $0x18] sm:$0xff] %vm322, %v832
  %836 = vrot.lane.b32.xlu0 %v829, 96
  %v837 = vpop.permute.xlu0 %836
  %839 = vst.msk [vmem:[%s328 + $0x20] sm:$0xff] %vm322, %v837
  %v840 = vld [vmem:[#allocation2 + $0x20] sm:$0xff]
  %v841 = vld [vmem:[%s247 + $0x18] sm:$0xff]
  %v842 = vpack.c.bf16 %v755, %v755
  %844 = vrot.lane.b32.xlu0 %v842, 96
  %v845 = vpop.permute.xlu0 %844
  %v847 = vsel %vm322, %v845, 0
  %849 = vmatprep.subr.bf16.mxu0 0
  %850 = vmatpush1.bf16.msra.mxu0 0
  %851 = vmatprep.subr.bf16.mxu0 0
  %852 = vmatpush1.bf16.msra.mxu0 0
  %853 = vmatprep.subr.bf16.mxu0 0
  %854 = vmatpush1.bf16.msra.mxu0 0
  %855 = vmatprep.subr.bf16.mxu0 0
  %856 = vmatpush1.bf16.msra.mxu0 0
  %857 = vmatprep.subr.bf16.mxu0 0
  %858 = vmatpush1.bf16.msra.mxu0 0
  %859 = vmatprep.subr.bf16.mxu0 0
  %860 = vmatpush1.bf16.msra.mxu0 0
  %861 = vmatprep.subr.bf16.mxu0 0
  %862 = vmatpush1.bf16.msra.mxu0 %v345
  %863 = vmatprep.subr.bf16.mxu0 0
  %864 = vmatpush1.bf16.msra.mxu0 %v344
  %865 = vmatprep.subr.bf16.mxu0 0
  %866 = vmatpush2.bf16.msra.mxu0 0
  %867 = vmatprep.subr.bf16.mxu0 0
  %868 = vmatpush2.bf16.msra.mxu0 0
  %869 = vmatprep.subr.bf16.mxu0 0
  %870 = vmatpush2.bf16.msra.mxu0 0
  %871 = vmatprep.subr.bf16.mxu0 0
  %872 = vmatpush2.bf16.msra.mxu0 0
  %873 = vmatprep.subr.bf16.mxu0 0
  %874 = vmatpush2.bf16.msra.mxu0 0
  %875 = vmatprep.subr.bf16.mxu0 0
  %876 = vmatpush2.bf16.msra.mxu0 0
  %877 = vmatprep.subr.bf16.mxu0 0
  %878 = vmatpush2.bf16.msra.mxu0 0
  %879 = vmatprep.subr.bf16.mxu0 0
  %880 = vmatpush2.bf16.msra.mxu0 0
  %881 = vmatprep.mubr.bf16.mxu0 0
  %882 = vmatmul.mubr.bf16.gmra.mxu0 %v847
  %v883 = vpop.f32.mrf.mxu0
  %v884 = vadd.f32 0.0, %v883
  %v885 = vpop.f32.mrf.mxu0
  %v886 = vpop.f32.mrf.mxu0
  %v887 = vpop.f32.mrf.mxu0
  %888 = vdwg.mxu0
  %v889 = vadd.f32 %v840, %v884
  %v890 = vxor.u32 %v889, 2147483648
  %v891 = vmul.f32 %v890, 1.442695
  %v892 = vpow.pop %v891
  %v893 = vadd.f32 %v892, 1.0
  %v894 = vrcp.pop %v893
  %v895 = vmul.f32 1.0, %v894
  %v896 = vadd.f32 %v884, %v399
  %898 = vrot.lane.b32.xlu0 %v896, 64
  %v899 = vpop.permute.xlu0 %898
  %v901 = vmul.f32 %v895, %v899
  %903 = vrot.lane.b32.xlu0 %v901, 64
  %v904 = vpop.permute.xlu0 %903
  %v906 = vadd.f32 %v840, %v904
  %v907 = vtanh.pop %v906
  %v908 = vsub.f32 1.0, %v895
  %910 = vrot.lane.b32.xlu0 %v907, 96
  %v911 = vpop.permute.xlu0 %910
  %v913 = vmul.f32 %v908, %v911
  %v914 = vmul.f32 %v895, %v755
  %v915 = vadd.f32 %v913, %v914
  %v916 = vpack.c.bf16 %v829, %v829
  %918 = vrot.lane.b32.xlu0 %v916, 96
  %v919 = vpop.permute.xlu0 %918
  %v921 = vsel %vm322, %v919, 0
  %923 = vmatprep.subr.bf16.mxu0 0
  %924 = vmatpush1.bf16.msra.mxu0 0
  %925 = vmatprep.subr.bf16.mxu0 0
  %926 = vmatpush1.bf16.msra.mxu0 0
  %927 = vmatprep.subr.bf16.mxu0 0
  %928 = vmatpush1.bf16.msra.mxu0 0
  %929 = vmatprep.subr.bf16.mxu0 0
  %930 = vmatpush1.bf16.msra.mxu0 0
  %931 = vmatprep.subr.bf16.mxu0 0
  %932 = vmatpush1.bf16.msra.mxu0 0
  %933 = vmatprep.subr.bf16.mxu0 0
  %934 = vmatpush1.bf16.msra.mxu0 0
  %935 = vmatprep.subr.bf16.mxu0 0
  %936 = vmatpush1.bf16.msra.mxu0 %v434
  %937 = vmatprep.subr.bf16.mxu0 0
  %938 = vmatpush1.bf16.msra.mxu0 %v433
  %939 = vmatprep.subr.bf16.mxu0 0
  %940 = vmatpush2.bf16.msra.mxu0 0
  %941 = vmatprep.subr.bf16.mxu0 0
  %942 = vmatpush2.bf16.msra.mxu0 0
  %943 = vmatprep.subr.bf16.mxu0 0
  %944 = vmatpush2.bf16.msra.mxu0 0
  %945 = vmatprep.subr.bf16.mxu0 0
  %946 = vmatpush2.bf16.msra.mxu0 0
  %947 = vmatprep.subr.bf16.mxu0 0
  %948 = vmatpush2.bf16.msra.mxu0 0
  %949 = vmatprep.subr.bf16.mxu0 0
  %950 = vmatpush2.bf16.msra.mxu0 0
  %951 = vmatprep.subr.bf16.mxu0 0
  %952 = vmatpush2.bf16.msra.mxu0 0
  %953 = vmatprep.subr.bf16.mxu0 0
  %954 = vmatpush2.bf16.msra.mxu0 0
  %955 = vmatprep.mubr.bf16.mxu0 0
  %956 = vmatmul.mubr.bf16.gmra.mxu0 %v921
  %v957 = vpop.f32.mrf.mxu0
  %v958 = vadd.f32 0.0, %v957
  %v959 = vpop.f32.mrf.mxu0
  %v960 = vpop.f32.mrf.mxu0
  %v961 = vpop.f32.mrf.mxu0
  %962 = vdwg.mxu0
  %v963 = vadd.f32 %v841, %v958
  %v964 = vxor.u32 %v963, 2147483648
  %v965 = vmul.f32 %v964, 1.442695
  %v966 = vpow.pop %v965
  %v967 = vadd.f32 %v966, 1.0
  %v968 = vrcp.pop %v967
  %v969 = vmul.f32 1.0, %v968
  %v970 = vadd.f32 %v958, %v488
  %972 = vrot.lane.b32.xlu0 %v970, 64
  %v973 = vpop.permute.xlu0 %972
  %v975 = vmul.f32 %v969, %v973
  %977 = vrot.lane.b32.xlu0 %v975, 64
  %v978 = vpop.permute.xlu0 %977
  %v980 = vadd.f32 %v841, %v978
  %v981 = vtanh.pop %v980
  %v982 = vsub.f32 1.0, %v969
  %984 = vrot.lane.b32.xlu0 %v981, 96
  %v985 = vpop.permute.xlu0 %984
  %v987 = vmul.f32 %v982, %v985
  %v988 = vmul.f32 %v969, %v829
  %v989 = vadd.f32 %v987, %v988
  %991 = vrot.lane.b32.xlu0 %v915, 96
  %v992 = vpop.permute.xlu0 %991
  %994 = vst.msk [vmem:[#allocation3 + $0x20] sm:$0xff] %vm322, %v992
  %996 = vrot.lane.b32.xlu0 %v989, 96
  %v997 = vpop.permute.xlu0 %996
  %999 = vst.msk [vmem:[%s328 + $0x18] sm:$0xff] %vm322, %v997
  %v1000 = vld [vmem:[#allocation2 + $0x28] sm:$0xff]
  %v1001 = vld [vmem:[%s247 + $0x10] sm:$0xff]
  %v1002 = vpack.c.bf16 %v915, %v915
  %1004 = vrot.lane.b32.xlu0 %v1002, 96
  %v1005 = vpop.permute.xlu0 %1004
  %v1007 = vsel %vm322, %v1005, 0
  %1009 = vmatprep.subr.bf16.mxu0 0
  %1010 = vmatpush1.bf16.msra.mxu0 0
  %1011 = vmatprep.subr.bf16.mxu0 0
  %1012 = vmatpush1.bf16.msra.mxu0 0
  %1013 = vmatprep.subr.bf16.mxu0 0
  %1014 = vmatpush1.bf16.msra.mxu0 0
  %1015 = vmatprep.subr.bf16.mxu0 0
  %1016 = vmatpush1.bf16.msra.mxu0 0
  %1017 = vmatprep.subr.bf16.mxu0 0
  %1018 = vmatpush1.bf16.msra.mxu0 0
  %1019 = vmatprep.subr.bf16.mxu0 0
  %1020 = vmatpush1.bf16.msra.mxu0 0
  %1021 = vmatprep.subr.bf16.mxu0 0
  %1022 = vmatpush1.bf16.msra.mxu0 %v345
  %1023 = vmatprep.subr.bf16.mxu0 0
  %1024 = vmatpush1.bf16.msra.mxu0 %v344
  %1025 = vmatprep.subr.bf16.mxu0 0
  %1026 = vmatpush2.bf16.msra.mxu0 0
  %1027 = vmatprep.subr.bf16.mxu0 0
  %1028 = vmatpush2.bf16.msra.mxu0 0
  %1029 = vmatprep.subr.bf16.mxu0 0
  %1030 = vmatpush2.bf16.msra.mxu0 0
  %1031 = vmatprep.subr.bf16.mxu0 0
  %1032 = vmatpush2.bf16.msra.mxu0 0
  %1033 = vmatprep.subr.bf16.mxu0 0
  %1034 = vmatpush2.bf16.msra.mxu0 0
  %1035 = vmatprep.subr.bf16.mxu0 0
  %1036 = vmatpush2.bf16.msra.mxu0 0
  %1037 = vmatprep.subr.bf16.mxu0 0
  %1038 = vmatpush2.bf16.msra.mxu0 0
  %1039 = vmatprep.subr.bf16.mxu0 0
  %1040 = vmatpush2.bf16.msra.mxu0 0
  %1041 = vmatprep.mubr.bf16.mxu0 0
  %1042 = vmatmul.mubr.bf16.gmra.mxu0 %v1007
  %v1043 = vpop.f32.mrf.mxu0
  %v1044 = vadd.f32 0.0, %v1043
  %v1045 = vpop.f32.mrf.mxu0
  %v1046 = vpop.f32.mrf.mxu0
  %v1047 = vpop.f32.mrf.mxu0
  %1048 = vdwg.mxu0
  %v1049 = vadd.f32 %v1000, %v1044
  %v1050 = vxor.u32 %v1049, 2147483648
  %v1051 = vmul.f32 %v1050, 1.442695
  %v1052 = vpow.pop %v1051
  %v1053 = vadd.f32 %v1052, 1.0
  %v1054 = vrcp.pop %v1053
  %v1055 = vmul.f32 1.0, %v1054
  %v1056 = vadd.f32 %v1044, %v399
  %1058 = vrot.lane.b32.xlu0 %v1056, 64
  %v1059 = vpop.permute.xlu0 %1058
  %v1061 = vmul.f32 %v1055, %v1059
  %1063 = vrot.lane.b32.xlu0 %v1061, 64
  %v1064 = vpop.permute.xlu0 %1063
  %v1066 = vadd.f32 %v1000, %v1064
  %v1067 = vtanh.pop %v1066
  %v1068 = vsub.f32 1.0, %v1055
  %1070 = vrot.lane.b32.xlu0 %v1067, 96
  %v1071 = vpop.permute.xlu0 %1070
  %v1073 = vmul.f32 %v1068, %v1071
  %v1074 = vmul.f32 %v1055, %v915
  %v1075 = vadd.f32 %v1073, %v1074
  %v1076 = vpack.c.bf16 %v989, %v989
  %1078 = vrot.lane.b32.xlu0 %v1076, 96
  %v1079 = vpop.permute.xlu0 %1078
  %v1081 = vsel %vm322, %v1079, 0
  %1083 = vmatprep.subr.bf16.mxu0 0
  %1084 = vmatpush1.bf16.msra.mxu0 0
  %1085 = vmatprep.subr.bf16.mxu0 0
  %1086 = vmatpush1.bf16.msra.mxu0 0
  %1087 = vmatprep.subr.bf16.mxu0 0
  %1088 = vmatpush1.bf16.msra.mxu0 0
  %1089 = vmatprep.subr.bf16.mxu0 0
  %1090 = vmatpush1.bf16.msra.mxu0 0
  %1091 = vmatprep.subr.bf16.mxu0 0
  %1092 = vmatpush1.bf16.msra.mxu0 0
  %1093 = vmatprep.subr.bf16.mxu0 0
  %1094 = vmatpush1.bf16.msra.mxu0 0
  %1095 = vmatprep.subr.bf16.mxu0 0
  %1096 = vmatpush1.bf16.msra.mxu0 %v434
  %1097 = vmatprep.subr.bf16.mxu0 0
  %1098 = vmatpush1.bf16.msra.mxu0 %v433
  %1099 = vmatprep.subr.bf16.mxu0 0
  %1100 = vmatpush2.bf16.msra.mxu0 0
  %1101 = vmatprep.subr.bf16.mxu0 0
  %1102 = vmatpush2.bf16.msra.mxu0 0
  %1103 = vmatprep.subr.bf16.mxu0 0
  %1104 = vmatpush2.bf16.msra.mxu0 0
  %1105 = vmatprep.subr.bf16.mxu0 0
  %1106 = vmatpush2.bf16.msra.mxu0 0
  %1107 = vmatprep.subr.bf16.mxu0 0
  %1108 = vmatpush2.bf16.msra.mxu0 0
  %1109 = vmatprep.subr.bf16.mxu0 0
  %1110 = vmatpush2.bf16.msra.mxu0 0
  %1111 = vmatprep.subr.bf16.mxu0 0
  %1112 = vmatpush2.bf16.msra.mxu0 0
  %1113 = vmatprep.subr.bf16.mxu0 0
  %1114 = vmatpush2.bf16.msra.mxu0 0
  %1115 = vmatprep.mubr.bf16.mxu0 0
  %1116 = vmatmul.mubr.bf16.gmra.mxu0 %v1081
  %v1117 = vpop.f32.mrf.mxu0
  %v1118 = vadd.f32 0.0, %v1117
  %v1119 = vpop.f32.mrf.mxu0
  %v1120 = vpop.f32.mrf.mxu0
  %v1121 = vpop.f32.mrf.mxu0
  %1122 = vdwg.mxu0
  %v1123 = vadd.f32 %v1001, %v1118
  %v1124 = vxor.u32 %v1123, 2147483648
  %v1125 = vmul.f32 %v1124, 1.442695
  %v1126 = vpow.pop %v1125
  %v1127 = vadd.f32 %v1126, 1.0
  %v1128 = vrcp.pop %v1127
  %v1129 = vmul.f32 1.0, %v1128
  %v1130 = vadd.f32 %v1118, %v488
  %1132 = vrot.lane.b32.xlu0 %v1130, 64
  %v1133 = vpop.permute.xlu0 %1132
  %v1135 = vmul.f32 %v1129, %v1133
  %1137 = vrot.lane.b32.xlu0 %v1135, 64
  %v1138 = vpop.permute.xlu0 %1137
  %v1140 = vadd.f32 %v1001, %v1138
  %v1141 = vtanh.pop %v1140
  %v1142 = vsub.f32 1.0, %v1129
  %1144 = vrot.lane.b32.xlu0 %v1141, 96
  %v1145 = vpop.permute.xlu0 %1144
  %v1147 = vmul.f32 %v1142, %v1145
  %v1148 = vmul.f32 %v1129, %v989
  %v1149 = vadd.f32 %v1147, %v1148
  %1151 = vrot.lane.b32.xlu0 %v1075, 96
  %v1152 = vpop.permute.xlu0 %1151
  %1154 = vst.msk [vmem:[#allocation3 + $0x28] sm:$0xff] %vm322, %v1152
  %1156 = vrot.lane.b32.xlu0 %v1149, 96
  %v1157 = vpop.permute.xlu0 %1156
  %1159 = vst.msk [vmem:[%s328 + $0x10] sm:$0xff] %vm322, %v1157
  %v1160 = vld [vmem:[#allocation2 + $0x30] sm:$0xff]
  %v1161 = vld [vmem:[%s247 + $0x8] sm:$0xff]
  %v1162 = vpack.c.bf16 %v1075, %v1075
  %1164 = vrot.lane.b32.xlu0 %v1162, 96
  %v1165 = vpop.permute.xlu0 %1164
  %v1167 = vsel %vm322, %v1165, 0
  %1169 = vmatprep.subr.bf16.mxu0 0
  %1170 = vmatpush1.bf16.msra.mxu0 0
  %1171 = vmatprep.subr.bf16.mxu0 0
  %1172 = vmatpush1.bf16.msra.mxu0 0
  %1173 = vmatprep.subr.bf16.mxu0 0
  %1174 = vmatpush1.bf16.msra.mxu0 0
  %1175 = vmatprep.subr.bf16.mxu0 0
  %1176 = vmatpush1.bf16.msra.mxu0 0
  %1177 = vmatprep.subr.bf16.mxu0 0
  %1178 = vmatpush1.bf16.msra.mxu0 0
  %1179 = vmatprep.subr.bf16.mxu0 0
  %1180 = vmatpush1.bf16.msra.mxu0 0
  %1181 = vmatprep.subr.bf16.mxu0 0
  %1182 = vmatpush1.bf16.msra.mxu0 %v345
  %1183 = vmatprep.subr.bf16.mxu0 0
  %1184 = vmatpush1.bf16.msra.mxu0 %v344
  %1185 = vmatprep.subr.bf16.mxu0 0
  %1186 = vmatpush2.bf16.msra.mxu0 0
  %1187 = vmatprep.subr.bf16.mxu0 0
  %1188 = vmatpush2.bf16.msra.mxu0 0
  %1189 = vmatprep.subr.bf16.mxu0 0
  %1190 = vmatpush2.bf16.msra.mxu0 0
  %1191 = vmatprep.subr.bf16.mxu0 0
  %1192 = vmatpush2.bf16.msra.mxu0 0
  %1193 = vmatprep.subr.bf16.mxu0 0
  %1194 = vmatpush2.bf16.msra.mxu0 0
  %1195 = vmatprep.subr.bf16.mxu0 0
  %1196 = vmatpush2.bf16.msra.mxu0 0
  %1197 = vmatprep.subr.bf16.mxu0 0
  %1198 = vmatpush2.bf16.msra.mxu0 0
  %1199 = vmatprep.subr.bf16.mxu0 0
  %1200 = vmatpush2.bf16.msra.mxu0 0
  %1201 = vmatprep.mubr.bf16.mxu0 0
  %1202 = vmatmul.mubr.bf16.gmra.mxu0 %v1167
  %v1203 = vpop.f32.mrf.mxu0
  %v1204 = vadd.f32 0.0, %v1203
  %v1205 = vpop.f32.mrf.mxu0
  %v1206 = vpop.f32.mrf.mxu0
  %v1207 = vpop.f32.mrf.mxu0
  %1208 = vdwg.mxu0
  %v1209 = vadd.f32 %v1160, %v1204
  %v1210 = vxor.u32 %v1209, 2147483648
  %v1211 = vmul.f32 %v1210, 1.442695
  %v1212 = vpow.pop %v1211
  %v1213 = vadd.f32 %v1212, 1.0
  %v1214 = vrcp.pop %v1213
  %v1215 = vmul.f32 1.0, %v1214
  %v1216 = vadd.f32 %v1204, %v399
  %1218 = vrot.lane.b32.xlu0 %v1216, 64
  %v1219 = vpop.permute.xlu0 %1218
  %v1221 = vmul.f32 %v1215, %v1219
  %1223 = vrot.lane.b32.xlu0 %v1221, 64
  %v1224 = vpop.permute.xlu0 %1223
  %v1226 = vadd.f32 %v1160, %v1224
  %v1227 = vtanh.pop %v1226
  %v1228 = vsub.f32 1.0, %v1215
  %1230 = vrot.lane.b32.xlu0 %v1227, 96
  %v1231 = vpop.permute.xlu0 %1230
  %v1233 = vmul.f32 %v1228, %v1231
  %v1234 = vmul.f32 %v1215, %v1075
  %v1235 = vadd.f32 %v1233, %v1234
  %v1236 = vpack.c.bf16 %v1149, %v1149
  %1238 = vrot.lane.b32.xlu0 %v1236, 96
  %v1239 = vpop.permute.xlu0 %1238
  %v1241 = vsel %vm322, %v1239, 0
  %1243 = vmatprep.subr.bf16.mxu0 0
  %1244 = vmatpush1.bf16.msra.mxu0 0
  %1245 = vmatprep.subr.bf16.mxu0 0
  %1246 = vmatpush1.bf16.msra.mxu0 0
  %1247 = vmatprep.subr.bf16.mxu0 0
  %1248 = vmatpush1.bf16.msra.mxu0 0
  %1249 = vmatprep.subr.bf16.mxu0 0
  %1250 = vmatpush1.bf16.msra.mxu0 0
  %1251 = vmatprep.subr.bf16.mxu0 0
  %1252 = vmatpush1.bf16.msra.mxu0 0
  %1253 = vmatprep.subr.bf16.mxu0 0
  %1254 = vmatpush1.bf16.msra.mxu0 0
  %1255 = vmatprep.subr.bf16.mxu0 0
  %1256 = vmatpush1.bf16.msra.mxu0 %v434
  %1257 = vmatprep.subr.bf16.mxu0 0
  %1258 = vmatpush1.bf16.msra.mxu0 %v433
  %1259 = vmatprep.subr.bf16.mxu0 0
  %1260 = vmatpush2.bf16.msra.mxu0 0
  %1261 = vmatprep.subr.bf16.mxu0 0
  %1262 = vmatpush2.bf16.msra.mxu0 0
  %1263 = vmatprep.subr.bf16.mxu0 0
  %1264 = vmatpush2.bf16.msra.mxu0 0
  %1265 = vmatprep.subr.bf16.mxu0 0
  %1266 = vmatpush2.bf16.msra.mxu0 0
  %1267 = vmatprep.subr.bf16.mxu0 0
  %1268 = vmatpush2.bf16.msra.mxu0 0
  %1269 = vmatprep.subr.bf16.mxu0 0
  %1270 = vmatpush2.bf16.msra.mxu0 0
  %1271 = vmatprep.subr.bf16.mxu0 0
  %1272 = vmatpush2.bf16.msra.mxu0 0
  %1273 = vmatprep.subr.bf16.mxu0 0
  %1274 = vmatpush2.bf16.msra.mxu0 0
  %1275 = vmatprep.mubr.bf16.mxu0 0
  %1276 = vmatmul.mubr.bf16.gmra.mxu0 %v1241
  %v1277 = vpop.f32.mrf.mxu0
  %v1278 = vadd.f32 0.0, %v1277
  %v1279 = vpop.f32.mrf.mxu0
  %v1280 = vpop.f32.mrf.mxu0
  %v1281 = vpop.f32.mrf.mxu0
  %1282 = vdwg.mxu0
  %v1283 = vadd.f32 %v1161, %v1278
  %v1284 = vxor.u32 %v1283, 2147483648
  %v1285 = vmul.f32 %v1284, 1.442695
  %v1286 = vpow.pop %v1285
  %v1287 = vadd.f32 %v1286, 1.0
  %v1288 = vrcp.pop %v1287
  %v1289 = vmul.f32 1.0, %v1288
  %v1290 = vadd.f32 %v1278, %v488
  %1292 = vrot.lane.b32.xlu0 %v1290, 64
  %v1293 = vpop.permute.xlu0 %1292
  %v1295 = vmul.f32 %v1289, %v1293
  %1297 = vrot.lane.b32.xlu0 %v1295, 64
  %v1298 = vpop.permute.xlu0 %1297
  %v1300 = vadd.f32 %v1161, %v1298
  %v1301 = vtanh.pop %v1300
  %v1302 = vsub.f32 1.0, %v1289
  %1304 = vrot.lane.b32.xlu0 %v1301, 96
  %v1305 = vpop.permute.xlu0 %1304
  %v1307 = vmul.f32 %v1302, %v1305
  %v1308 = vmul.f32 %v1289, %v1149
  %v1309 = vadd.f32 %v1307, %v1308
  %1311 = vrot.lane.b32.xlu0 %v1235, 96
  %v1312 = vpop.permute.xlu0 %1311
  %1314 = vst.msk [vmem:[#allocation3 + $0x30] sm:$0xff] %vm322, %v1312
  %1316 = vrot.lane.b32.xlu0 %v1309, 96
  %v1317 = vpop.permute.xlu0 %1316
  %1319 = vst.msk [vmem:[%s328 + $0x8] sm:$0xff] %vm322, %v1317
  %v1320 = vld [vmem:[#allocation2 + $0x38] sm:$0xff]
  %v1321 = vld [vmem:[%s247] sm:$0xff]
  %v1322 = vpack.c.bf16 %v1235, %v1235
  %1324 = vrot.lane.b32.xlu0 %v1322, 96
  %v1325 = vpop.permute.xlu0 %1324
  %v1327 = vsel %vm322, %v1325, 0
  %1329 = vmatprep.subr.bf16.mxu0 0
  %1330 = vmatpush1.bf16.msra.mxu0 0
  %1331 = vmatprep.subr.bf16.mxu0 0
  %1332 = vmatpush1.bf16.msra.mxu0 0
  %1333 = vmatprep.subr.bf16.mxu0 0
  %1334 = vmatpush1.bf16.msra.mxu0 0
  %1335 = vmatprep.subr.bf16.mxu0 0
  %1336 = vmatpush1.bf16.msra.mxu0 0
  %1337 = vmatprep.subr.bf16.mxu0 0
  %1338 = vmatpush1.bf16.msra.mxu0 0
  %1339 = vmatprep.subr.bf16.mxu0 0
  %1340 = vmatpush1.bf16.msra.mxu0 0
  %1341 = vmatprep.subr.bf16.mxu0 0
  %1342 = vmatpush1.bf16.msra.mxu0 %v345
  %1343 = vmatprep.subr.bf16.mxu0 0
  %1344 = vmatpush1.bf16.msra.mxu0 %v344
  %1345 = vmatprep.subr.bf16.mxu0 0
  %1346 = vmatpush2.bf16.msra.mxu0 0
  %1347 = vmatprep.subr.bf16.mxu0 0
  %1348 = vmatpush2.bf16.msra.mxu0 0
  %1349 = vmatprep.subr.bf16.mxu0 0
  %1350 = vmatpush2.bf16.msra.mxu0 0
  %1351 = vmatprep.subr.bf16.mxu0 0
  %1352 = vmatpush2.bf16.msra.mxu0 0
  %1353 = vmatprep.subr.bf16.mxu0 0
  %1354 = vmatpush2.bf16.msra.mxu0 0
  %1355 = vmatprep.subr.bf16.mxu0 0
  %1356 = vmatpush2.bf16.msra.mxu0 0
  %1357 = vmatprep.subr.bf16.mxu0 0
  %1358 = vmatpush2.bf16.msra.mxu0 0
  %1359 = vmatprep.subr.bf16.mxu0 0
  %1360 = vmatpush2.bf16.msra.mxu0 0
  %1361 = vmatprep.mubr.bf16.mxu0 0
  %1362 = vmatmul.mubr.bf16.gmra.mxu0 %v1327
  %v1363 = vpop.f32.mrf.mxu0
  %v1364 = vadd.f32 0.0, %v1363
  %v1365 = vpop.f32.mrf.mxu0
  %v1366 = vpop.f32.mrf.mxu0
  %v1367 = vpop.f32.mrf.mxu0
  %1368 = vdwg.mxu0
  %v1369 = vadd.f32 %v1320, %v1364
  %v1370 = vxor.u32 %v1369, 2147483648
  %v1371 = vmul.f32 %v1370, 1.442695
  %v1372 = vpow.pop %v1371
  %v1373 = vadd.f32 %v1372, 1.0
  %v1374 = vrcp.pop %v1373
  %v1375 = vmul.f32 1.0, %v1374
  %v1376 = vadd.f32 %v1364, %v399
  %1378 = vrot.lane.b32.xlu0 %v1376, 64
  %v1379 = vpop.permute.xlu0 %1378
  %v1381 = vmul.f32 %v1375, %v1379
  %1383 = vrot.lane.b32.xlu0 %v1381, 64
  %v1384 = vpop.permute.xlu0 %1383
  %v1386 = vadd.f32 %v1320, %v1384
  %v1387 = vtanh.pop %v1386
  %v1388 = vsub.f32 1.0, %v1375
  %1390 = vrot.lane.b32.xlu0 %v1387, 96
  %v1391 = vpop.permute.xlu0 %1390
  %v1393 = vmul.f32 %v1388, %v1391
  %v1394 = vmul.f32 %v1375, %v1235
  %v1395 = vadd.f32 %v1393, %v1394
  %v1396 = vpack.c.bf16 %v1309, %v1309
  %1398 = vrot.lane.b32.xlu0 %v1396, 96
  %v1399 = vpop.permute.xlu0 %1398
  %v1401 = vsel %vm322, %v1399, 0
  %1403 = vmatprep.subr.bf16.mxu0 0
  %1404 = vmatpush1.bf16.msra.mxu0 0
  %1405 = vmatprep.subr.bf16.mxu0 0
  %1406 = vmatpush1.bf16.msra.mxu0 0
  %1407 = vmatprep.subr.bf16.mxu0 0
  %1408 = vmatpush1.bf16.msra.mxu0 0
  %1409 = vmatprep.subr.bf16.mxu0 0
  %1410 = vmatpush1.bf16.msra.mxu0 0
  %1411 = vmatprep.subr.bf16.mxu0 0
  %1412 = vmatpush1.bf16.msra.mxu0 0
  %1413 = vmatprep.subr.bf16.mxu0 0
  %1414 = vmatpush1.bf16.msra.mxu0 0
  %1415 = vmatprep.subr.bf16.mxu0 0
  %1416 = vmatpush1.bf16.msra.mxu0 %v434
  %1417 = vmatprep.subr.bf16.mxu0 0
  %1418 = vmatpush1.bf16.msra.mxu0 %v433
  %1419 = vmatprep.subr.bf16.mxu0 0
  %1420 = vmatpush2.bf16.msra.mxu0 0
  %1421 = vmatprep.subr.bf16.mxu0 0
  %1422 = vmatpush2.bf16.msra.mxu0 0
  %1423 = vmatprep.subr.bf16.mxu0 0
  %1424 = vmatpush2.bf16.msra.mxu0 0
  %1425 = vmatprep.subr.bf16.mxu0 0
  %1426 = vmatpush2.bf16.msra.mxu0 0
  %1427 = vmatprep.subr.bf16.mxu0 0
  %1428 = vmatpush2.bf16.msra.mxu0 0
  %1429 = vmatprep.subr.bf16.mxu0 0
  %1430 = vmatpush2.bf16.msra.mxu0 0
  %1431 = vmatprep.subr.bf16.mxu0 0
  %1432 = vmatpush2.bf16.msra.mxu0 0
  %1433 = vmatprep.subr.bf16.mxu0 0
  %1434 = vmatpush2.bf16.msra.mxu0 0
  %1435 = vmatprep.mubr.bf16.mxu0 0
  %1436 = vmatmul.mubr.bf16.gmra.mxu0 %v1401
  %v1437 = vpop.f32.mrf.mxu0
  %v1438 = vadd.f32 0.0, %v1437
  %v1439 = vpop.f32.mrf.mxu0
  %v1440 = vpop.f32.mrf.mxu0
  %v1441 = vpop.f32.mrf.mxu0
  %1442 = vdwg.mxu0
  %v1443 = vadd.f32 %v1321, %v1438
  %v1444 = vxor.u32 %v1443, 2147483648
  %v1445 = vmul.f32 %v1444, 1.442695
  %v1446 = vpow.pop %v1445
  %v1447 = vadd.f32 %v1446, 1.0
  %v1448 = vrcp.pop %v1447
  %v1449 = vmul.f32 1.0, %v1448
  %v1450 = vadd.f32 %v1438, %v488
  %1452 = vrot.lane.b32.xlu0 %v1450, 64
  %v1453 = vpop.permute.xlu0 %1452
  %v1455 = vmul.f32 %v1449, %v1453
  %1457 = vrot.lane.b32.xlu0 %v1455, 64
  %v1458 = vpop.permute.xlu0 %1457
  %v1460 = vadd.f32 %v1321, %v1458
  %v1461 = vtanh.pop %v1460
  %v1462 = vsub.f32 1.0, %v1449
  %1464 = vrot.lane.b32.xlu0 %v1461, 96
  %v1465 = vpop.permute.xlu0 %1464
  %v1467 = vmul.f32 %v1462, %v1465
  %v1468 = vmul.f32 %v1449, %v1309
  %v1469 = vadd.f32 %v1467, %v1468
  %1471 = vrot.lane.b32.xlu0 %v1395, 96
  %v1472 = vpop.permute.xlu0 %1471
  %1474 = vst.msk [vmem:[#allocation3 + $0x38] sm:$0xff] %vm322, %v1472
  %1476 = vrot.lane.b32.xlu0 %v1469, 96
  %v1477 = vpop.permute.xlu0 %1476
  %1479 = vst.msk [vmem:[%s328] sm:$0xff] %vm322, %v1477
  %v1480 = vld [vmem:[#allocation3] sm:$0xff]
  %v1481 = vld [vmem:[#allocation3 + $0x8] sm:$0xff]
  %v1482 = vld [vmem:[#allocation3 + $0x10] sm:$0xff]
  %v1483 = vld [vmem:[#allocation3 + $0x18] sm:$0xff]
  %v1484 = vld [vmem:[#allocation3 + $0x20] sm:$0xff]
  %v1485 = vld [vmem:[#allocation3 + $0x28] sm:$0xff]
  %v1486 = vld [vmem:[#allocation3 + $0x30] sm:$0xff]
  %v1487 = vld [vmem:[#allocation3 + $0x38] sm:$0xff]
  %v1488 = vpack.c.bf16 %v1481, %v1480
  %v1489 = vpack.c.bf16 %v1483, %v1482
  %v1490 = vpack.c.bf16 %v1485, %v1484
  %v1491 = vpack.c.bf16 %v1487, %v1486
  %v1492 = vld [vmem:[%s328] sm:$0xff]
  %v1493 = vld [vmem:[%s328 + $0x8] sm:$0xff]
  %v1494 = vld [vmem:[%s328 + $0x10] sm:$0xff]
  %v1495 = vld [vmem:[%s328 + $0x18] sm:$0xff]
  %v1496 = vld [vmem:[%s328 + $0x20] sm:$0xff]
  %v1497 = vld [vmem:[%s328 + $0x28] sm:$0xff]
  %v1498 = vld [vmem:[%s328 + $0x30] sm:$0xff]
  %v1499 = vld [vmem:[%s328 + $0x38] sm:$0xff]
  %v1500 = vpack.c.bf16 %v1493, %v1492
  %v1501 = vpack.c.bf16 %v1495, %v1494
  %v1502 = vpack.c.bf16 %v1497, %v1496
  %v1503 = vpack.c.bf16 %v1499, %v1498
  %v1504 = vld [vmem:[%s9] sm:$0xf]
  %v1505 = vld [vmem:[%s9 + $0x4] sm:$0xf]
  %v1506 = vld [vmem:[%s9 + $0x8] sm:$0xf]
  %v1507 = vld [vmem:[%s9 + $0xc] sm:$0xf]
  %v1508 = vld [vmem:[%s9 + $0x10] sm:$0xf]
  %v1509 = vld [vmem:[%s9 + $0x14] sm:$0xf]
  %v1510 = vld [vmem:[%s9 + $0x18] sm:$0xf]
  %v1511 = vld [vmem:[%s9 + $0x1c] sm:$0xf]
  %v1516 = vunpack.c.l.b16 %v1508
  %v1517 = vunpack.c.l.b16 %v1509
  %v1518 = vunpack.c.l.b16 %v1510
  %v1519 = vunpack.c.l.b16 %v1511
  %v1520 = vpack.c.b16 %v1517, %v1516
  %v1521 = vpack.c.b16 %v1519, %v1518
  %v1525 = vsel %vm322, %v1500, 0
  %v1528 = vsel %vm322, %v1501, 0
  %v1531 = vsel %vm322, %v1502, 0
  %v1534 = vsel %vm322, %v1503, 0
  %1536 = vmatprep.subr.bf16.mxu0 0
  %1537 = vmatpush1.bf16.msra.mxu0 0
  %1538 = vmatprep.subr.bf16.mxu0 0
  %1539 = vmatpush1.bf16.msra.mxu0 0
  %1540 = vmatprep.subr.bf16.mxu0 0
  %1541 = vmatpush1.bf16.msra.mxu0 0
  %1542 = vmatprep.subr.bf16.mxu0 0
  %1543 = vmatpush1.bf16.msra.mxu0 0
  %1544 = vmatprep.subr.bf16.mxu0 0
  %1545 = vmatpush1.bf16.msra.mxu0 0
  %1546 = vmatprep.subr.bf16.mxu0 0
  %1547 = vmatpush1.bf16.msra.mxu0 0
  %1548 = vmatprep.subr.bf16.mxu0 0
  %1549 = vmatpush1.bf16.msra.mxu0 %v1521
  %1550 = vmatprep.subr.bf16.mxu0 0
  %1551 = vmatpush1.bf16.msra.mxu0 %v1520
  %1552 = vmatprep.subr.bf16.mxu0 0
  %1553 = vmatpush2.bf16.msra.mxu0 0
  %1554 = vmatprep.subr.bf16.mxu0 0
  %1555 = vmatpush2.bf16.msra.mxu0 0
  %1556 = vmatprep.subr.bf16.mxu0 0
  %1557 = vmatpush2.bf16.msra.mxu0 0
  %1558 = vmatprep.subr.bf16.mxu0 0
  %1559 = vmatpush2.bf16.msra.mxu0 0
  %1560 = vmatprep.subr.bf16.mxu0 0
  %1561 = vmatpush2.bf16.msra.mxu0 0
  %1562 = vmatprep.subr.bf16.mxu0 0
  %1563 = vmatpush2.bf16.msra.mxu0 0
  %1564 = vmatprep.subr.bf16.mxu0 0
  %1565 = vmatpush2.bf16.msra.mxu0 0
  %1566 = vmatprep.subr.bf16.mxu0 0
  %1567 = vmatpush2.bf16.msra.mxu0 0
  %1568 = vmatprep.mubr.bf16.mxu0 0
  %1569 = vmatmul.mubr.bf16.gmra.mxu0 %v1525
  %v1570 = vpop.f32.mrf.mxu0
  %v1571 = vadd.f32 0.0, %v1570
  %v1572 = vpop.f32.mrf.mxu0
  %v1573 = vpop.f32.mrf.mxu0
  %v1574 = vadd.f32 0.0, %v1573
  %v1575 = vpop.f32.mrf.mxu0
  %1576 = vmatprep.mubr.bf16.mxu0 0
  %1577 = vmatmul.mubr.bf16.gmra.mxu0 %v1528
  %v1578 = vpop.f32.mrf.mxu0
  %v1579 = vadd.f32 0.0, %v1578
  %v1580 = vpop.f32.mrf.mxu0
  %v1581 = vpop.f32.mrf.mxu0
  %v1582 = vadd.f32 0.0, %v1581
  %v1583 = vpop.f32.mrf.mxu0
  %1584 = vmatprep.mubr.bf16.mxu0 0
  %1585 = vmatmul.mubr.bf16.gmra.mxu0 %v1531
  %v1586 = vpop.f32.mrf.mxu0
  %v1587 = vadd.f32 0.0, %v1586
  %v1588 = vpop.f32.mrf.mxu0
  %v1589 = vpop.f32.mrf.mxu0
  %v1590 = vadd.f32 0.0, %v1589
  %v1591 = vpop.f32.mrf.mxu0
  %1592 = vmatprep.mubr.bf16.mxu0 0
  %1593 = vmatmul.mubr.bf16.gmra.mxu0 %v1534
  %v1594 = vpop.f32.mrf.mxu0
  %v1595 = vadd.f32 0.0, %v1594
  %v1596 = vpop.f32.mrf.mxu0
  %v1597 = vpop.f32.mrf.mxu0
  %v1598 = vadd.f32 0.0, %v1597
  %v1599 = vpop.f32.mrf.mxu0
  %1600 = vdwg.mxu0
  %v1605 = vunpack.c.l.b16 %v1504
  %v1606 = vunpack.c.l.b16 %v1505
  %v1607 = vunpack.c.l.b16 %v1506
  %v1608 = vunpack.c.l.b16 %v1507
  %v1609 = vpack.c.b16 %v1606, %v1605
  %v1610 = vpack.c.b16 %v1608, %v1607
  %v1614 = vsel %vm322, %v1488, 0
  %v1617 = vsel %vm322, %v1489, 0
  %v1620 = vsel %vm322, %v1490, 0
  %v1623 = vsel %vm322, %v1491, 0
  %1625 = vmatprep.subr.bf16.mxu0 0
  %1626 = vmatpush1.bf16.msra.mxu0 0
  %1627 = vmatprep.subr.bf16.mxu0 0
  %1628 = vmatpush1.bf16.msra.mxu0 0
  %1629 = vmatprep.subr.bf16.mxu0 0
  %1630 = vmatpush1.bf16.msra.mxu0 0
  %1631 = vmatprep.subr.bf16.mxu0 0
  %1632 = vmatpush1.bf16.msra.mxu0 0
  %1633 = vmatprep.subr.bf16.mxu0 0
  %1634 = vmatpush1.bf16.msra.mxu0 0
  %1635 = vmatprep.subr.bf16.mxu0 0
  %1636 = vmatpush1.bf16.msra.mxu0 0
  %1637 = vmatprep.subr.bf16.mxu0 0
  %1638 = vmatpush1.bf16.msra.mxu0 %v1610
  %1639 = vmatprep.subr.bf16.mxu0 0
  %1640 = vmatpush1.bf16.msra.mxu0 %v1609
  %1641 = vmatprep.subr.bf16.mxu0 0
  %1642 = vmatpush2.bf16.msra.mxu0 0
  %1643 = vmatprep.subr.bf16.mxu0 0
  %1644 = vmatpush2.bf16.msra.mxu0 0
  %1645 = vmatprep.subr.bf16.mxu0 0
  %1646 = vmatpush2.bf16.msra.mxu0 0
  %1647 = vmatprep.subr.bf16.mxu0 0
  %1648 = vmatpush2.bf16.msra.mxu0 0
  %1649 = vmatprep.subr.bf16.mxu0 0
  %1650 = vmatpush2.bf16.msra.mxu0 0
  %1651 = vmatprep.subr.bf16.mxu0 0
  %1652 = vmatpush2.bf16.msra.mxu0 0
  %1653 = vmatprep.subr.bf16.mxu0 0
  %1654 = vmatpush2.bf16.msra.mxu0 0
  %1655 = vmatprep.subr.bf16.mxu0 0
  %1656 = vmatpush2.bf16.msra.mxu0 0
  %1657 = vmatprep.mubr.bf16.mxu0 0
  %1658 = vmatmul.mubr.bf16.gmra.mxu0 %v1614
  %v1659 = vpop.f32.mrf.mxu0
  %v1660 = vadd.f32 %v1571, %v1659
  %v1661 = vpop.f32.mrf.mxu0
  %v1662 = vpop.f32.mrf.mxu0
  %v1663 = vadd.f32 %v1574, %v1662
  %v1664 = vpop.f32.mrf.mxu0
  %1665 = vmatprep.mubr.bf16.mxu0 0
  %1666 = vmatmul.mubr.bf16.gmra.mxu0 %v1617
  %v1667 = vpop.f32.mrf.mxu0
  %v1668 = vadd.f32 %v1579, %v1667
  %v1669 = vpop.f32.mrf.mxu0
  %v1670 = vpop.f32.mrf.mxu0
  %v1671 = vadd.f32 %v1582, %v1670
  %v1672 = vpop.f32.mrf.mxu0
  %1673 = vmatprep.mubr.bf16.mxu0 0
  %1674 = vmatmul.mubr.bf16.gmra.mxu0 %v1620
  %v1675 = vpop.f32.mrf.mxu0
  %v1676 = vadd.f32 %v1587, %v1675
  %v1677 = vpop.f32.mrf.mxu0
  %v1678 = vpop.f32.mrf.mxu0
  %v1679 = vadd.f32 %v1590, %v1678
  %v1680 = vpop.f32.mrf.mxu0
  %1681 = vmatprep.mubr.bf16.mxu0 0
  %1682 = vmatmul.mubr.bf16.gmra.mxu0 %v1623
  %v1683 = vpop.f32.mrf.mxu0
  %v1684 = vadd.f32 %v1595, %v1683
  %v1685 = vpop.f32.mrf.mxu0
  %v1686 = vpop.f32.mrf.mxu0
  %v1687 = vadd.f32 %v1598, %v1686
  %v1688 = vpop.f32.mrf.mxu0
  %1689 = vdwg.mxu0
  %v1690 = vld [vmem:[%s10] sm:$0x1]
  %v1692 = vlaneseq
  %v1693 = vshrl.u32 %v1692, 7
  %v1694 = vsub.s32 0, %v1693
  %v1695 = vrot.slane %v1690, %v1694
  %v1697 = vadd.f32 %v1660, %v1695
  %v1698 = vadd.f32 %v1663, %v1695
  %v1699 = vadd.f32 %v1668, %v1695
  %v1700 = vadd.f32 %v1671, %v1695
  %v1701 = vadd.f32 %v1676, %v1695
  %v1702 = vadd.f32 %v1679, %v1695
  %v1703 = vadd.f32 %v1684, %v1695
  %v1704 = vadd.f32 %v1687, %v1695
  %1705 = vst.msk [vmem:[#allocation2] sm:$0xff] %vm162, %v1697
  %1706 = vst.msk [vmem:[#allocation2 + $0x8] sm:$0xff] %vm162, %v1698
  %1707 = vst.msk [vmem:[#allocation2 + $0x10] sm:$0xff] %vm162, %v1699
  %1708 = vst.msk [vmem:[#allocation2 + $0x18] sm:$0xff] %vm162, %v1700
  %1709 = vst.msk [vmem:[#allocation2 + $0x20] sm:$0xff] %vm162, %v1701
  %1710 = vst.msk [vmem:[#allocation2 + $0x28] sm:$0xff] %vm162, %v1702
  %1711 = vst.msk [vmem:[#allocation2 + $0x30] sm:$0xff] %vm162, %v1703
  %1712 = vst.msk [vmem:[#allocation2 + $0x38] sm:$0xff] %vm162, %v1704
  %v1713 = vld [vmem:[%s13] sm:$0xf]
  %v1714 = vld [vmem:[%s13 + $0x4] sm:$0xf]
  %v1715 = vld [vmem:[%s13 + $0x8] sm:$0xf]
  %v1716 = vld [vmem:[%s13 + $0xc] sm:$0xf]
  %v1717 = vld [vmem:[%s13 + $0x10] sm:$0xf]
  %v1718 = vld [vmem:[%s13 + $0x14] sm:$0xf]
  %v1719 = vld [vmem:[%s13 + $0x18] sm:$0xf]
  %v1720 = vld [vmem:[%s13 + $0x1c] sm:$0xf]
  %v1722 = vrot.slane %v1503, 4
  %v1727 = vunpack.c.l.b16 %v1717
  %v1728 = vunpack.c.l.b16 %v1718
  %v1729 = vunpack.c.l.b16 %v1719
  %v1730 = vunpack.c.l.b16 %v1720
  %v1731 = vpack.c.b16 %v1728, %v1727
  %v1732 = vpack.c.b16 %v1730, %v1729
  %v1736 = vsel %vm322, %v1722, 0
  %1738 = vmatprep.subr.bf16.mxu0 0
  %1739 = vmatpush1.bf16.msra.mxu0 0
  %1740 = vmatprep.subr.bf16.mxu0 0
  %1741 = vmatpush1.bf16.msra.mxu0 0
  %1742 = vmatprep.subr.bf16.mxu0 0
  %1743 = vmatpush1.bf16.msra.mxu0 0
  %1744 = vmatprep.subr.bf16.mxu0 0
  %1745 = vmatpush1.bf16.msra.mxu0 0
  %1746 = vmatprep.subr.bf16.mxu0 0
  %1747 = vmatpush1.bf16.msra.mxu0 0
  %1748 = vmatprep.subr.bf16.mxu0 0
  %1749 = vmatpush1.bf16.msra.mxu0 0
  %1750 = vmatprep.subr.bf16.mxu0 0
  %1751 = vmatpush1.bf16.msra.mxu0 %v1732
  %1752 = vmatprep.subr.bf16.mxu0 0
  %1753 = vmatpush1.bf16.msra.mxu0 %v1731
  %1754 = vmatprep.subr.bf16.mxu0 0
  %1755 = vmatpush2.bf16.msra.mxu0 0
  %1756 = vmatprep.subr.bf16.mxu0 0
  %1757 = vmatpush2.bf16.msra.mxu0 0
  %1758 = vmatprep.subr.bf16.mxu0 0
  %1759 = vmatpush2.bf16.msra.mxu0 0
  %1760 = vmatprep.subr.bf16.mxu0 0
  %1761 = vmatpush2.bf16.msra.mxu0 0
  %1762 = vmatprep.subr.bf16.mxu0 0
  %1763 = vmatpush2.bf16.msra.mxu0 0
  %1764 = vmatprep.subr.bf16.mxu0 0
  %1765 = vmatpush2.bf16.msra.mxu0 0
  %1766 = vmatprep.subr.bf16.mxu0 0
  %1767 = vmatpush2.bf16.msra.mxu0 0
  %1768 = vmatprep.subr.bf16.mxu0 0
  %1769 = vmatpush2.bf16.msra.mxu0 0
  %1770 = vmatprep.mubr.bf16.mxu0 0
  %1771 = vmatmul.mubr.bf16.gmra.mxu0 %v1736
  %v1772 = vpop.f32.mrf.mxu0
  %v1773 = vadd.f32 0.0, %v1772
  %v1774 = vpop.f32.mrf.mxu0
  %v1775 = vpop.f32.mrf.mxu0
  %v1776 = vpop.f32.mrf.mxu0
  %1777 = vdwg.mxu0
  %v1779 = vrot.slane %v1491, 4
  %v1784 = vunpack.c.l.b16 %v1713
  %v1785 = vunpack.c.l.b16 %v1714
  %v1786 = vunpack.c.l.b16 %v1715
  %v1787 = vunpack.c.l.b16 %v1716
  %v1788 = vpack.c.b16 %v1785, %v1784
  %v1789 = vpack.c.b16 %v1787, %v1786
  %v1793 = vsel %vm322, %v1779, 0
  %1795 = vmatprep.subr.bf16.mxu0 0
  %1796 = vmatpush1.bf16.msra.mxu0 0
  %1797 = vmatprep.subr.bf16.mxu0 0
  %1798 = vmatpush1.bf16.msra.mxu0 0
  %1799 = vmatprep.subr.bf16.mxu0 0
  %1800 = vmatpush1.bf16.msra.mxu0 0
  %1801 = vmatprep.subr.bf16.mxu0 0
  %1802 = vmatpush1.bf16.msra.mxu0 0
  %1803 = vmatprep.subr.bf16.mxu0 0
  %1804 = vmatpush1.bf16.msra.mxu0 0
  %1805 = vmatprep.subr.bf16.mxu0 0
  %1806 = vmatpush1.bf16.msra.mxu0 0
  %1807 = vmatprep.subr.bf16.mxu0 0
  %1808 = vmatpush1.bf16.msra.mxu0 %v1789
  %1809 = vmatprep.subr.bf16.mxu0 0
  %1810 = vmatpush1.bf16.msra.mxu0 %v1788
  %1811 = vmatprep.subr.bf16.mxu0 0
  %1812 = vmatpush2.bf16.msra.mxu0 0
  %1813 = vmatprep.subr.bf16.mxu0 0
  %1814 = vmatpush2.bf16.msra.mxu0 0
  %1815 = vmatprep.subr.bf16.mxu0 0
  %1816 = vmatpush2.bf16.msra.mxu0 0
  %1817 = vmatprep.subr.bf16.mxu0 0
  %1818 = vmatpush2.bf16.msra.mxu0 0
  %1819 = vmatprep.subr.bf16.mxu0 0
  %1820 = vmatpush2.bf16.msra.mxu0 0
  %1821 = vmatprep.subr.bf16.mxu0 0
  %1822 = vmatpush2.bf16.msra.mxu0 0
  %1823 = vmatprep.subr.bf16.mxu0 0
  %1824 = vmatpush2.bf16.msra.mxu0 0
  %1825 = vmatprep.subr.bf16.mxu0 0
  %1826 = vmatpush2.bf16.msra.mxu0 0
  %1827 = vmatprep.mubr.bf16.mxu0 0
  %1828 = vmatmul.mubr.bf16.gmra.mxu0 %v1793
  %v1829 = vpop.f32.mrf.mxu0
  %v1830 = vadd.f32 %v1773, %v1829
  %v1831 = vpop.f32.mrf.mxu0
  %v1832 = vpop.f32.mrf.mxu0
  %v1833 = vpop.f32.mrf.mxu0
  %1834 = vdwg.mxu0
  %v1835 = vld [vmem:[%s14] sm:$0x1]
  %v1837 = vlaneseq
  %v1838 = vshrl.u32 %v1837, 7
  %v1839 = vsub.s32 0, %v1838
  %v1840 = vrot.slane %v1835, %v1839
  %v1842 = vadd.f32 %v1830, %v1840
  %v1843 = vld [vmem:[%s15] sm:$0x1]
  %v1844 = vxor.u32 %v1842, 2147483648
  %v1845 = vmul.f32 %v1844, 1.442695
  %v1846 = vpow.pop %v1845
  %v1847 = vadd.f32 %v1846, 1.0
  %v1848 = vrcp.pop %v1847
  %v1849 = vmul.f32 1.0, %v1848
  %v1851 = vlaneseq
  %v1852 = vshrl.u32 %v1851, 7
  %v1853 = vsub.s32 0, %v1852
  %v1854 = vrot.slane %v1843, %v1853
  %v1856 = vmul.f32 %v1849, %v1854
  %1858 = vrot.lane.b32.xlu0 %v1856, 64
  %v1859 = vpop.permute.xlu0 %1858
  %v1861 = vadd.f32 %v1842, %v1859
  %v1862 = vtanh.pop %v1861
  %v1863 = vsub.f32 1.0, %v1849
  %1865 = vrot.lane.b32.xlu0 %v1862, 96
  %v1866 = vpop.permute.xlu0 %1865
  %v1868 = vmul.f32 %v1863, %v1866
  %v1869 = vld [vmem:[%s11] sm:$0xf]
  %v1870 = vld [vmem:[%s11 + $0x4] sm:$0xf]
  %v1871 = vld [vmem:[%s11 + $0x8] sm:$0xf]
  %v1872 = vld [vmem:[%s11 + $0xc] sm:$0xf]
  %v1873 = vld [vmem:[%s12] sm:$0x1]
  %v1874 = vld [vmem:[#allocation2] sm:$0xff]
  %v1875 = vxor.u32 %v1874, 2147483648
  %v1876 = vmul.f32 %v1875, 1.442695
  %v1877 = vpow.pop %v1876
  %v1878 = vadd.f32 %v1877, 1.0
  %v1879 = vrcp.pop %v1878
  %v1880 = vmul.f32 1.0, %v1879
  %v1882 = vlaneseq
  %v1883 = vshrl.u32 %v1882, 7
  %v1884 = vsub.s32 0, %v1883
  %v1885 = vrot.slane %v1873, %v1884
  %v1887 = vmul.f32 %v1880, %v1885
  %1889 = vrot.lane.b32.xlu0 %v1887, 64
  %v1890 = vpop.permute.xlu0 %1889
  %v1892 = vadd.f32 %v1874, %v1890
  %v1893 = vtanh.pop %v1892
  %v1894 = vsub.f32 1.0, %v1880
  %1896 = vrot.lane.b32.xlu0 %v1893, 96
  %v1897 = vpop.permute.xlu0 %1896
  %v1899 = vmul.f32 %v1894, %v1897
  %v1900 = vld [vmem:[#allocation2 + $0x8] sm:$0xff]
  %v1901 = vpack.c.bf16 %v1899, %v1899
  %1903 = vrot.lane.b32.xlu0 %v1901, 96
  %v1904 = vpop.permute.xlu0 %1903
  %v1909 = vunpack.c.l.b16 %v1869
  %v1910 = vunpack.c.l.b16 %v1870
  %v1911 = vunpack.c.l.b16 %v1871
  %v1912 = vunpack.c.l.b16 %v1872
  %v1913 = vpack.c.b16 %v1910, %v1909
  %v1914 = vpack.c.b16 %v1912, %v1911
  %v1918 = vsel %vm322, %v1904, 0
  %1920 = vmatprep.subr.bf16.mxu0 0
  %1921 = vmatpush1.bf16.msra.mxu0 0
  %1922 = vmatprep.subr.bf16.mxu0 0
  %1923 = vmatpush1.bf16.msra.mxu0 0
  %1924 = vmatprep.subr.bf16.mxu0 0
  %1925 = vmatpush1.bf16.msra.mxu0 0
  %1926 = vmatprep.subr.bf16.mxu0 0
  %1927 = vmatpush1.bf16.msra.mxu0 0
  %1928 = vmatprep.subr.bf16.mxu0 0
  %1929 = vmatpush1.bf16.msra.mxu0 0
  %1930 = vmatprep.subr.bf16.mxu0 0
  %1931 = vmatpush1.bf16.msra.mxu0 0
  %1932 = vmatprep.subr.bf16.mxu0 0
  %1933 = vmatpush1.bf16.msra.mxu0 %v1914
  %1934 = vmatprep.subr.bf16.mxu0 0
  %1935 = vmatpush1.bf16.msra.mxu0 %v1913
  %1936 = vmatprep.subr.bf16.mxu0 0
  %1937 = vmatpush2.bf16.msra.mxu0 0
  %1938 = vmatprep.subr.bf16.mxu0 0
  %1939 = vmatpush2.bf16.msra.mxu0 0
  %1940 = vmatprep.subr.bf16.mxu0 0
  %1941 = vmatpush2.bf16.msra.mxu0 0
  %1942 = vmatprep.subr.bf16.mxu0 0
  %1943 = vmatpush2.bf16.msra.mxu0 0
  %1944 = vmatprep.subr.bf16.mxu0 0
  %1945 = vmatpush2.bf16.msra.mxu0 0
  %1946 = vmatprep.subr.bf16.mxu0 0
  %1947 = vmatpush2.bf16.msra.mxu0 0
  %1948 = vmatprep.subr.bf16.mxu0 0
  %1949 = vmatpush2.bf16.msra.mxu0 0
  %1950 = vmatprep.subr.bf16.mxu0 0
  %1951 = vmatpush2.bf16.msra.mxu0 0
  %1952 = vmatprep.mubr.bf16.mxu0 0
  %1953 = vmatmul.mubr.bf16.gmra.mxu0 %v1918
  %v1954 = vpop.f32.mrf.mxu0
  %v1955 = vadd.f32 0.0, %v1954
  %v1956 = vpop.f32.mrf.mxu0
  %v1957 = vpop.f32.mrf.mxu0
  %v1958 = vpop.f32.mrf.mxu0
  %1959 = vdwg.mxu0
  %v1960 = vadd.f32 %v1900, %v1955
  %v1961 = vxor.u32 %v1960, 2147483648
  %v1962 = vmul.f32 %v1961, 1.442695
  %v1963 = vpow.pop %v1962
  %v1964 = vadd.f32 %v1963, 1.0
  %v1965 = vrcp.pop %v1964
  %v1966 = vmul.f32 1.0, %v1965
  %1967 = vrot.lane.b32.xlu0 %v1885, 64
  %v1968 = vpop.permute.xlu0 %1967
  %v1970 = vadd.f32 %v1955, %v1968
  %1972 = vrot.lane.b32.xlu0 %v1970, 64
  %v1973 = vpop.permute.xlu0 %1972
  %v1975 = vmul.f32 %v1966, %v1973
  %1977 = vrot.lane.b32.xlu0 %v1975, 64
  %v1978 = vpop.permute.xlu0 %1977
  %v1980 = vadd.f32 %v1900, %v1978
  %v1981 = vtanh.pop %v1980
  %v1982 = vsub.f32 1.0, %v1966
  %1984 = vrot.lane.b32.xlu0 %v1981, 96
  %v1985 = vpop.permute.xlu0 %1984
  %v1987 = vmul.f32 %v1982, %v1985
  %v1988 = vmul.f32 %v1966, %v1899
  %v1989 = vadd.f32 %v1987, %v1988
  %v1990 = vld [vmem:[#allocation2 + $0x10] sm:$0xff]
  %v1991 = vpack.c.bf16 %v1989, %v1989
  %1993 = vrot.lane.b32.xlu0 %v1991, 96
  %v1994 = vpop.permute.xlu0 %1993
  %v1996 = vsel %vm322, %v1994, 0
  %1998 = vmatprep.subr.bf16.mxu0 0
  %1999 = vmatpush1.bf16.msra.mxu0 0
  %2000 = vmatprep.subr.bf16.mxu0 0
  %2001 = vmatpush1.bf16.msra.mxu0 0
  %2002 = vmatprep.subr.bf16.mxu0 0
  %2003 = vmatpush1.bf16.msra.mxu0 0
  %2004 = vmatprep.subr.bf16.mxu0 0
  %2005 = vmatpush1.bf16.msra.mxu0 0
  %2006 = vmatprep.subr.bf16.mxu0 0
  %2007 = vmatpush1.bf16.msra.mxu0 0
  %2008 = vmatprep.subr.bf16.mxu0 0
  %2009 = vmatpush1.bf16.msra.mxu0 0
  %2010 = vmatprep.subr.bf16.mxu0 0
  %2011 = vmatpush1.bf16.msra.mxu0 %v1914
  %2012 = vmatprep.subr.bf16.mxu0 0
  %2013 = vmatpush1.bf16.msra.mxu0 %v1913
  %2014 = vmatprep.subr.bf16.mxu0 0
  %2015 = vmatpush2.bf16.msra.mxu0 0
  %2016 = vmatprep.subr.bf16.mxu0 0
  %2017 = vmatpush2.bf16.msra.mxu0 0
  %2018 = vmatprep.subr.bf16.mxu0 0
  %2019 = vmatpush2.bf16.msra.mxu0 0
  %2020 = vmatprep.subr.bf16.mxu0 0
  %2021 = vmatpush2.bf16.msra.mxu0 0
  %2022 = vmatprep.subr.bf16.mxu0 0
  %2023 = vmatpush2.bf16.msra.mxu0 0
  %2024 = vmatprep.subr.bf16.mxu0 0
  %2025 = vmatpush2.bf16.msra.mxu0 0
  %2026 = vmatprep.subr.bf16.mxu0 0
  %2027 = vmatpush2.bf16.msra.mxu0 0
  %2028 = vmatprep.subr.bf16.mxu0 0
  %2029 = vmatpush2.bf16.msra.mxu0 0
  %2030 = vmatprep.mubr.bf16.mxu0 0
  %2031 = vmatmul.mubr.bf16.gmra.mxu0 %v1996
  %v2032 = vpop.f32.mrf.mxu0
  %v2033 = vadd.f32 0.0, %v2032
  %v2034 = vpop.f32.mrf.mxu0
  %v2035 = vpop.f32.mrf.mxu0
  %v2036 = vpop.f32.mrf.mxu0
  %2037 = vdwg.mxu0
  %v2038 = vadd.f32 %v1990, %v2033
  %v2039 = vxor.u32 %v2038, 2147483648
  %v2040 = vmul.f32 %v2039, 1.442695
  %v2041 = vpow.pop %v2040
  %v2042 = vadd.f32 %v2041, 1.0
  %v2043 = vrcp.pop %v2042
  %v2044 = vmul.f32 1.0, %v2043
  %v2045 = vadd.f32 %v2033, %v1968
  %2047 = vrot.lane.b32.xlu0 %v2045, 64
  %v2048 = vpop.permute.xlu0 %2047
  %v2050 = vmul.f32 %v2044, %v2048
  %2052 = vrot.lane.b32.xlu0 %v2050, 64
  %v2053 = vpop.permute.xlu0 %2052
  %v2055 = vadd.f32 %v1990, %v2053
  %v2056 = vtanh.pop %v2055
  %v2057 = vsub.f32 1.0, %v2044
  %2059 = vrot.lane.b32.xlu0 %v2056, 96
  %v2060 = vpop.permute.xlu0 %2059
  %v2062 = vmul.f32 %v2057, %v2060
  %v2063 = vmul.f32 %v2044, %v1989
  %v2064 = vadd.f32 %v2062, %v2063
  %v2065 = vld [vmem:[#allocation2 + $0x18] sm:$0xff]
  %v2066 = vpack.c.bf16 %v2064, %v2064
  %2068 = vrot.lane.b32.xlu0 %v2066, 96
  %v2069 = vpop.permute.xlu0 %2068
  %v2071 = vsel %vm322, %v2069, 0
  %2073 = vmatprep.subr.bf16.mxu0 0
  %2074 = vmatpush1.bf16.msra.mxu0 0
  %2075 = vmatprep.subr.bf16.mxu0 0
  %2076 = vmatpush1.bf16.msra.mxu0 0
  %2077 = vmatprep.subr.bf16.mxu0 0
  %2078 = vmatpush1.bf16.msra.mxu0 0
  %2079 = vmatprep.subr.bf16.mxu0 0
  %2080 = vmatpush1.bf16.msra.mxu0 0
  %2081 = vmatprep.subr.bf16.mxu0 0
  %2082 = vmatpush1.bf16.msra.mxu0 0
  %2083 = vmatprep.subr.bf16.mxu0 0
  %2084 = vmatpush1.bf16.msra.mxu0 0
  %2085 = vmatprep.subr.bf16.mxu0 0
  %2086 = vmatpush1.bf16.msra.mxu0 %v1914
  %2087 = vmatprep.subr.bf16.mxu0 0
  %2088 = vmatpush1.bf16.msra.mxu0 %v1913
  %2089 = vmatprep.subr.bf16.mxu0 0
  %2090 = vmatpush2.bf16.msra.mxu0 0
  %2091 = vmatprep.subr.bf16.mxu0 0
  %2092 = vmatpush2.bf16.msra.mxu0 0
  %2093 = vmatprep.subr.bf16.mxu0 0
  %2094 = vmatpush2.bf16.msra.mxu0 0
  %2095 = vmatprep.subr.bf16.mxu0 0
  %2096 = vmatpush2.bf16.msra.mxu0 0
  %2097 = vmatprep.subr.bf16.mxu0 0
  %2098 = vmatpush2.bf16.msra.mxu0 0
  %2099 = vmatprep.subr.bf16.mxu0 0
  %2100 = vmatpush2.bf16.msra.mxu0 0
  %2101 = vmatprep.subr.bf16.mxu0 0
  %2102 = vmatpush2.bf16.msra.mxu0 0
  %2103 = vmatprep.subr.bf16.mxu0 0
  %2104 = vmatpush2.bf16.msra.mxu0 0
  %2105 = vmatprep.mubr.bf16.mxu0 0
  %2106 = vmatmul.mubr.bf16.gmra.mxu0 %v2071
  %v2107 = vpop.f32.mrf.mxu0
  %v2108 = vadd.f32 0.0, %v2107
  %v2109 = vpop.f32.mrf.mxu0
  %v2110 = vpop.f32.mrf.mxu0
  %v2111 = vpop.f32.mrf.mxu0
  %2112 = vdwg.mxu0
  %v2113 = vadd.f32 %v2065, %v2108
  %v2114 = vxor.u32 %v2113, 2147483648
  %v2115 = vmul.f32 %v2114, 1.442695
  %v2116 = vpow.pop %v2115
  %v2117 = vadd.f32 %v2116, 1.0
  %v2118 = vrcp.pop %v2117
  %v2119 = vmul.f32 1.0, %v2118
  %v2120 = vadd.f32 %v2108, %v1968
  %2122 = vrot.lane.b32.xlu0 %v2120, 64
  %v2123 = vpop.permute.xlu0 %2122
  %v2125 = vmul.f32 %v2119, %v2123
  %2127 = vrot.lane.b32.xlu0 %v2125, 64
  %v2128 = vpop.permute.xlu0 %2127
  %v2130 = vadd.f32 %v2065, %v2128
  %v2131 = vtanh.pop %v2130
  %v2132 = vsub.f32 1.0, %v2119
  %2134 = vrot.lane.b32.xlu0 %v2131, 96
  %v2135 = vpop.permute.xlu0 %2134
  %v2137 = vmul.f32 %v2132, %v2135
  %v2138 = vmul.f32 %v2119, %v2064
  %v2139 = vadd.f32 %v2137, %v2138
  %v2140 = vld [vmem:[#allocation2 + $0x20] sm:$0xff]
  %v2141 = vpack.c.bf16 %v2139, %v2139
  %2143 = vrot.lane.b32.xlu0 %v2141, 96
  %v2144 = vpop.permute.xlu0 %2143
  %v2146 = vsel %vm322, %v2144, 0
  %2148 = vmatprep.subr.bf16.mxu0 0
  %2149 = vmatpush1.bf16.msra.mxu0 0
  %2150 = vmatprep.subr.bf16.mxu0 0
  %2151 = vmatpush1.bf16.msra.mxu0 0
  %2152 = vmatprep.subr.bf16.mxu0 0
  %2153 = vmatpush1.bf16.msra.mxu0 0
  %2154 = vmatprep.subr.bf16.mxu0 0
  %2155 = vmatpush1.bf16.msra.mxu0 0
  %2156 = vmatprep.subr.bf16.mxu0 0
  %2157 = vmatpush1.bf16.msra.mxu0 0
  %2158 = vmatprep.subr.bf16.mxu0 0
  %2159 = vmatpush1.bf16.msra.mxu0 0
  %2160 = vmatprep.subr.bf16.mxu0 0
  %2161 = vmatpush1.bf16.msra.mxu0 %v1914
  %2162 = vmatprep.subr.bf16.mxu0 0
  %2163 = vmatpush1.bf16.msra.mxu0 %v1913
  %2164 = vmatprep.subr.bf16.mxu0 0
  %2165 = vmatpush2.bf16.msra.mxu0 0
  %2166 = vmatprep.subr.bf16.mxu0 0
  %2167 = vmatpush2.bf16.msra.mxu0 0
  %2168 = vmatprep.subr.bf16.mxu0 0
  %2169 = vmatpush2.bf16.msra.mxu0 0
  %2170 = vmatprep.subr.bf16.mxu0 0
  %2171 = vmatpush2.bf16.msra.mxu0 0
  %2172 = vmatprep.subr.bf16.mxu0 0
  %2173 = vmatpush2.bf16.msra.mxu0 0
  %2174 = vmatprep.subr.bf16.mxu0 0
  %2175 = vmatpush2.bf16.msra.mxu0 0
  %2176 = vmatprep.subr.bf16.mxu0 0
  %2177 = vmatpush2.bf16.msra.mxu0 0
  %2178 = vmatprep.subr.bf16.mxu0 0
  %2179 = vmatpush2.bf16.msra.mxu0 0
  %2180 = vmatprep.mubr.bf16.mxu0 0
  %2181 = vmatmul.mubr.bf16.gmra.mxu0 %v2146
  %v2182 = vpop.f32.mrf.mxu0
  %v2183 = vadd.f32 0.0, %v2182
  %v2184 = vpop.f32.mrf.mxu0
  %v2185 = vpop.f32.mrf.mxu0
  %v2186 = vpop.f32.mrf.mxu0
  %2187 = vdwg.mxu0
  %v2188 = vadd.f32 %v2140, %v2183
  %v2189 = vxor.u32 %v2188, 2147483648
  %v2190 = vmul.f32 %v2189, 1.442695
  %v2191 = vpow.pop %v2190
  %v2192 = vadd.f32 %v2191, 1.0
  %v2193 = vrcp.pop %v2192
  %v2194 = vmul.f32 1.0, %v2193
  %v2195 = vadd.f32 %v2183, %v1968
  %2197 = vrot.lane.b32.xlu0 %v2195, 64
  %v2198 = vpop.permute.xlu0 %2197
  %v2200 = vmul.f32 %v2194, %v2198
  %2202 = vrot.lane.b32.xlu0 %v2200, 64
  %v2203 = vpop.permute.xlu0 %2202
  %v2205 = vadd.f32 %v2140, %v2203
  %v2206 = vtanh.pop %v2205
  %v2207 = vsub.f32 1.0, %v2194
  %2209 = vrot.lane.b32.xlu0 %v2206, 96
  %v2210 = vpop.permute.xlu0 %2209
  %v2212 = vmul.f32 %v2207, %v2210
  %v2213 = vmul.f32 %v2194, %v2139
  %v2214 = vadd.f32 %v2212, %v2213
  %v2215 = vld [vmem:[#allocation2 + $0x28] sm:$0xff]
  %v2216 = vpack.c.bf16 %v2214, %v2214
  %2218 = vrot.lane.b32.xlu0 %v2216, 96
  %v2219 = vpop.permute.xlu0 %2218
  %v2221 = vsel %vm322, %v2219, 0
  %2223 = vmatprep.subr.bf16.mxu0 0
  %2224 = vmatpush1.bf16.msra.mxu0 0
  %2225 = vmatprep.subr.bf16.mxu0 0
  %2226 = vmatpush1.bf16.msra.mxu0 0
  %2227 = vmatprep.subr.bf16.mxu0 0
  %2228 = vmatpush1.bf16.msra.mxu0 0
  %2229 = vmatprep.subr.bf16.mxu0 0
  %2230 = vmatpush1.bf16.msra.mxu0 0
  %2231 = vmatprep.subr.bf16.mxu0 0
  %2232 = vmatpush1.bf16.msra.mxu0 0
  %2233 = vmatprep.subr.bf16.mxu0 0
  %2234 = vmatpush1.bf16.msra.mxu0 0
  %2235 = vmatprep.subr.bf16.mxu0 0
  %2236 = vmatpush1.bf16.msra.mxu0 %v1914
  %2237 = vmatprep.subr.bf16.mxu0 0
  %2238 = vmatpush1.bf16.msra.mxu0 %v1913
  %2239 = vmatprep.subr.bf16.mxu0 0
  %2240 = vmatpush2.bf16.msra.mxu0 0
  %2241 = vmatprep.subr.bf16.mxu0 0
  %2242 = vmatpush2.bf16.msra.mxu0 0
  %2243 = vmatprep.subr.bf16.mxu0 0
  %2244 = vmatpush2.bf16.msra.mxu0 0
  %2245 = vmatprep.subr.bf16.mxu0 0
  %2246 = vmatpush2.bf16.msra.mxu0 0
  %2247 = vmatprep.subr.bf16.mxu0 0
  %2248 = vmatpush2.bf16.msra.mxu0 0
  %2249 = vmatprep.subr.bf16.mxu0 0
  %2250 = vmatpush2.bf16.msra.mxu0 0
  %2251 = vmatprep.subr.bf16.mxu0 0
  %2252 = vmatpush2.bf16.msra.mxu0 0
  %2253 = vmatprep.subr.bf16.mxu0 0
  %2254 = vmatpush2.bf16.msra.mxu0 0
  %2255 = vmatprep.mubr.bf16.mxu0 0
  %2256 = vmatmul.mubr.bf16.gmra.mxu0 %v2221
  %v2257 = vpop.f32.mrf.mxu0
  %v2258 = vadd.f32 0.0, %v2257
  %v2259 = vpop.f32.mrf.mxu0
  %v2260 = vpop.f32.mrf.mxu0
  %v2261 = vpop.f32.mrf.mxu0
  %2262 = vdwg.mxu0
  %v2263 = vadd.f32 %v2215, %v2258
  %v2264 = vxor.u32 %v2263, 2147483648
  %v2265 = vmul.f32 %v2264, 1.442695
  %v2266 = vpow.pop %v2265
  %v2267 = vadd.f32 %v2266, 1.0
  %v2268 = vrcp.pop %v2267
  %v2269 = vmul.f32 1.0, %v2268
  %v2270 = vadd.f32 %v2258, %v1968
  %2272 = vrot.lane.b32.xlu0 %v2270, 64
  %v2273 = vpop.permute.xlu0 %2272
  %v2275 = vmul.f32 %v2269, %v2273
  %2277 = vrot.lane.b32.xlu0 %v2275, 64
  %v2278 = vpop.permute.xlu0 %2277
  %v2280 = vadd.f32 %v2215, %v2278
  %v2281 = vtanh.pop %v2280
  %v2282 = vsub.f32 1.0, %v2269
  %2284 = vrot.lane.b32.xlu0 %v2281, 96
  %v2285 = vpop.permute.xlu0 %2284
  %v2287 = vmul.f32 %v2282, %v2285
  %v2288 = vmul.f32 %v2269, %v2214
  %v2289 = vadd.f32 %v2287, %v2288
  %v2290 = vld [vmem:[#allocation2 + $0x30] sm:$0xff]
  %v2291 = vpack.c.bf16 %v2289, %v2289
  %2293 = vrot.lane.b32.xlu0 %v2291, 96
  %v2294 = vpop.permute.xlu0 %2293
  %v2296 = vsel %vm322, %v2294, 0
  %2298 = vmatprep.subr.bf16.mxu0 0
  %2299 = vmatpush1.bf16.msra.mxu0 0
  %2300 = vmatprep.subr.bf16.mxu0 0
  %2301 = vmatpush1.bf16.msra.mxu0 0
  %2302 = vmatprep.subr.bf16.mxu0 0
  %2303 = vmatpush1.bf16.msra.mxu0 0
  %2304 = vmatprep.subr.bf16.mxu0 0
  %2305 = vmatpush1.bf16.msra.mxu0 0
  %2306 = vmatprep.subr.bf16.mxu0 0
  %2307 = vmatpush1.bf16.msra.mxu0 0
  %2308 = vmatprep.subr.bf16.mxu0 0
  %2309 = vmatpush1.bf16.msra.mxu0 0
  %2310 = vmatprep.subr.bf16.mxu0 0
  %2311 = vmatpush1.bf16.msra.mxu0 %v1914
  %2312 = vmatprep.subr.bf16.mxu0 0
  %2313 = vmatpush1.bf16.msra.mxu0 %v1913
  %2314 = vmatprep.subr.bf16.mxu0 0
  %2315 = vmatpush2.bf16.msra.mxu0 0
  %2316 = vmatprep.subr.bf16.mxu0 0
  %2317 = vmatpush2.bf16.msra.mxu0 0
  %2318 = vmatprep.subr.bf16.mxu0 0
  %2319 = vmatpush2.bf16.msra.mxu0 0
  %2320 = vmatprep.subr.bf16.mxu0 0
  %2321 = vmatpush2.bf16.msra.mxu0 0
  %2322 = vmatprep.subr.bf16.mxu0 0
  %2323 = vmatpush2.bf16.msra.mxu0 0
  %2324 = vmatprep.subr.bf16.mxu0 0
  %2325 = vmatpush2.bf16.msra.mxu0 0
  %2326 = vmatprep.subr.bf16.mxu0 0
  %2327 = vmatpush2.bf16.msra.mxu0 0
  %2328 = vmatprep.subr.bf16.mxu0 0
  %2329 = vmatpush2.bf16.msra.mxu0 0
  %2330 = vmatprep.mubr.bf16.mxu0 0
  %2331 = vmatmul.mubr.bf16.gmra.mxu0 %v2296
  %v2332 = vpop.f32.mrf.mxu0
  %v2333 = vadd.f32 0.0, %v2332
  %v2334 = vpop.f32.mrf.mxu0
  %v2335 = vpop.f32.mrf.mxu0
  %v2336 = vpop.f32.mrf.mxu0
  %2337 = vdwg.mxu0
  %v2338 = vadd.f32 %v2290, %v2333
  %v2339 = vxor.u32 %v2338, 2147483648
  %v2340 = vmul.f32 %v2339, 1.442695
  %v2341 = vpow.pop %v2340
  %v2342 = vadd.f32 %v2341, 1.0
  %v2343 = vrcp.pop %v2342
  %v2344 = vmul.f32 1.0, %v2343
  %v2345 = vadd.f32 %v2333, %v1968
  %2347 = vrot.lane.b32.xlu0 %v2345, 64
  %v2348 = vpop.permute.xlu0 %2347
  %v2350 = vmul.f32 %v2344, %v2348
  %2352 = vrot.lane.b32.xlu0 %v2350, 64
  %v2353 = vpop.permute.xlu0 %2352
  %v2355 = vadd.f32 %v2290, %v2353
  %v2356 = vtanh.pop %v2355
  %v2357 = vsub.f32 1.0, %v2344
  %2359 = vrot.lane.b32.xlu0 %v2356, 96
  %v2360 = vpop.permute.xlu0 %2359
  %v2362 = vmul.f32 %v2357, %v2360
  %v2363 = vmul.f32 %v2344, %v2289
  %v2364 = vadd.f32 %v2362, %v2363
  %v2365 = vld [vmem:[#allocation2 + $0x38] sm:$0xff]
  %v2366 = vpack.c.bf16 %v2364, %v2364
  %2368 = vrot.lane.b32.xlu0 %v2366, 96
  %v2369 = vpop.permute.xlu0 %2368
  %v2371 = vsel %vm322, %v2369, 0
  %2373 = vmatprep.subr.bf16.mxu0 0
  %2374 = vmatpush1.bf16.msra.mxu0 0
  %2375 = vmatprep.subr.bf16.mxu0 0
  %2376 = vmatpush1.bf16.msra.mxu0 0
  %2377 = vmatprep.subr.bf16.mxu0 0
  %2378 = vmatpush1.bf16.msra.mxu0 0
  %2379 = vmatprep.subr.bf16.mxu0 0
  %2380 = vmatpush1.bf16.msra.mxu0 0
  %2381 = vmatprep.subr.bf16.mxu0 0
  %2382 = vmatpush1.bf16.msra.mxu0 0
  %2383 = vmatprep.subr.bf16.mxu0 0
  %2384 = vmatpush1.bf16.msra.mxu0 0
  %2385 = vmatprep.subr.bf16.mxu0 0
  %2386 = vmatpush1.bf16.msra.mxu0 %v1914
  %2387 = vmatprep.subr.bf16.mxu0 0
  %2388 = vmatpush1.bf16.msra.mxu0 %v1913
  %2389 = vmatprep.subr.bf16.mxu0 0
  %2390 = vmatpush2.bf16.msra.mxu0 0
  %2391 = vmatprep.subr.bf16.mxu0 0
  %2392 = vmatpush2.bf16.msra.mxu0 0
  %2393 = vmatprep.subr.bf16.mxu0 0
  %2394 = vmatpush2.bf16.msra.mxu0 0
  %2395 = vmatprep.subr.bf16.mxu0 0
  %2396 = vmatpush2.bf16.msra.mxu0 0
  %2397 = vmatprep.subr.bf16.mxu0 0
  %2398 = vmatpush2.bf16.msra.mxu0 0
  %2399 = vmatprep.subr.bf16.mxu0 0
  %2400 = vmatpush2.bf16.msra.mxu0 0
  %2401 = vmatprep.subr.bf16.mxu0 0
  %2402 = vmatpush2.bf16.msra.mxu0 0
  %2403 = vmatprep.subr.bf16.mxu0 0
  %2404 = vmatpush2.bf16.msra.mxu0 0
  %2405 = vmatprep.mubr.bf16.mxu0 0
  %2406 = vmatmul.mubr.bf16.gmra.mxu0 %v2371
  %v2407 = vpop.f32.mrf.mxu0
  %v2408 = vadd.f32 0.0, %v2407
  %v2409 = vpop.f32.mrf.mxu0
  %v2410 = vpop.f32.mrf.mxu0
  %v2411 = vpop.f32.mrf.mxu0
  %2412 = vdwg.mxu0
  %v2413 = vadd.f32 %v2365, %v2408
  %v2414 = vxor.u32 %v2413, 2147483648
  %v2415 = vmul.f32 %v2414, 1.442695
  %v2416 = vpow.pop %v2415
  %v2417 = vadd.f32 %v2416, 1.0
  %v2418 = vrcp.pop %v2417
  %v2419 = vmul.f32 1.0, %v2418
  %v2420 = vadd.f32 %v2408, %v1968
  %2422 = vrot.lane.b32.xlu0 %v2420, 64
  %v2423 = vpop.permute.xlu0 %2422
  %v2425 = vmul.f32 %v2419, %v2423
  %2427 = vrot.lane.b32.xlu0 %v2425, 64
  %v2428 = vpop.permute.xlu0 %2427
  %v2430 = vadd.f32 %v2365, %v2428
  %v2431 = vtanh.pop %v2430
  %v2432 = vsub.f32 1.0, %v2419
  %2434 = vrot.lane.b32.xlu0 %v2431, 96
  %v2435 = vpop.permute.xlu0 %2434
  %v2437 = vmul.f32 %v2432, %v2435
  %v2438 = vmul.f32 %v2419, %v2364
  %v2439 = vadd.f32 %v2437, %v2438
  %v2440 = vmax.f32 %v2439, 0.0
  %v2441 = vpack.c.bf16 %v2440, %v2440
  %v2442 = vmax.f32 %v1868, 0.0
  %v2443 = vpack.c.bf16 %v2442, %v2442
  %v2444 = vld [vmem:[%s16] sm:$0xf]
  %v2445 = vld [vmem:[%s16 + $0x4] sm:$0xf]
  %v2446 = vld [vmem:[%s16 + $0x8] sm:$0xf]
  %v2447 = vld [vmem:[%s16 + $0xc] sm:$0xf]
  %v2448 = vld [vmem:[%s16 + $0x10] sm:$0xf]
  %v2449 = vld [vmem:[%s16 + $0x14] sm:$0xf]
  %v2450 = vld [vmem:[%s16 + $0x18] sm:$0xf]
  %v2451 = vld [vmem:[%s16 + $0x1c] sm:$0xf]
  %2453 = vrot.lane.b32.xlu0 %v2441, 96
  %v2454 = vpop.permute.xlu0 %2453
  %v2459 = vunpack.c.l.b16 %v2444
  %v2460 = vunpack.c.l.b16 %v2445
  %v2461 = vunpack.c.l.b16 %v2446
  %v2462 = vunpack.c.l.b16 %v2447
  %v2463 = vpack.c.b16 %v2460, %v2459
  %v2464 = vpack.c.b16 %v2462, %v2461
  %v2468 = vsel %vm322, %v2454, 0
  %2470 = vmatprep.subr.bf16.mxu0 0
  %2471 = vmatpush1.bf16.msra.mxu0 0
  %2472 = vmatprep.subr.bf16.mxu0 0
  %2473 = vmatpush1.bf16.msra.mxu0 0
  %2474 = vmatprep.subr.bf16.mxu0 0
  %2475 = vmatpush1.bf16.msra.mxu0 0
  %2476 = vmatprep.subr.bf16.mxu0 0
  %2477 = vmatpush1.bf16.msra.mxu0 0
  %2478 = vmatprep.subr.bf16.mxu0 0
  %2479 = vmatpush1.bf16.msra.mxu0 0
  %2480 = vmatprep.subr.bf16.mxu0 0
  %2481 = vmatpush1.bf16.msra.mxu0 0
  %2482 = vmatprep.subr.bf16.mxu0 0
  %2483 = vmatpush1.bf16.msra.mxu0 %v2464
  %2484 = vmatprep.subr.bf16.mxu0 0
  %2485 = vmatpush1.bf16.msra.mxu0 %v2463
  %2486 = vmatprep.subr.bf16.mxu0 0
  %2487 = vmatpush2.bf16.msra.mxu0 0
  %2488 = vmatprep.subr.bf16.mxu0 0
  %2489 = vmatpush2.bf16.msra.mxu0 0
  %2490 = vmatprep.subr.bf16.mxu0 0
  %2491 = vmatpush2.bf16.msra.mxu0 0
  %2492 = vmatprep.subr.bf16.mxu0 0
  %2493 = vmatpush2.bf16.msra.mxu0 0
  %2494 = vmatprep.subr.bf16.mxu0 0
  %2495 = vmatpush2.bf16.msra.mxu0 0
  %2496 = vmatprep.subr.bf16.mxu0 0
  %2497 = vmatpush2.bf16.msra.mxu0 0
  %2498 = vmatprep.subr.bf16.mxu0 0
  %2499 = vmatpush2.bf16.msra.mxu0 0
  %2500 = vmatprep.subr.bf16.mxu0 0
  %2501 = vmatpush2.bf16.msra.mxu0 0
  %2502 = vmatprep.mubr.bf16.mxu0 0
  %2503 = vmatmul.mubr.bf16.gmra.mxu0 %v2468
  %v2504 = vpop.f32.mrf.mxu0
  %v2505 = vadd.f32 0.0, %v2504
  %v2506 = vpop.f32.mrf.mxu0
  %v2507 = vpop.f32.mrf.mxu0
  %v2508 = vpop.f32.mrf.mxu0
  %2509 = vdwg.mxu0
  %v2510 = vadd.f32 %v60, %v2505
  %2512 = vrot.lane.b32.xlu0 %v2443, 96
  %v2513 = vpop.permute.xlu0 %2512
  %v2518 = vunpack.c.l.b16 %v2448
  %v2519 = vunpack.c.l.b16 %v2449
  %v2520 = vunpack.c.l.b16 %v2450
  %v2521 = vunpack.c.l.b16 %v2451
  %v2522 = vpack.c.b16 %v2519, %v2518
  %v2523 = vpack.c.b16 %v2521, %v2520
  %v2527 = vsel %vm322, %v2513, 0
  %2529 = vmatprep.subr.bf16.mxu0 0
  %2530 = vmatpush1.bf16.msra.mxu0 0
  %2531 = vmatprep.subr.bf16.mxu0 0
  %2532 = vmatpush1.bf16.msra.mxu0 0
  %2533 = vmatprep.subr.bf16.mxu0 0
  %2534 = vmatpush1.bf16.msra.mxu0 0
  %2535 = vmatprep.subr.bf16.mxu0 0
  %2536 = vmatpush1.bf16.msra.mxu0 0
  %2537 = vmatprep.subr.bf16.mxu0 0
  %2538 = vmatpush1.bf16.msra.mxu0 0
  %2539 = vmatprep.subr.bf16.mxu0 0
  %2540 = vmatpush1.bf16.msra.mxu0 0
  %2541 = vmatprep.subr.bf16.mxu0 0
  %2542 = vmatpush1.bf16.msra.mxu0 %v2523
  %2543 = vmatprep.subr.bf16.mxu0 0
  %2544 = vmatpush1.bf16.msra.mxu0 %v2522
  %2545 = vmatprep.subr.bf16.mxu0 0
  %2546 = vmatpush2.bf16.msra.mxu0 0
  %2547 = vmatprep.subr.bf16.mxu0 0
  %2548 = vmatpush2.bf16.msra.mxu0 0
  %2549 = vmatprep.subr.bf16.mxu0 0
  %2550 = vmatpush2.bf16.msra.mxu0 0
  %2551 = vmatprep.subr.bf16.mxu0 0
  %2552 = vmatpush2.bf16.msra.mxu0 0
  %2553 = vmatprep.subr.bf16.mxu0 0
  %2554 = vmatpush2.bf16.msra.mxu0 0
  %2555 = vmatprep.subr.bf16.mxu0 0
  %2556 = vmatpush2.bf16.msra.mxu0 0
  %2557 = vmatprep.subr.bf16.mxu0 0
  %2558 = vmatpush2.bf16.msra.mxu0 0
  %2559 = vmatprep.subr.bf16.mxu0 0
  %2560 = vmatpush2.bf16.msra.mxu0 0
  %2561 = vmatprep.mubr.bf16.mxu0 0
  %2562 = vmatmul.mubr.bf16.gmra.mxu0 %v2527
  %v2563 = vpop.f32.mrf.mxu0
  %v2564 = vadd.f32 0.0, %v2563
  %v2565 = vpop.f32.mrf.mxu0
  %v2566 = vpop.f32.mrf.mxu0
  %v2567 = vpop.f32.mrf.mxu0
  %2568 = vdwg.mxu0
  %v2569 = vadd.f32 %v2510, %v2564
  %v2570 = vld [vmem:[%s17] sm:$0x1]
  %v2572 = vlaneseq
  %v2573 = vshrl.u32 %v2572, 7
  %v2574 = vsub.s32 0, %v2573
  %v2575 = vrot.slane %v2570, %v2574
  %v2577 = vadd.f32 %v2569, %v2575
  %2578 = vst.msk [vmem:[%s18] sm:$0xff] %vm80, %v2577
  // Predicated region
  $region74: #{stacked_gru_forward.1} parent=0 // pred_check
    _
  $region75: #{stacked_gru_forward.1} parent=0 // pred_check_branch
    %2580 = sbr.rel (0) target = $region77
  $region76: #{stacked_gru_forward.1} parent=0 // pred_region
    _
  $region77: #{stacked_gru_forward.1} parent=0 // pred_fallthru
    _
  // Predicated region
  $region78: #{stacked_gru_forward.1} parent=0 // pred_check
    _
  $region79: #{stacked_gru_forward.1} parent=0 // pred_check_branch
    %2582 = sbr.rel (0) target = $region81
  $region80: #{stacked_gru_forward.1} parent=0 // pred_region
    _
  $region81: #{stacked_gru_forward.1} parent=0 // pred_fallthru
    _

</llo_original>
